<compile_context>
chip_gen: v7x
topology: tpu7x:2x2x1
jax: 0.10.0
libtpu: 0.0.40
codegen_flags: <defaults>
</compile_context>

<pallas_src>
import math

import numpy as np
import jax
import jax.numpy as jnp
from jax.experimental import pallas as pl
from jax.experimental.pallas import tpu as pltpu

_PAD_OFF = 8  # sublane-aligned row offset at which activations are written into the pad buffer


# -----------------------------------------------------------------------------
# Fused whole-network Pallas kernel (one grid step == one batch element)
# -----------------------------------------------------------------------------
def _net_paper_kernel(
    x_ref,
    w0_ref, t0_ref,
    w1_ref, b1_ref, t1_ref, p0_ref,
    w2_ref, t2_ref,
    w3_ref, b3_ref, t3_ref, p1_ref,
    w4_ref, t4_ref,
    w5_ref, b5_ref, t5_ref, p2_ref,
    wf0_ref, bf0_ref, wf1_ref, bf1_ref, wf2_ref, bf2_ref,
    o_ref,
    pbuf,
):
    f32 = jnp.float32

    def conv_block(act, w_ref, dilation, bias_ref=None, shift_ref=None, pool_ref=None):
        """Dilated Conv1d(k=3) [+ bias + AvgPool(3,2,1)] + folded-BN shift + ReLU."""
        L, cin = act.shape
        d = dilation
        # In-VMEM zero padding of the time axis (aligned store; shifted tap reads).
        pbuf[...] = jnp.zeros(pbuf.shape, f32)
        pbuf[_PAD_OFF:_PAD_OFF + L, 0:cin] = act
        # Conv == 3 shifted matmuls; accumulator starts from tap 0 (no zeros+add).
        acc = jnp.dot(pbuf[_PAD_OFF - d:_PAD_OFF - d + L, 0:cin], w_ref[0],
                      preferred_element_type=f32)
        acc = acc + jnp.dot(act, w_ref[1], preferred_element_type=f32)
        acc = acc + jnp.dot(pbuf[_PAD_OFF + d:_PAD_OFF + d + L, 0:cin], w_ref[2],
                            preferred_element_type=f32)
        if pool_ref is not None:
            # Bias must be applied before count_include_pad average pooling.
            acc = acc + bias_ref[...]
            acc = jnp.dot(pool_ref[...], acc, preferred_element_type=f32)
        # BN scale already folded into the weights; add shift (incl. folded bias), ReLU.
        return jnp.maximum(acc + shift_ref[...], 0.0)

    a = x_ref[0]                                                    # (L, Cin) channels-last
    a = conv_block(a, w0_ref, 2, shift_ref=t0_ref)
    a = conv_block(a, w1_ref, 2, bias_ref=b1_ref, shift_ref=t1_ref, pool_ref=p0_ref)
    a = conv_block(a, w2_ref, 2, shift_ref=t2_ref)
    a = conv_block(a, w3_ref, 2, bias_ref=b3_ref, shift_ref=t3_ref, pool_ref=p1_ref)
    a = conv_block(a, w4_ref, 4, shift_ref=t4_ref)
    a = conv_block(a, w5_ref, 4, bias_ref=b5_ref, shift_ref=t5_ref, pool_ref=p2_ref)

    # FC stage.  wf0 is (L3, C, 256) with rows pre-permuted so the channels-last
    # (L3, C) activation is consumed directly (torch flatten(1) order handled at
    # parameter-fold time -> no transpose/reshape here).
    L3 = a.shape[0]
    h = jnp.dot(a[0:1, :], wf0_ref[0], preferred_element_type=f32)
    for l in range(1, L3):
        h = h + jnp.dot(a[l:l + 1, :], wf0_ref[l], preferred_element_type=f32)
    h = jnp.maximum(h + bf0_ref[...], 0.0)
    # TODO(synk): Dropout(0.5) layers are identity at inference time (no RNG applied).
    h = jnp.maximum(jnp.dot(h, wf1_ref[...], preferred_element_type=f32) + bf1_ref[...], 0.0)
    out = jnp.dot(h, wf2_ref[...], preferred_element_type=f32) + bf2_ref[...]
    o_ref[0] = out


# -----------------------------------------------------------------------------
# Host-side parameter folding / pool matrices
# -----------------------------------------------------------------------------
def make_pool_matrix(L):
    """AvgPool1d(kernel=3, stride=2, padding=1, count_include_pad=True) as (Lo, L)."""
    Lo = (L - 1) // 2 + 1
    P = np.zeros((Lo, L), dtype=np.float32)
    for i in range(Lo):
        for j in (2 * i - 1, 2 * i, 2 * i + 1):
            if 0 <= j < L:
                P[i, j] = 1.0 / 3.0
    return jnp.asarray(P)


def fold_params(params, history_signal):
    """Fold BN affine + conv biases into weights/shifts, permute FC0 rows to the
    channels-last flatten order, and build the avg-pool matrices. Run once."""
    L0 = history_signal
    L1 = (L0 - 1) // 2 + 1
    L2 = (L1 - 1) // 2 + 1
    L3 = (L2 - 1) // 2 + 1

    def conv_nopool(wk, bnk):
        w, b = params[wk]
        s, t = params[bnk]
        return w * s[None, None, :], (b * s + t).reshape(1, -1)

    def conv_pool(wk, bnk):
        w, b = params[wk]
        s, t = params[bnk]
        return w * s[None, None, :], (b * s).reshape(1, -1), t.reshape(1, -1)

    w0, t0 = conv_nopool('b0_tcn0', 'b0_bn0')
    w1, b1, t1 = conv_pool('b0_tcn1', 'b0_bn1')
    w2, t2 = conv_nopool('b1_tcn0', 'b1_bn0')
    w3, b3, t3 = conv_pool('b1_tcn1', 'b1_bn1')
    w4, t4 = conv_nopool('b2_tcn0', 'b2_bn0')
    w5, b5, t5 = conv_pool('b2_tcn1', 'b2_bn1')

    # FC0: fold BN scale into the columns, permute rows so that row (l, c)
    # matches torch's flatten index c*L3 + l (channel-major flatten of (C, L3)).
    wf, bf = params['FC0']
    s0, t0f = params['FC0_bn']
    C = wf.shape[0] // L3
    dout = wf.shape[1]
    wf0 = (wf * s0[None, :]).reshape(C, L3, dout).transpose(1, 0, 2)     # (L3, C, 256)
    bf0 = (bf * s0 + t0f).reshape(1, -1)

    wf1_raw, bf1_raw = params['FC1']
    s1, t1f = params['FC1_bn']
    wf1 = wf1_raw * s1[None, :]
    bf1 = (bf1_raw * s1 + t1f).reshape(1, -1)

    wf2, bf2_raw = params['GwayFC']
    bf2 = bf2_raw.reshape(1, -1)

    P0, P1, P2 = make_pool_matrix(L0), make_pool_matrix(L1), make_pool_matrix(L2)

    args = (w0, t0, w1, b1, t1, P0,
            w2, t2, w3, b3, t3, P1,
            w4, t4, w5, b5, t5, P2,
            wf0, bf0, wf1, bf1, wf2, bf2)
    return tuple(jnp.asarray(a, jnp.float32) for a in args)


def _const_spec(arr):
    nd = arr.ndim
    return pl.BlockSpec(arr.shape, lambda b, _nd=nd: (0,) * _nd)


@jax.jit
def net_paper_forward(folded, x_ncl):
    """folded = fold_params(...); x_ncl: (B, C, L) torch Conv1d layout -> (B, 2) logits."""
    # Single tiny layout op: present channels-last activations to the kernel.
    x = jnp.transpose(x_ncl, (0, 2, 1)).astype(jnp.float32)              # (B, L, Cin)
    B, L0, Cin = x.shape

    # Padding-scratch rows: activation stored at row _PAD_OFF, taps read +-dilation
    # (max dilation 4); round up to a sublane multiple.
    pad_rows = ((_PAD_OFF + L0 + 4 + 7) // 8) * 8

    in_specs = [pl.BlockSpec((1, L0, Cin), lambda b: (b, 0, 0))]
    in_specs += [_const_spec(a) for a in folded]

    out = pl.pallas_call(
        _net_paper_kernel,
        grid=(B,),
        in_specs=in_specs,
        out_specs=pl.BlockSpec((1, 1, 2), lambda b: (b, 0, 0)),
        out_shape=jax.ShapeDtypeStruct((B, 1, 2), jnp.float32),
        scratch_shapes=[pltpu.VMEM((pad_rows, 128), jnp.float32)],
        compiler_params=pltpu.CompilerParams(dimension_semantics=("parallel",)),
    )(x, *folded)
    return out.reshape(B, 2)


# -----------------------------------------------------------------------------
# Parameter init (matches the PyTorch module's structure; BN in inference form)
# -----------------------------------------------------------------------------
def init_params(key, history_signal, num_inputs):
    keys = iter(jax.random.split(key, 64))

    def conv_p(cin, cout):
        w = jax.random.normal(next(keys), (3, cin, cout), jnp.float32) / np.sqrt(3.0 * cin)
        b = 0.01 * jax.random.normal(next(keys), (cout,), jnp.float32)
        return w, b

    def bn_p(c):
        gamma = 1.0 + 0.1 * jax.random.normal(next(keys), (c,), jnp.float32)
        beta = 0.1 * jax.random.normal(next(keys), (c,), jnp.float32)
        mean = 0.1 * jax.random.normal(next(keys), (c,), jnp.float32)
        var = jax.random.uniform(next(keys), (c,), jnp.float32, minval=0.5, maxval=1.5)
        scale = gamma / jnp.sqrt(var + 1e-5)          # PyTorch BN eps = 1e-5
        shift = beta - mean * scale
        return scale, shift

    def fc_p(din, dout):
        w = jax.random.normal(next(keys), (din, dout), jnp.float32) / np.sqrt(float(din))
        b = 0.01 * jax.random.normal(next(keys), (dout,), jnp.float32)
        return w, b

    dim_fc = int(math.ceil(math.ceil(math.ceil(history_signal / 2) / 2) / 2) * 128)
    return {
        'b0_tcn0': conv_p(num_inputs, 32), 'b0_bn0': bn_p(32),
        'b0_tcn1': conv_p(32, 64),         'b0_bn1': bn_p(64),
        'b1_tcn0': conv_p(64, 64),         'b1_bn0': bn_p(64),
        'b1_tcn1': conv_p(64, 128),        'b1_bn1': bn_p(128),
        'b2_tcn0': conv_p(128, 128),       'b2_bn0': bn_p(128),
        'b2_tcn1': conv_p(128, 128),       'b2_bn1': bn_p(128),
        'FC0': fc_p(dim_fc, 256),          'FC0_bn': bn_p(256),
        'FC1': fc_p(256, 64),              'FC1_bn': bn_p(64),
        'GwayFC': fc_p(64, 2),
    }


# -----------------------------------------------------------------------------
# Pure numpy reference of the PyTorch forward (NCL layout, inference mode)
# -----------------------------------------------------------------------------
def ref_forward(p, x_ncl):
    def conv1d(x, w, b, dil):                  # x: (B,C,L), w: (3,Cin,Cout)
        B, Cin, L = x.shape
        xp = np.pad(x, ((0, 0), (0, 0), (dil, dil)))
        out = np.zeros((B, w.shape[2], L), np.float64)
        for k in range(3):
            seg = xp[:, :, k * dil:k * dil + L]
            out += np.einsum('bcl,co->bol', seg, w[k])
        return out + b[None, :, None]

    def avgpool(x):                            # k=3, s=2, p=1, count_include_pad
        B, C, L = x.shape
        xp = np.pad(x, ((0, 0), (0, 0), (1, 1)))
        Lo = (L - 1) // 2 + 1
        out = np.zeros((B, C, Lo), np.float64)
        for i in range(Lo):
            out[:, :, i] = xp[:, :, 2 * i:2 * i + 3].sum(-1) / 3.0
        return out

    def bn_c(x, s, t):
        return x * s[None, :, None] + t[None, :, None]

    relu = lambda v: np.maximum(v, 0.0)
    x = x_ncl.astype(np.float64)
    x = relu(bn_c(conv1d(x, *p['b0_tcn0'], 2), *p['b0_bn0']))
    x = relu(bn_c(avgpool(conv1d(x, *p['b0_tcn1'], 2)), *p['b0_bn1']))
    x = relu(bn_c(conv1d(x, *p['b1_tcn0'], 2), *p['b1_bn0']))
    x = relu(bn_c(avgpool(conv1d(x, *p['b1_tcn1'], 2)), *p['b1_bn1']))
    x = relu(bn_c(conv1d(x, *p['b2_tcn0'], 4), *p['b2_bn0']))
    x = relu(bn_c(avgpool(conv1d(x, *p['b2_tcn1'], 4)), *p['b2_bn1']))
    f = x.reshape(x.shape[0], -1)
    h = f @ p['FC0'][0] + p['FC0'][1]
    h = relu(h * p['FC0_bn'][0][None, :] + p['FC0_bn'][1][None, :])
    h = h @ p['FC1'][0] + p['FC1'][1]
    h = relu(h * p['FC1_bn'][0][None, :] + p['FC1_bn'][1][None, :])
    out = h @ p['GwayFC'][0] + p['GwayFC'][1]
    return out.astype(np.float32)


if __name__ == "__main__":
    history_signal = 32
    num_inputs = 4
    batch = 2

    key = jax.random.PRNGKey(0)
    kx, kp = jax.random.split(key)
    x = jax.random.normal(kx, (batch, num_inputs, history_signal), jnp.float32)
    params = init_params(kp, history_signal, num_inputs)
    folded = fold_params(params, history_signal)

    out = net_paper_forward(folded, x)
    out = jax.block_until_ready(out)

    ref = ref_forward(jax.tree_util.tree_map(np.asarray, params), np.asarray(x))
    assert out.shape == (batch, 2)
    assert np.allclose(np.asarray(out), ref, rtol=5e-2, atol=5e-2), (np.asarray(out), ref)

    print("KERNEL_OK")
</pallas_src>

<mosaic_0001>
module attributes {stable_mosaic.version = 11 : i64} {
  func.func @_net_paper_kernel(%arg0: i32, %arg1: memref<1x32x4xf32, #tpu.memory_space<vmem>>, %arg2: memref<3x4x32xf32, #tpu.memory_space<vmem>>, %arg3: memref<1x32xf32, #tpu.memory_space<vmem>>, %arg4: memref<3x32x64xf32, #tpu.memory_space<vmem>>, %arg5: memref<1x64xf32, #tpu.memory_space<vmem>>, %arg6: memref<1x64xf32, #tpu.memory_space<vmem>>, %arg7: memref<16x32xf32, #tpu.memory_space<vmem>>, %arg8: memref<3x64x64xf32, #tpu.memory_space<vmem>>, %arg9: memref<1x64xf32, #tpu.memory_space<vmem>>, %arg10: memref<3x64x128xf32, #tpu.memory_space<vmem>>, %arg11: memref<1x128xf32, #tpu.memory_space<vmem>>, %arg12: memref<1x128xf32, #tpu.memory_space<vmem>>, %arg13: memref<8x16xf32, #tpu.memory_space<vmem>>, %arg14: memref<3x128x128xf32, #tpu.memory_space<vmem>>, %arg15: memref<1x128xf32, #tpu.memory_space<vmem>>, %arg16: memref<3x128x128xf32, #tpu.memory_space<vmem>>, %arg17: memref<1x128xf32, #tpu.memory_space<vmem>>, %arg18: memref<1x128xf32, #tpu.memory_space<vmem>>, %arg19: memref<4x8xf32, #tpu.memory_space<vmem>>, %arg20: memref<4x128x256xf32, #tpu.memory_space<vmem>>, %arg21: memref<1x256xf32, #tpu.memory_space<vmem>>, %arg22: memref<256x64xf32, #tpu.memory_space<vmem>>, %arg23: memref<1x64xf32, #tpu.memory_space<vmem>>, %arg24: memref<64x2xf32, #tpu.memory_space<vmem>>, %arg25: memref<1x2xf32, #tpu.memory_space<vmem>>, %arg26: memref<1x1x2xf32, #tpu.memory_space<vmem>>, %arg27: memref<48x128xf32, #tpu.memory_space<vmem>>) attributes {dimension_semantics = [#tpu.dimension_semantics<parallel>], iteration_bounds = array<i64: 2>, scalar_prefetch = 0 : i64, scratch_operands = 1 : i64, tpu.core_type = #tpu.core_type<tc>, window_params = [{transform_indices = @transform_0, window_bounds = array<i64: 1, 32, 4>}, {pipeline_mode = #tpu.pipeline_mode<synchronous>, transform_indices = @transform_1, window_bounds = array<i64: 3, 4, 32>}, {pipeline_mode = #tpu.pipeline_mode<synchronous>, transform_indices = @transform_2, window_bounds = array<i64: 1, 32>}, {pipeline_mode = #tpu.pipeline_mode<synchronous>, transform_indices = @transform_3, window_bounds = array<i64: 3, 32, 64>}, {pipeline_mode = #tpu.pipeline_mode<synchronous>, transform_indices = @transform_4, window_bounds = array<i64: 1, 64>}, {pipeline_mode = #tpu.pipeline_mode<synchronous>, transform_indices = @transform_5, window_bounds = array<i64: 1, 64>}, {pipeline_mode = #tpu.pipeline_mode<synchronous>, transform_indices = @transform_6, window_bounds = array<i64: 16, 32>}, {pipeline_mode = #tpu.pipeline_mode<synchronous>, transform_indices = @transform_7, window_bounds = array<i64: 3, 64, 64>}, {pipeline_mode = #tpu.pipeline_mode<synchronous>, transform_indices = @transform_8, window_bounds = array<i64: 1, 64>}, {pipeline_mode = #tpu.pipeline_mode<synchronous>, transform_indices = @transform_9, window_bounds = array<i64: 3, 64, 128>}, {pipeline_mode = #tpu.pipeline_mode<synchronous>, transform_indices = @transform_10, window_bounds = array<i64: 1, 128>}, {pipeline_mode = #tpu.pipeline_mode<synchronous>, transform_indices = @transform_11, window_bounds = array<i64: 1, 128>}, {pipeline_mode = #tpu.pipeline_mode<synchronous>, transform_indices = @transform_12, window_bounds = array<i64: 8, 16>}, {pipeline_mode = #tpu.pipeline_mode<synchronous>, transform_indices = @transform_13, window_bounds = array<i64: 3, 128, 128>}, {pipeline_mode = #tpu.pipeline_mode<synchronous>, transform_indices = @transform_14, window_bounds = array<i64: 1, 128>}, {pipeline_mode = #tpu.pipeline_mode<synchronous>, transform_indices = @transform_15, window_bounds = array<i64: 3, 128, 128>}, {pipeline_mode = #tpu.pipeline_mode<synchronous>, transform_indices = @transform_16, window_bounds = array<i64: 1, 128>}, {pipeline_mode = #tpu.pipeline_mode<synchronous>, transform_indices = @transform_17, window_bounds = array<i64: 1, 128>}, {pipeline_mode = #tpu.pipeline_mode<synchronous>, transform_indices = @transform_18, window_bounds = array<i64: 4, 8>}, {pipeline_mode = #tpu.pipeline_mode<synchronous>, transform_indices = @transform_19, window_bounds = array<i64: 4, 128, 256>}, {pipeline_mode = #tpu.pipeline_mode<synchronous>, transform_indices = @transform_20, window_bounds = array<i64: 1, 256>}, {pipeline_mode = #tpu.pipeline_mode<synchronous>, transform_indices = @transform_21, window_bounds = array<i64: 256, 64>}, {pipeline_mode = #tpu.pipeline_mode<synchronous>, transform_indices = @transform_22, window_bounds = array<i64: 1, 64>}, {pipeline_mode = #tpu.pipeline_mode<synchronous>, transform_indices = @transform_23, window_bounds = array<i64: 64, 2>}, {pipeline_mode = #tpu.pipeline_mode<synchronous>, transform_indices = @transform_24, window_bounds = array<i64: 1, 2>}, {transform_indices = @transform_25, window_bounds = array<i64: 1, 1, 2>}]} {
    %c0 = arith.constant 0 : index
    %c0_0 = arith.constant 0 : index
    %c0_1 = arith.constant 0 : index
    %0 = vector.load %arg1[%c0, %c0_0, %c0_1] : memref<1x32x4xf32, #tpu.memory_space<vmem>>, vector<1x32x4xf32>
    %1 = vector.shape_cast %0 : vector<1x32x4xf32> to vector<32x4xf32>
    %cst = arith.constant 0.000000e+00 : f32
    %2 = vector.broadcast %cst : f32 to vector<48x128xf32>
    %c0_2 = arith.constant 0 : index
    %c0_3 = arith.constant 0 : index
    %3 = vector.load %arg27[%c0_2, %c0_3] : memref<48x128xf32, #tpu.memory_space<vmem>>, vector<48x128xf32>
    tpu.vector_store %arg27[%c0_2, %c0_3], %2 {strides = array<i32>} : memref<48x128xf32, #tpu.memory_space<vmem>>, vector<48x128xf32>,
    %c8 = arith.constant 8 : index
    %c0_4 = arith.constant 0 : index
    %4 = vector.load %arg27[%c8, %c0_4] : memref<48x128xf32, #tpu.memory_space<vmem>>, vector<32x4xf32>
    tpu.vector_store %arg27[%c8, %c0_4], %1 {strides = array<i32>} : memref<48x128xf32, #tpu.memory_space<vmem>>, vector<32x4xf32>,
    %c6 = arith.constant 6 : index
    %c0_5 = arith.constant 0 : index
    %5 = vector.load %arg27[%c6, %c0_5] : memref<48x128xf32, #tpu.memory_space<vmem>>, vector<32x4xf32>
    %c0_6 = arith.constant 0 : index
    %c0_7 = arith.constant 0 : index
    %c0_8 = arith.constant 0 : index
    %6 = vector.load %arg2[%c0_6, %c0_7, %c0_8] : memref<3x4x32xf32, #tpu.memory_space<vmem>>, vector<1x4x32xf32>
    %7 = vector.shape_cast %6 : vector<1x4x32xf32> to vector<4x32xf32>
    %cst_9 = arith.constant dense<0.000000e+00> : vector<32x32xf32>
    %8 = tpu.matmul %5, %7, %cst_9 {dimension_numbers = #tpu.dot_dimension_numbers<[1], [0], [0], [1], [0, 0, 1, 1], [], []>} : vector<32x4xf32>, vector<4x32xf32>, vector<32x32xf32> -> vector<32x32xf32>
    %c1 = arith.constant 1 : index
    %c0_10 = arith.constant 0 : index
    %c0_11 = arith.constant 0 : index
    %9 = vector.load %arg2[%c1, %c0_10, %c0_11] : memref<3x4x32xf32, #tpu.memory_space<vmem>>, vector<1x4x32xf32>
    %10 = vector.shape_cast %9 : vector<1x4x32xf32> to vector<4x32xf32>
    %cst_12 = arith.constant dense<0.000000e+00> : vector<32x32xf32>
    %11 = tpu.matmul %1, %10, %cst_12 {dimension_numbers = #tpu.dot_dimension_numbers<[1], [0], [0], [1], [0, 0, 1, 1], [], []>} : vector<32x4xf32>, vector<4x32xf32>, vector<32x32xf32> -> vector<32x32xf32>
    %12 = arith.addf %8, %11 : vector<32x32xf32>
    %c10 = arith.constant 10 : index
    %c0_13 = arith.constant 0 : index
    %13 = vector.load %arg27[%c10, %c0_13] : memref<48x128xf32, #tpu.memory_space<vmem>>, vector<32x4xf32>
    %c2 = arith.constant 2 : index
    %c0_14 = arith.constant 0 : index
    %c0_15 = arith.constant 0 : index
    %14 = vector.load %arg2[%c2, %c0_14, %c0_15] : memref<3x4x32xf32, #tpu.memory_space<vmem>>, vector<1x4x32xf32>
    %15 = vector.shape_cast %14 : vector<1x4x32xf32> to vector<4x32xf32>
    %cst_16 = arith.constant dense<0.000000e+00> : vector<32x32xf32>
    %16 = tpu.matmul %13, %15, %cst_16 {dimension_numbers = #tpu.dot_dimension_numbers<[1], [0], [0], [1], [0, 0, 1, 1], [], []>} : vector<32x4xf32>, vector<4x32xf32>, vector<32x32xf32> -> vector<32x32xf32>
    %17 = arith.addf %12, %16 : vector<32x32xf32>
    %c0_17 = arith.constant 0 : index
    %c0_18 = arith.constant 0 : index
    %18 = vector.load %arg3[%c0_17, %c0_18] : memref<1x32xf32, #tpu.memory_space<vmem>>, vector<1x32xf32>
    %19 = vector.broadcast %18 : vector<1x32xf32> to vector<32x32xf32>
    %20 = arith.addf %17, %19 : vector<32x32xf32>
    %cst_19 = arith.constant 0.000000e+00 : f32
    %21 = vector.broadcast %cst_19 : f32 to vector<32x32xf32>
    %22 = arith.maximumf %20, %21 : vector<32x32xf32>
    %cst_20 = arith.constant 0.000000e+00 : f32
    %23 = vector.broadcast %cst_20 : f32 to vector<48x128xf32>
    %c0_21 = arith.constant 0 : index
    %c0_22 = arith.constant 0 : index
    %24 = vector.load %arg27[%c0_21, %c0_22] : memref<48x128xf32, #tpu.memory_space<vmem>>, vector<48x128xf32>
    tpu.vector_store %arg27[%c0_21, %c0_22], %23 {strides = array<i32>} : memref<48x128xf32, #tpu.memory_space<vmem>>, vector<48x128xf32>,
    %c8_23 = arith.constant 8 : index
    %c0_24 = arith.constant 0 : index
    %25 = vector.load %arg27[%c8_23, %c0_24] : memref<48x128xf32, #tpu.memory_space<vmem>>, vector<32x32xf32>
    tpu.vector_store %arg27[%c8_23, %c0_24], %22 {strides = array<i32>} : memref<48x128xf32, #tpu.memory_space<vmem>>, vector<32x32xf32>,
    %c6_25 = arith.constant 6 : index
    %c0_26 = arith.constant 0 : index
    %26 = vector.load %arg27[%c6_25, %c0_26] : memref<48x128xf32, #tpu.memory_space<vmem>>, vector<32x32xf32>
    %c0_27 = arith.constant 0 : index
    %c0_28 = arith.constant 0 : index
    %c0_29 = arith.constant 0 : index
    %27 = vector.load %arg4[%c0_27, %c0_28, %c0_29] : memref<3x32x64xf32, #tpu.memory_space<vmem>>, vector<1x32x64xf32>
    %28 = vector.shape_cast %27 : vector<1x32x64xf32> to vector<32x64xf32>
    %cst_30 = arith.constant dense<0.000000e+00> : vector<32x64xf32>
    %29 = tpu.matmul %26, %28, %cst_30 {dimension_numbers = #tpu.dot_dimension_numbers<[1], [0], [0], [1], [0, 0, 1, 1], [], []>} : vector<32x32xf32>, vector<32x64xf32>, vector<32x64xf32> -> vector<32x64xf32>
    %c1_31 = arith.constant 1 : index
    %c0_32 = arith.constant 0 : index
    %c0_33 = arith.constant 0 : index
    %30 = vector.load %arg4[%c1_31, %c0_32, %c0_33] : memref<3x32x64xf32, #tpu.memory_space<vmem>>, vector<1x32x64xf32>
    %31 = vector.shape_cast %30 : vector<1x32x64xf32> to vector<32x64xf32>
    %cst_34 = arith.constant dense<0.000000e+00> : vector<32x64xf32>
    %32 = tpu.matmul %22, %31, %cst_34 {dimension_numbers = #tpu.dot_dimension_numbers<[1], [0], [0], [1], [0, 0, 1, 1], [], []>} : vector<32x32xf32>, vector<32x64xf32>, vector<32x64xf32> -> vector<32x64xf32>
    %33 = arith.addf %29, %32 : vector<32x64xf32>
    %c10_35 = arith.constant 10 : index
    %c0_36 = arith.constant 0 : index
    %34 = vector.load %arg27[%c10_35, %c0_36] : memref<48x128xf32, #tpu.memory_space<vmem>>, vector<32x32xf32>
    %c2_37 = arith.constant 2 : index
    %c0_38 = arith.constant 0 : index
    %c0_39 = arith.constant 0 : index
    %35 = vector.load %arg4[%c2_37, %c0_38, %c0_39] : memref<3x32x64xf32, #tpu.memory_space<vmem>>, vector<1x32x64xf32>
    %36 = vector.shape_cast %35 : vector<1x32x64xf32> to vector<32x64xf32>
    %cst_40 = arith.constant dense<0.000000e+00> : vector<32x64xf32>
    %37 = tpu.matmul %34, %36, %cst_40 {dimension_numbers = #tpu.dot_dimension_numbers<[1], [0], [0], [1], [0, 0, 1, 1], [], []>} : vector<32x32xf32>, vector<32x64xf32>, vector<32x64xf32> -> vector<32x64xf32>
    %38 = arith.addf %33, %37 : vector<32x64xf32>
    %c0_41 = arith.constant 0 : index
    %c0_42 = arith.constant 0 : index
    %39 = vector.load %arg5[%c0_41, %c0_42] : memref<1x64xf32, #tpu.memory_space<vmem>>, vector<1x64xf32>
    %40 = vector.broadcast %39 : vector<1x64xf32> to vector<32x64xf32>
    %41 = arith.addf %38, %40 : vector<32x64xf32>
    %c0_43 = arith.constant 0 : index
    %c0_44 = arith.constant 0 : index
    %42 = vector.load %arg7[%c0_43, %c0_44] : memref<16x32xf32, #tpu.memory_space<vmem>>, vector<16x32xf32>
    %cst_45 = arith.constant dense<0.000000e+00> : vector<16x64xf32>
    %43 = tpu.matmul %42, %41, %cst_45 {dimension_numbers = #tpu.dot_dimension_numbers<[1], [0], [0], [1], [0, 0, 1, 1], [], []>} : vector<16x32xf32>, vector<32x64xf32>, vector<16x64xf32> -> vector<16x64xf32>
    %c0_46 = arith.constant 0 : index
    %c0_47 = arith.constant 0 : index
    %44 = vector.load %arg6[%c0_46, %c0_47] : memref<1x64xf32, #tpu.memory_space<vmem>>, vector<1x64xf32>
    %45 = vector.broadcast %44 : vector<1x64xf32> to vector<16x64xf32>
    %46 = arith.addf %43, %45 : vector<16x64xf32>
    %cst_48 = arith.constant 0.000000e+00 : f32
    %47 = vector.broadcast %cst_48 : f32 to vector<16x64xf32>
    %48 = arith.maximumf %46, %47 : vector<16x64xf32>
    %cst_49 = arith.constant 0.000000e+00 : f32
    %49 = vector.broadcast %cst_49 : f32 to vector<48x128xf32>
    %c0_50 = arith.constant 0 : index
    %c0_51 = arith.constant 0 : index
    %50 = vector.load %arg27[%c0_50, %c0_51] : memref<48x128xf32, #tpu.memory_space<vmem>>, vector<48x128xf32>
    tpu.vector_store %arg27[%c0_50, %c0_51], %49 {strides = array<i32>} : memref<48x128xf32, #tpu.memory_space<vmem>>, vector<48x128xf32>,
    %c8_52 = arith.constant 8 : index
    %c0_53 = arith.constant 0 : index
    %51 = vector.load %arg27[%c8_52, %c0_53] : memref<48x128xf32, #tpu.memory_space<vmem>>, vector<16x64xf32>
    tpu.vector_store %arg27[%c8_52, %c0_53], %48 {strides = array<i32>} : memref<48x128xf32, #tpu.memory_space<vmem>>, vector<16x64xf32>,
    %c6_54 = arith.constant 6 : index
    %c0_55 = arith.constant 0 : index
    %52 = vector.load %arg27[%c6_54, %c0_55] : memref<48x128xf32, #tpu.memory_space<vmem>>, vector<16x64xf32>
    %c0_56 = arith.constant 0 : index
    %c0_57 = arith.constant 0 : index
    %c0_58 = arith.constant 0 : index
    %53 = vector.load %arg8[%c0_56, %c0_57, %c0_58] : memref<3x64x64xf32, #tpu.memory_space<vmem>>, vector<1x64x64xf32>
    %54 = vector.shape_cast %53 : vector<1x64x64xf32> to vector<64x64xf32>
    %cst_59 = arith.constant dense<0.000000e+00> : vector<16x64xf32>
    %55 = tpu.matmul %52, %54, %cst_59 {dimension_numbers = #tpu.dot_dimension_numbers<[1], [0], [0], [1], [0, 0, 1, 1], [], []>} : vector<16x64xf32>, vector<64x64xf32>, vector<16x64xf32> -> vector<16x64xf32>
    %c1_60 = arith.constant 1 : index
    %c0_61 = arith.constant 0 : index
    %c0_62 = arith.constant 0 : index
    %56 = vector.load %arg8[%c1_60, %c0_61, %c0_62] : memref<3x64x64xf32, #tpu.memory_space<vmem>>, vector<1x64x64xf32>
    %57 = vector.shape_cast %56 : vector<1x64x64xf32> to vector<64x64xf32>
    %cst_63 = arith.constant dense<0.000000e+00> : vector<16x64xf32>
    %58 = tpu.matmul %48, %57, %cst_63 {dimension_numbers = #tpu.dot_dimension_numbers<[1], [0], [0], [1], [0, 0, 1, 1], [], []>} : vector<16x64xf32>, vector<64x64xf32>, vector<16x64xf32> -> vector<16x64xf32>
    %59 = arith.addf %55, %58 : vector<16x64xf32>
    %c10_64 = arith.constant 10 : index
    %c0_65 = arith.constant 0 : index
    %60 = vector.load %arg27[%c10_64, %c0_65] : memref<48x128xf32, #tpu.memory_space<vmem>>, vector<16x64xf32>
    %c2_66 = arith.constant 2 : index
    %c0_67 = arith.constant 0 : index
    %c0_68 = arith.constant 0 : index
    %61 = vector.load %arg8[%c2_66, %c0_67, %c0_68] : memref<3x64x64xf32, #tpu.memory_space<vmem>>, vector<1x64x64xf32>
    %62 = vector.shape_cast %61 : vector<1x64x64xf32> to vector<64x64xf32>
    %cst_69 = arith.constant dense<0.000000e+00> : vector<16x64xf32>
    %63 = tpu.matmul %60, %62, %cst_69 {dimension_numbers = #tpu.dot_dimension_numbers<[1], [0], [0], [1], [0, 0, 1, 1], [], []>} : vector<16x64xf32>, vector<64x64xf32>, vector<16x64xf32> -> vector<16x64xf32>
    %64 = arith.addf %59, %63 : vector<16x64xf32>
    %c0_70 = arith.constant 0 : index
    %c0_71 = arith.constant 0 : index
    %65 = vector.load %arg9[%c0_70, %c0_71] : memref<1x64xf32, #tpu.memory_space<vmem>>, vector<1x64xf32>
    %66 = vector.broadcast %65 : vector<1x64xf32> to vector<16x64xf32>
    %67 = arith.addf %64, %66 : vector<16x64xf32>
    %cst_72 = arith.constant 0.000000e+00 : f32
    %68 = vector.broadcast %cst_72 : f32 to vector<16x64xf32>
    %69 = arith.maximumf %67, %68 : vector<16x64xf32>
    %cst_73 = arith.constant 0.000000e+00 : f32
    %70 = vector.broadcast %cst_73 : f32 to vector<48x128xf32>
    %c0_74 = arith.constant 0 : index
    %c0_75 = arith.constant 0 : index
    %71 = vector.load %arg27[%c0_74, %c0_75] : memref<48x128xf32, #tpu.memory_space<vmem>>, vector<48x128xf32>
    tpu.vector_store %arg27[%c0_74, %c0_75], %70 {strides = array<i32>} : memref<48x128xf32, #tpu.memory_space<vmem>>, vector<48x128xf32>,
    %c8_76 = arith.constant 8 : index
    %c0_77 = arith.constant 0 : index
    %72 = vector.load %arg27[%c8_76, %c0_77] : memref<48x128xf32, #tpu.memory_space<vmem>>, vector<16x64xf32>
    tpu.vector_store %arg27[%c8_76, %c0_77], %69 {strides = array<i32>} : memref<48x128xf32, #tpu.memory_space<vmem>>, vector<16x64xf32>,
    %c6_78 = arith.constant 6 : index
    %c0_79 = arith.constant 0 : index
    %73 = vector.load %arg27[%c6_78, %c0_79] : memref<48x128xf32, #tpu.memory_space<vmem>>, vector<16x64xf32>
    %c0_80 = arith.constant 0 : index
    %c0_81 = arith.constant 0 : index
    %c0_82 = arith.constant 0 : index
    %74 = vector.load %arg10[%c0_80, %c0_81, %c0_82] : memref<3x64x128xf32, #tpu.memory_space<vmem>>, vector<1x64x128xf32>
    %75 = vector.shape_cast %74 : vector<1x64x128xf32> to vector<64x128xf32>
    %cst_83 = arith.constant dense<0.000000e+00> : vector<16x128xf32>
    %76 = tpu.matmul %73, %75, %cst_83 {dimension_numbers = #tpu.dot_dimension_numbers<[1], [0], [0], [1], [0, 0, 1, 1], [], []>} : vector<16x64xf32>, vector<64x128xf32>, vector<16x128xf32> -> vector<16x128xf32>
    %c1_84 = arith.constant 1 : index
    %c0_85 = arith.constant 0 : index
    %c0_86 = arith.constant 0 : index
    %77 = vector.load %arg10[%c1_84, %c0_85, %c0_86] : memref<3x64x128xf32, #tpu.memory_space<vmem>>, vector<1x64x128xf32>
    %78 = vector.shape_cast %77 : vector<1x64x128xf32> to vector<64x128xf32>
    %cst_87 = arith.constant dense<0.000000e+00> : vector<16x128xf32>
    %79 = tpu.matmul %69, %78, %cst_87 {dimension_numbers = #tpu.dot_dimension_numbers<[1], [0], [0], [1], [0, 0, 1, 1], [], []>} : vector<16x64xf32>, vector<64x128xf32>, vector<16x128xf32> -> vector<16x128xf32>
    %80 = arith.addf %76, %79 : vector<16x128xf32>
    %c10_88 = arith.constant 10 : index
    %c0_89 = arith.constant 0 : index
    %81 = vector.load %arg27[%c10_88, %c0_89] : memref<48x128xf32, #tpu.memory_space<vmem>>, vector<16x64xf32>
    %c2_90 = arith.constant 2 : index
    %c0_91 = arith.constant 0 : index
    %c0_92 = arith.constant 0 : index
    %82 = vector.load %arg10[%c2_90, %c0_91, %c0_92] : memref<3x64x128xf32, #tpu.memory_space<vmem>>, vector<1x64x128xf32>
    %83 = vector.shape_cast %82 : vector<1x64x128xf32> to vector<64x128xf32>
    %cst_93 = arith.constant dense<0.000000e+00> : vector<16x128xf32>
    %84 = tpu.matmul %81, %83, %cst_93 {dimension_numbers = #tpu.dot_dimension_numbers<[1], [0], [0], [1], [0, 0, 1, 1], [], []>} : vector<16x64xf32>, vector<64x128xf32>, vector<16x128xf32> -> vector<16x128xf32>
    %85 = arith.addf %80, %84 : vector<16x128xf32>
    %c0_94 = arith.constant 0 : index
    %c0_95 = arith.constant 0 : index
    %86 = vector.load %arg11[%c0_94, %c0_95] : memref<1x128xf32, #tpu.memory_space<vmem>>, vector<1x128xf32>
    %87 = vector.broadcast %86 : vector<1x128xf32> to vector<16x128xf32>
    %88 = arith.addf %85, %87 : vector<16x128xf32>
    %c0_96 = arith.constant 0 : index
    %c0_97 = arith.constant 0 : index
    %89 = vector.load %arg13[%c0_96, %c0_97] : memref<8x16xf32, #tpu.memory_space<vmem>>, vector<8x16xf32>
    %cst_98 = arith.constant dense<0.000000e+00> : vector<8x128xf32>
    %90 = tpu.matmul %89, %88, %cst_98 {dimension_numbers = #tpu.dot_dimension_numbers<[1], [0], [0], [1], [0, 0, 1, 1], [], []>} : vector<8x16xf32>, vector<16x128xf32>, vector<8x128xf32> -> vector<8x128xf32>
    %c0_99 = arith.constant 0 : index
    %c0_100 = arith.constant 0 : index
    %91 = vector.load %arg12[%c0_99, %c0_100] : memref<1x128xf32, #tpu.memory_space<vmem>>, vector<1x128xf32>
    %92 = vector.broadcast %91 : vector<1x128xf32> to vector<8x128xf32>
    %93 = arith.addf %90, %92 : vector<8x128xf32>
    %cst_101 = arith.constant 0.000000e+00 : f32
    %94 = vector.broadcast %cst_101 : f32 to vector<8x128xf32>
    %95 = arith.maximumf %93, %94 : vector<8x128xf32>
    %cst_102 = arith.constant 0.000000e+00 : f32
    %96 = vector.broadcast %cst_102 : f32 to vector<48x128xf32>
    %c0_103 = arith.constant 0 : index
    %c0_104 = arith.constant 0 : index
    %97 = vector.load %arg27[%c0_103, %c0_104] : memref<48x128xf32, #tpu.memory_space<vmem>>, vector<48x128xf32>
    tpu.vector_store %arg27[%c0_103, %c0_104], %96 {strides = array<i32>} : memref<48x128xf32, #tpu.memory_space<vmem>>, vector<48x128xf32>,
    %c8_105 = arith.constant 8 : index
    %c0_106 = arith.constant 0 : index
    %98 = vector.load %arg27[%c8_105, %c0_106] : memref<48x128xf32, #tpu.memory_space<vmem>>, vector<8x128xf32>
    tpu.vector_store %arg27[%c8_105, %c0_106], %95 {strides = array<i32>} : memref<48x128xf32, #tpu.memory_space<vmem>>, vector<8x128xf32>,
    %c4 = arith.constant 4 : index
    %c0_107 = arith.constant 0 : index
    %99 = vector.load %arg27[%c4, %c0_107] : memref<48x128xf32, #tpu.memory_space<vmem>>, vector<8x128xf32>
    %c0_108 = arith.constant 0 : index
    %c0_109 = arith.constant 0 : index
    %c0_110 = arith.constant 0 : index
    %100 = vector.load %arg14[%c0_108, %c0_109, %c0_110] : memref<3x128x128xf32, #tpu.memory_space<vmem>>, vector<1x128x128xf32>
    %101 = vector.shape_cast %100 : vector<1x128x128xf32> to vector<128x128xf32>
    %cst_111 = arith.constant dense<0.000000e+00> : vector<8x128xf32>
    %102 = tpu.matmul %99, %101, %cst_111 {dimension_numbers = #tpu.dot_dimension_numbers<[1], [0], [0], [1], [0, 0, 1, 1], [], []>} : vector<8x128xf32>, vector<128x128xf32>, vector<8x128xf32> -> vector<8x128xf32>
    %c1_112 = arith.constant 1 : index
    %c0_113 = arith.constant 0 : index
    %c0_114 = arith.constant 0 : index
    %103 = vector.load %arg14[%c1_112, %c0_113, %c0_114] : memref<3x128x128xf32, #tpu.memory_space<vmem>>, vector<1x128x128xf32>
    %104 = vector.shape_cast %103 : vector<1x128x128xf32> to vector<128x128xf32>
    %cst_115 = arith.constant dense<0.000000e+00> : vector<8x128xf32>
    %105 = tpu.matmul %95, %104, %cst_115 {dimension_numbers = #tpu.dot_dimension_numbers<[1], [0], [0], [1], [0, 0, 1, 1], [], []>} : vector<8x128xf32>, vector<128x128xf32>, vector<8x128xf32> -> vector<8x128xf32>
    %106 = arith.addf %102, %105 : vector<8x128xf32>
    %c12 = arith.constant 12 : index
    %c0_116 = arith.constant 0 : index
    %107 = vector.load %arg27[%c12, %c0_116] : memref<48x128xf32, #tpu.memory_space<vmem>>, vector<8x128xf32>
    %c2_117 = arith.constant 2 : index
    %c0_118 = arith.constant 0 : index
    %c0_119 = arith.constant 0 : index
    %108 = vector.load %arg14[%c2_117, %c0_118, %c0_119] : memref<3x128x128xf32, #tpu.memory_space<vmem>>, vector<1x128x128xf32>
    %109 = vector.shape_cast %108 : vector<1x128x128xf32> to vector<128x128xf32>
    %cst_120 = arith.constant dense<0.000000e+00> : vector<8x128xf32>
    %110 = tpu.matmul %107, %109, %cst_120 {dimension_numbers = #tpu.dot_dimension_numbers<[1], [0], [0], [1], [0, 0, 1, 1], [], []>} : vector<8x128xf32>, vector<128x128xf32>, vector<8x128xf32> -> vector<8x128xf32>
    %111 = arith.addf %106, %110 : vector<8x128xf32>
    %c0_121 = arith.constant 0 : index
    %c0_122 = arith.constant 0 : index
    %112 = vector.load %arg15[%c0_121, %c0_122] : memref<1x128xf32, #tpu.memory_space<vmem>>, vector<1x128xf32>
    %113 = vector.broadcast %112 : vector<1x128xf32> to vector<8x128xf32>
    %114 = arith.addf %111, %113 : vector<8x128xf32>
    %cst_123 = arith.constant 0.000000e+00 : f32
    %115 = vector.broadcast %cst_123 : f32 to vector<8x128xf32>
    %116 = arith.maximumf %114, %115 : vector<8x128xf32>
    %cst_124 = arith.constant 0.000000e+00 : f32
    %117 = vector.broadcast %cst_124 : f32 to vector<48x128xf32>
    %c0_125 = arith.constant 0 : index
    %c0_126 = arith.constant 0 : index
    %118 = vector.load %arg27[%c0_125, %c0_126] : memref<48x128xf32, #tpu.memory_space<vmem>>, vector<48x128xf32>
    tpu.vector_store %arg27[%c0_125, %c0_126], %117 {strides = array<i32>} : memref<48x128xf32, #tpu.memory_space<vmem>>, vector<48x128xf32>,
    %c8_127 = arith.constant 8 : index
    %c0_128 = arith.constant 0 : index
    %119 = vector.load %arg27[%c8_127, %c0_128] : memref<48x128xf32, #tpu.memory_space<vmem>>, vector<8x128xf32>
    tpu.vector_store %arg27[%c8_127, %c0_128], %116 {strides = array<i32>} : memref<48x128xf32, #tpu.memory_space<vmem>>, vector<8x128xf32>,
    %c4_129 = arith.constant 4 : index
    %c0_130 = arith.constant 0 : index
    %120 = vector.load %arg27[%c4_129, %c0_130] : memref<48x128xf32, #tpu.memory_space<vmem>>, vector<8x128xf32>
    %c0_131 = arith.constant 0 : index
    %c0_132 = arith.constant 0 : index
    %c0_133 = arith.constant 0 : index
    %121 = vector.load %arg16[%c0_131, %c0_132, %c0_133] : memref<3x128x128xf32, #tpu.memory_space<vmem>>, vector<1x128x128xf32>
    %122 = vector.shape_cast %121 : vector<1x128x128xf32> to vector<128x128xf32>
    %cst_134 = arith.constant dense<0.000000e+00> : vector<8x128xf32>
    %123 = tpu.matmul %120, %122, %cst_134 {dimension_numbers = #tpu.dot_dimension_numbers<[1], [0], [0], [1], [0, 0, 1, 1], [], []>} : vector<8x128xf32>, vector<128x128xf32>, vector<8x128xf32> -> vector<8x128xf32>
    %c1_135 = arith.constant 1 : index
    %c0_136 = arith.constant 0 : index
    %c0_137 = arith.constant 0 : index
    %124 = vector.load %arg16[%c1_135, %c0_136, %c0_137] : memref<3x128x128xf32, #tpu.memory_space<vmem>>, vector<1x128x128xf32>
    %125 = vector.shape_cast %124 : vector<1x128x128xf32> to vector<128x128xf32>
    %cst_138 = arith.constant dense<0.000000e+00> : vector<8x128xf32>
    %126 = tpu.matmul %116, %125, %cst_138 {dimension_numbers = #tpu.dot_dimension_numbers<[1], [0], [0], [1], [0, 0, 1, 1], [], []>} : vector<8x128xf32>, vector<128x128xf32>, vector<8x128xf32> -> vector<8x128xf32>
    %127 = arith.addf %123, %126 : vector<8x128xf32>
    %c12_139 = arith.constant 12 : index
    %c0_140 = arith.constant 0 : index
    %128 = vector.load %arg27[%c12_139, %c0_140] : memref<48x128xf32, #tpu.memory_space<vmem>>, vector<8x128xf32>
    %c2_141 = arith.constant 2 : index
    %c0_142 = arith.constant 0 : index
    %c0_143 = arith.constant 0 : index
    %129 = vector.load %arg16[%c2_141, %c0_142, %c0_143] : memref<3x128x128xf32, #tpu.memory_space<vmem>>, vector<1x128x128xf32>
    %130 = vector.shape_cast %129 : vector<1x128x128xf32> to vector<128x128xf32>
    %cst_144 = arith.constant dense<0.000000e+00> : vector<8x128xf32>
    %131 = tpu.matmul %128, %130, %cst_144 {dimension_numbers = #tpu.dot_dimension_numbers<[1], [0], [0], [1], [0, 0, 1, 1], [], []>} : vector<8x128xf32>, vector<128x128xf32>, vector<8x128xf32> -> vector<8x128xf32>
    %132 = arith.addf %127, %131 : vector<8x128xf32>
    %c0_145 = arith.constant 0 : index
    %c0_146 = arith.constant 0 : index
    %133 = vector.load %arg17[%c0_145, %c0_146] : memref<1x128xf32, #tpu.memory_space<vmem>>, vector<1x128xf32>
    %134 = vector.broadcast %133 : vector<1x128xf32> to vector<8x128xf32>
    %135 = arith.addf %132, %134 : vector<8x128xf32>
    %c0_147 = arith.constant 0 : index
    %c0_148 = arith.constant 0 : index
    %136 = vector.load %arg19[%c0_147, %c0_148] : memref<4x8xf32, #tpu.memory_space<vmem>>, vector<4x8xf32>
    %cst_149 = arith.constant dense<0.000000e+00> : vector<4x128xf32>
    %137 = tpu.matmul %136, %135, %cst_149 {dimension_numbers = #tpu.dot_dimension_numbers<[1], [0], [0], [1], [0, 0, 1, 1], [], []>} : vector<4x8xf32>, vector<8x128xf32>, vector<4x128xf32> -> vector<4x128xf32>
    %c0_150 = arith.constant 0 : index
    %c0_151 = arith.constant 0 : index
    %138 = vector.load %arg18[%c0_150, %c0_151] : memref<1x128xf32, #tpu.memory_space<vmem>>, vector<1x128xf32>
    %139 = vector.broadcast %138 : vector<1x128xf32> to vector<4x128xf32>
    %140 = arith.addf %137, %139 : vector<4x128xf32>
    %cst_152 = arith.constant 0.000000e+00 : f32
    %141 = vector.broadcast %cst_152 : f32 to vector<4x128xf32>
    %142 = arith.maximumf %140, %141 : vector<4x128xf32>
    %143 = vector.extract_strided_slice %142 {offsets = [0, 0], sizes = [1, 128], strides = [1, 1]} : vector<4x128xf32> to vector<1x128xf32>
    %c0_153 = arith.constant 0 : index
    %c0_154 = arith.constant 0 : index
    %c0_155 = arith.constant 0 : index
    %144 = vector.load %arg20[%c0_153, %c0_154, %c0_155] : memref<4x128x256xf32, #tpu.memory_space<vmem>>, vector<1x128x256xf32>
    %145 = vector.shape_cast %144 : vector<1x128x256xf32> to vector<128x256xf32>
    %cst_156 = arith.constant dense<0.000000e+00> : vector<1x256xf32>
    %146 = tpu.matmul %143, %145, %cst_156 {dimension_numbers = #tpu.dot_dimension_numbers<[1], [0], [0], [1], [0, 0, 1, 1], [], []>} : vector<1x128xf32>, vector<128x256xf32>, vector<1x256xf32> -> vector<1x256xf32>
    %147 = vector.extract_strided_slice %142 {offsets = [1, 0], sizes = [1, 128], strides = [1, 1]} : vector<4x128xf32> to vector<1x128xf32>
    %c1_157 = arith.constant 1 : index
    %c0_158 = arith.constant 0 : index
    %c0_159 = arith.constant 0 : index
    %148 = vector.load %arg20[%c1_157, %c0_158, %c0_159] : memref<4x128x256xf32, #tpu.memory_space<vmem>>, vector<1x128x256xf32>
    %149 = vector.shape_cast %148 : vector<1x128x256xf32> to vector<128x256xf32>
    %cst_160 = arith.constant dense<0.000000e+00> : vector<1x256xf32>
    %150 = tpu.matmul %147, %149, %cst_160 {dimension_numbers = #tpu.dot_dimension_numbers<[1], [0], [0], [1], [0, 0, 1, 1], [], []>} : vector<1x128xf32>, vector<128x256xf32>, vector<1x256xf32> -> vector<1x256xf32>
    %151 = arith.addf %146, %150 : vector<1x256xf32>
    %152 = vector.extract_strided_slice %142 {offsets = [2, 0], sizes = [1, 128], strides = [1, 1]} : vector<4x128xf32> to vector<1x128xf32>
    %c2_161 = arith.constant 2 : index
    %c0_162 = arith.constant 0 : index
    %c0_163 = arith.constant 0 : index
    %153 = vector.load %arg20[%c2_161, %c0_162, %c0_163] : memref<4x128x256xf32, #tpu.memory_space<vmem>>, vector<1x128x256xf32>
    %154 = vector.shape_cast %153 : vector<1x128x256xf32> to vector<128x256xf32>
    %cst_164 = arith.constant dense<0.000000e+00> : vector<1x256xf32>
    %155 = tpu.matmul %152, %154, %cst_164 {dimension_numbers = #tpu.dot_dimension_numbers<[1], [0], [0], [1], [0, 0, 1, 1], [], []>} : vector<1x128xf32>, vector<128x256xf32>, vector<1x256xf32> -> vector<1x256xf32>
    %156 = arith.addf %151, %155 : vector<1x256xf32>
    %157 = vector.extract_strided_slice %142 {offsets = [3, 0], sizes = [1, 128], strides = [1, 1]} : vector<4x128xf32> to vector<1x128xf32>
    %c3 = arith.constant 3 : index
    %c0_165 = arith.constant 0 : index
    %c0_166 = arith.constant 0 : index
    %158 = vector.load %arg20[%c3, %c0_165, %c0_166] : memref<4x128x256xf32, #tpu.memory_space<vmem>>, vector<1x128x256xf32>
    %159 = vector.shape_cast %158 : vector<1x128x256xf32> to vector<128x256xf32>
    %cst_167 = arith.constant dense<0.000000e+00> : vector<1x256xf32>
    %160 = tpu.matmul %157, %159, %cst_167 {dimension_numbers = #tpu.dot_dimension_numbers<[1], [0], [0], [1], [0, 0, 1, 1], [], []>} : vector<1x128xf32>, vector<128x256xf32>, vector<1x256xf32> -> vector<1x256xf32>
    %161 = arith.addf %156, %160 : vector<1x256xf32>
    %c0_168 = arith.constant 0 : index
    %c0_169 = arith.constant 0 : index
    %162 = vector.load %arg21[%c0_168, %c0_169] : memref<1x256xf32, #tpu.memory_space<vmem>>, vector<1x256xf32>
    %163 = arith.addf %161, %162 : vector<1x256xf32>
    %cst_170 = arith.constant 0.000000e+00 : f32
    %164 = vector.broadcast %cst_170 : f32 to vector<1x256xf32>
    %165 = arith.maximumf %163, %164 : vector<1x256xf32>
    %c0_171 = arith.constant 0 : index
    %c0_172 = arith.constant 0 : index
    %166 = vector.load %arg22[%c0_171, %c0_172] : memref<256x64xf32, #tpu.memory_space<vmem>>, vector<256x64xf32>
    %cst_173 = arith.constant dense<0.000000e+00> : vector<1x64xf32>
    %167 = tpu.matmul %165, %166, %cst_173 {dimension_numbers = #tpu.dot_dimension_numbers<[1], [0], [0], [1], [0, 0, 1, 1], [], []>} : vector<1x256xf32>, vector<256x64xf32>, vector<1x64xf32> -> vector<1x64xf32>
    %c0_174 = arith.constant 0 : index
    %c0_175 = arith.constant 0 : index
    %168 = vector.load %arg23[%c0_174, %c0_175] : memref<1x64xf32, #tpu.memory_space<vmem>>, vector<1x64xf32>
    %169 = arith.addf %167, %168 : vector<1x64xf32>
    %cst_176 = arith.constant 0.000000e+00 : f32
    %170 = vector.broadcast %cst_176 : f32 to vector<1x64xf32>
    %171 = arith.maximumf %169, %170 : vector<1x64xf32>
    %c0_177 = arith.constant 0 : index
    %c0_178 = arith.constant 0 : index
    %172 = vector.load %arg24[%c0_177, %c0_178] : memref<64x2xf32, #tpu.memory_space<vmem>>, vector<64x2xf32>
    %cst_179 = arith.constant dense<0.000000e+00> : vector<1x2xf32>
    %173 = tpu.matmul %171, %172, %cst_179 {dimension_numbers = #tpu.dot_dimension_numbers<[1], [0], [0], [1], [0, 0, 1, 1], [], []>} : vector<1x64xf32>, vector<64x2xf32>, vector<1x2xf32> -> vector<1x2xf32>
    %c0_180 = arith.constant 0 : index
    %c0_181 = arith.constant 0 : index
    %174 = vector.load %arg25[%c0_180, %c0_181] : memref<1x2xf32, #tpu.memory_space<vmem>>, vector<1x2xf32>
    %175 = arith.addf %173, %174 : vector<1x2xf32>
    %c0_182 = arith.constant 0 : index
    %c0_183 = arith.constant 0 : index
    %c0_184 = arith.constant 0 : index
    %176 = vector.load %arg26[%c0_182, %c0_183, %c0_184] : memref<1x1x2xf32, #tpu.memory_space<vmem>>, vector<1x1x2xf32>
    %177 = vector.shape_cast %176 : vector<1x1x2xf32> to vector<1x2xf32>
    %178 = vector.shape_cast %175 : vector<1x2xf32> to vector<1x1x2xf32>
    tpu.vector_store %arg26[%c0_182, %c0_183, %c0_184], %178 {strides = array<i32>} : memref<1x1x2xf32, #tpu.memory_space<vmem>>, vector<1x1x2xf32>,
    return
  }
  func.func @transform_0(%arg0: i32) -> (i32, i32, i32) {
    %c0_i32 = arith.constant 0 : i32
    %c0_i32_0 = arith.constant 0 : i32
    %c0_i32_1 = arith.constant 0 : i32
    return %arg0, %c0_i32, %c0_i32_0 : i32, i32, i32
  }
  func.func @transform_1(%arg0: i32) -> (i32, i32, i32) {
    %c0_i32 = arith.constant 0 : i32
    %c0_i32_0 = arith.constant 0 : i32
    %c0_i32_1 = arith.constant 0 : i32
    %c0_i32_2 = arith.constant 0 : i32
    return %c0_i32, %c0_i32_0, %c0_i32_1 : i32, i32, i32
  }
  func.func @transform_2(%arg0: i32) -> (i32, i32) {
    %c0_i32 = arith.constant 0 : i32
    %c0_i32_0 = arith.constant 0 : i32
    %c0_i32_1 = arith.constant 0 : i32
    return %c0_i32, %c0_i32_0 : i32, i32
  }
  func.func @transform_3(%arg0: i32) -> (i32, i32, i32) {
    %c0_i32 = arith.constant 0 : i32
    %c0_i32_0 = arith.constant 0 : i32
    %c0_i32_1 = arith.constant 0 : i32
    %c0_i32_2 = arith.constant 0 : i32
    return %c0_i32, %c0_i32_0, %c0_i32_1 : i32, i32, i32
  }
  func.func @transform_4(%arg0: i32) -> (i32, i32) {
    %c0_i32 = arith.constant 0 : i32
    %c0_i32_0 = arith.constant 0 : i32
    %c0_i32_1 = arith.constant 0 : i32
    return %c0_i32, %c0_i32_0 : i32, i32
  }
  func.func @transform_5(%arg0: i32) -> (i32, i32) {
    %c0_i32 = arith.constant 0 : i32
    %c0_i32_0 = arith.constant 0 : i32
    %c0_i32_1 = arith.constant 0 : i32
    return %c0_i32, %c0_i32_0 : i32, i32
  }
  func.func @transform_6(%arg0: i32) -> (i32, i32) {
    %c0_i32 = arith.constant 0 : i32
    %c0_i32_0 = arith.constant 0 : i32
    %c0_i32_1 = arith.constant 0 : i32
    return %c0_i32, %c0_i32_0 : i32, i32
  }
  func.func @transform_7(%arg0: i32) -> (i32, i32, i32) {
    %c0_i32 = arith.constant 0 : i32
    %c0_i32_0 = arith.constant 0 : i32
    %c0_i32_1 = arith.constant 0 : i32
    %c0_i32_2 = arith.constant 0 : i32
    return %c0_i32, %c0_i32_0, %c0_i32_1 : i32, i32, i32
  }
  func.func @transform_8(%arg0: i32) -> (i32, i32) {
    %c0_i32 = arith.constant 0 : i32
    %c0_i32_0 = arith.constant 0 : i32
    %c0_i32_1 = arith.constant 0 : i32
    return %c0_i32, %c0_i32_0 : i32, i32
  }
  func.func @transform_9(%arg0: i32) -> (i32, i32, i32) {
    %c0_i32 = arith.constant 0 : i32
    %c0_i32_0 = arith.constant 0 : i32
    %c0_i32_1 = arith.constant 0 : i32
    %c0_i32_2 = arith.constant 0 : i32
    return %c0_i32, %c0_i32_0, %c0_i32_1 : i32, i32, i32
  }
  func.func @transform_10(%arg0: i32) -> (i32, i32) {
    %c0_i32 = arith.constant 0 : i32
    %c0_i32_0 = arith.constant 0 : i32
    %c0_i32_1 = arith.constant 0 : i32
    return %c0_i32, %c0_i32_0 : i32, i32
  }
  func.func @transform_11(%arg0: i32) -> (i32, i32) {
    %c0_i32 = arith.constant 0 : i32
    %c0_i32_0 = arith.constant 0 : i32
    %c0_i32_1 = arith.constant 0 : i32
    return %c0_i32, %c0_i32_0 : i32, i32
  }
  func.func @transform_12(%arg0: i32) -> (i32, i32) {
    %c0_i32 = arith.constant 0 : i32
    %c0_i32_0 = arith.constant 0 : i32
    %c0_i32_1 = arith.constant 0 : i32
    return %c0_i32, %c0_i32_0 : i32, i32
  }
  func.func @transform_13(%arg0: i32) -> (i32, i32, i32) {
    %c0_i32 = arith.constant 0 : i32
    %c0_i32_0 = arith.constant 0 : i32
    %c0_i32_1 = arith.constant 0 : i32
    %c0_i32_2 = arith.constant 0 : i32
    return %c0_i32, %c0_i32_0, %c0_i32_1 : i32, i32, i32
  }
  func.func @transform_14(%arg0: i32) -> (i32, i32) {
    %c0_i32 = arith.constant 0 : i32
    %c0_i32_0 = arith.constant 0 : i32
    %c0_i32_1 = arith.constant 0 : i32
    return %c0_i32, %c0_i32_0 : i32, i32
  }
  func.func @transform_15(%arg0: i32) -> (i32, i32, i32) {
    %c0_i32 = arith.constant 0 : i32
    %c0_i32_0 = arith.constant 0 : i32
    %c0_i32_1 = arith.constant 0 : i32
    %c0_i32_2 = arith.constant 0 : i32
    return %c0_i32, %c0_i32_0, %c0_i32_1 : i32, i32, i32
  }
  func.func @transform_16(%arg0: i32) -> (i32, i32) {
    %c0_i32 = arith.constant 0 : i32
    %c0_i32_0 = arith.constant 0 : i32
    %c0_i32_1 = arith.constant 0 : i32
    return %c0_i32, %c0_i32_0 : i32, i32
  }
  func.func @transform_17(%arg0: i32) -> (i32, i32) {
    %c0_i32 = arith.constant 0 : i32
    %c0_i32_0 = arith.constant 0 : i32
    %c0_i32_1 = arith.constant 0 : i32
    return %c0_i32, %c0_i32_0 : i32, i32
  }
  func.func @transform_18(%arg0: i32) -> (i32, i32) {
    %c0_i32 = arith.constant 0 : i32
    %c0_i32_0 = arith.constant 0 : i32
    %c0_i32_1 = arith.constant 0 : i32
    return %c0_i32, %c0_i32_0 : i32, i32
  }
  func.func @transform_19(%arg0: i32) -> (i32, i32, i32) {
    %c0_i32 = arith.constant 0 : i32
    %c0_i32_0 = arith.constant 0 : i32
    %c0_i32_1 = arith.constant 0 : i32
    %c0_i32_2 = arith.constant 0 : i32
    return %c0_i32, %c0_i32_0, %c0_i32_1 : i32, i32, i32
  }
  func.func @transform_20(%arg0: i32) -> (i32, i32) {
    %c0_i32 = arith.constant 0 : i32
    %c0_i32_0 = arith.constant 0 : i32
    %c0_i32_1 = arith.constant 0 : i32
    return %c0_i32, %c0_i32_0 : i32, i32
  }
  func.func @transform_21(%arg0: i32) -> (i32, i32) {
    %c0_i32 = arith.constant 0 : i32
    %c0_i32_0 = arith.constant 0 : i32
    %c0_i32_1 = arith.constant 0 : i32
    return %c0_i32, %c0_i32_0 : i32, i32
  }
  func.func @transform_22(%arg0: i32) -> (i32, i32) {
    %c0_i32 = arith.constant 0 : i32
    %c0_i32_0 = arith.constant 0 : i32
    %c0_i32_1 = arith.constant 0 : i32
    return %c0_i32, %c0_i32_0 : i32, i32
  }
  func.func @transform_23(%arg0: i32) -> (i32, i32) {
    %c0_i32 = arith.constant 0 : i32
    %c0_i32_0 = arith.constant 0 : i32
    %c0_i32_1 = arith.constant 0 : i32
    return %c0_i32, %c0_i32_0 : i32, i32
  }
  func.func @transform_24(%arg0: i32) -> (i32, i32) {
    %c0_i32 = arith.constant 0 : i32
    %c0_i32_0 = arith.constant 0 : i32
    %c0_i32_1 = arith.constant 0 : i32
    return %c0_i32, %c0_i32_0 : i32, i32
  }
  func.func @transform_25(%arg0: i32) -> (i32, i32, i32) {
    %c0_i32 = arith.constant 0 : i32
    %c0_i32_0 = arith.constant 0 : i32
    %c0_i32_1 = arith.constant 0 : i32
    return %arg0, %c0_i32, %c0_i32_0 : i32, i32, i32
  }
}

</mosaic_0001>

<llo_original>
// kernel: net_paper_forward.1
$region0: #{net_paper_forward.1}
  #allocation0 [shape = 'u32[]', space=smem, size = 0x4, offset = 0x4, fixed_abs, tag = 'smem constant byte address 0x4 - core index']
  #allocation1 [shape = 'u32[144,128]{1,0:T(1,128)}', space=vmem, size = 0x12000, scoped, tag = 'internal scratch']
  #allocation2 [shape = 'f32[48,128]{1,0:T(8,128)}', space=vmem, size = 0x6000, scoped, tag = 'scratch operand']
  %s0 = inlined_call_operand.vmem [shape: f32[2,32,4], index: 0, kind: input, shape index: {}]
  %s1 = inlined_call_operand.vmem [shape: f32[3,4,32], index: 1, kind: input, shape index: {}]
  %s2 = inlined_call_operand.vmem [shape: f32[1,32], index: 2, kind: input, shape index: {}]
  %s3 = inlined_call_operand.hbm [shape: f32[3,32,64], index: 3, kind: input, shape index: {}]
  %s4 = inlined_call_operand.vmem [shape: f32[1,64], index: 4, kind: input, shape index: {}]
  %s5 = inlined_call_operand.vmem [shape: f32[1,64], index: 5, kind: input, shape index: {}]
  %s6 = inlined_call_operand.vmem [shape: f32[16,32], index: 6, kind: input, shape index: {}]
  %s7 = inlined_call_operand.hbm [shape: f32[3,64,64], index: 7, kind: input, shape index: {}]
  %s8 = inlined_call_operand.vmem [shape: f32[1,64], index: 8, kind: input, shape index: {}]
  %s9 = inlined_call_operand.hbm [shape: f32[3,64,128], index: 9, kind: input, shape index: {}]
  %s10 = inlined_call_operand.vmem [shape: f32[1,128], index: 10, kind: input, shape index: {}]
  %s11 = inlined_call_operand.vmem [shape: f32[1,128], index: 11, kind: input, shape index: {}]
  %s12 = inlined_call_operand.vmem [shape: f32[8,16], index: 12, kind: input, shape index: {}]
  %s13 = inlined_call_operand.vmem [shape: f32[3,128,128], index: 13, kind: input, shape index: {}]
  %s14 = inlined_call_operand.vmem [shape: f32[1,128], index: 14, kind: input, shape index: {}]
  %s15 = inlined_call_operand.hbm [shape: f32[3,128,128], index: 15, kind: input, shape index: {}]
  %s16 = inlined_call_operand.vmem [shape: f32[1,128], index: 16, kind: input, shape index: {}]
  %s17 = inlined_call_operand.vmem [shape: f32[1,128], index: 17, kind: input, shape index: {}]
  %s18 = inlined_call_operand.vmem [shape: f32[4,8], index: 18, kind: input, shape index: {}]
  %s19 = inlined_call_operand.hbm [shape: f32[4,128,256], index: 19, kind: input, shape index: {}]
  %s20 = inlined_call_operand.vmem [shape: f32[1,256], index: 20, kind: input, shape index: {}]
  %s21 = inlined_call_operand.vmem [shape: f32[256,64], index: 21, kind: input, shape index: {}]
  %s22 = inlined_call_operand.vmem [shape: f32[1,64], index: 22, kind: input, shape index: {}]
  %s23 = inlined_call_operand.vmem [shape: f32[64,2], index: 23, kind: input, shape index: {}]
  %s24 = inlined_call_operand.vmem [shape: f32[1,2], index: 24, kind: input, shape index: {}]
  %s25 = inlined_call_operand.hbm [shape: f32[2,1,2], index: 25, kind: output, shape index: {}]
  %s26 = sld [smem:[#allocation0]]
  $region153: #{net_paper_forward.1} parent=0
    _
  %s28 = ssub.s32 1, %s26
  %s29 = scalar_select 0, %s28, %s26
  $region1: #{net_paper_forward.1} parent=0
    #allocation3 [shape = 'u8[49152]{0}', space=vmem, size = 0xc000, scoped, tag = 'input window, operand 3, single buffered']
    #allocation4 [shape = 's32[2]{0}', space=sflag, size = 0x8, scoped, tag = 'scoped memory for net_paper_forward.1']
    #allocation5 [shape = 's32[2]{0}', space=sflag, size = 0x8, scoped, tag = 'scoped memory for net_paper_forward.1']
    #allocation6 [shape = 'u8[98304]{0}', space=vmem, size = 0x18000, scoped, tag = 'input window, operand 7, single buffered']
    #allocation7 [shape = 's32[1]{0}', space=sflag, size = 0x4, scoped, tag = 'scoped memory for net_paper_forward.1']
    #allocation8 [shape = 'u8[98304]{0}', space=vmem, size = 0x18000, scoped, tag = 'input window, operand 9, single buffered']
    #allocation9 [shape = 'u8[196608]{0}', space=vmem, size = 0x30000, scoped, tag = 'input window, operand 15, single buffered']
    #allocation10 [shape = 's32[1]{0}', space=sflag, size = 0x4, scoped, tag = 'scoped memory for net_paper_forward.1']
    #allocation11 [shape = 'u8[524288]{0}', space=vmem, size = 0x80000, scoped, tag = 'input window, operand 19, single buffered']
    #allocation12 [shape = 'u8[1024]{0}', space=vmem, size = 0x400, scoped, tag = 'output window, operand 0']
    %30 = vsyncpa [#allocation4], 0
    %31 = vsyncpa [#allocation7], 0
    %32 = vsyncpa [#allocation10], 0
    %33 = vsyncpa [#allocation5], 0
    %s34 = scalar_lea.sflag [#allocation5], 1
    %35 = vsyncpa %s34, 0
    loop: start=0, step=1, limit=4
    $region2: #{net_paper_forward.1} parent=1 // loop_pre_header
      _
    $region3: #{net_paper_forward.1} parent=1 // loop_header
      %s37 = sphi 0, %s41
      %p38 = scmp.ge.s32.totalorder %s37, 4
      %s47 = sphi 0, %s49
      %s50 = sphi 0, %s47
      %s51 = sphi 0, %s50
      %s67 = sphi 0, %s51
      %s71 = sphi 0, %s71
      %s73 = sphi 0, %s71
      %s74 = sphi 0, %s73
      %s88 = sphi 0, %s74
      %s92 = sphi 0, %s92
      %s94 = sphi 0, %s92
      %s95 = sphi 0, %s94
      %s109 = sphi 0, %s95
      %s113 = sphi 0, %s113
      %s115 = sphi 0, %s113
      %s116 = sphi 0, %s115
      %s130 = sphi 0, %s116
      %s134 = sphi 0, %s134
      %s136 = sphi 0, %s134
      %s137 = sphi 0, %s136
      %s151 = sphi 0, %s137
      %s155 = sphi 0, %s155
      %s157 = sphi 0, %s155
      %s158 = sphi 0, %s157
      %s172 = sphi 0, %s158
      %s176 = sphi 0, %s176
      %s178 = sphi 0, %s176
      %s179 = sphi 0, %s178
      %s193 = sphi 0, %s179
      %s197 = sphi 0, %s197
      %s199 = sphi 0, %s197
      %s200 = sphi 0, %s199
      %s214 = sphi 0, %s200
      %s218 = sphi 0, %s218
      %s220 = sphi 0, %s218
      %s221 = sphi 0, %s220
      %s235 = sphi 0, %s221
      %s239 = sphi 0, %s239
      %s241 = sphi 0, %s239
      %s242 = sphi 0, %s241
      %s256 = sphi 0, %s242
      %s260 = sphi 0, %s260
      %s262 = sphi 0, %s260
      %s263 = sphi 0, %s262
      %s277 = sphi 0, %s263
      %s281 = sphi 0, %s281
      %s283 = sphi 0, %s281
      %s284 = sphi 0, %s283
      %s298 = sphi 0, %s284
      %s302 = sphi 0, %s302
      %s304 = sphi 0, %s302
      %s305 = sphi 0, %s304
      %s319 = sphi 0, %s305
      %s323 = sphi 0, %s323
      %s325 = sphi 0, %s323
      %s326 = sphi 0, %s325
      %s340 = sphi 0, %s326
      %s344 = sphi 0, %s344
      %s346 = sphi 0, %s344
      %s347 = sphi 0, %s346
      %s361 = sphi 0, %s347
      %s365 = sphi 0, %s365
      %s367 = sphi 0, %s365
      %s368 = sphi 0, %s367
      %s382 = sphi 0, %s368
      %s386 = sphi 0, %s386
      %s388 = sphi 0, %s386
      %s389 = sphi 0, %s388
      %s403 = sphi 0, %s389
      %s407 = sphi 0, %s407
      %s409 = sphi 0, %s407
      %s410 = sphi 0, %s409
      %s424 = sphi 0, %s410
      %s428 = sphi 0, %s428
      %s430 = sphi 0, %s428
      %s431 = sphi 0, %s430
      %s445 = sphi 0, %s431
      %s449 = sphi 0, %s449
      %s451 = sphi 0, %s449
      %s452 = sphi 0, %s451
      %s466 = sphi 0, %s452
      %s470 = sphi 0, %s470
      %s472 = sphi 0, %s470
      %s473 = sphi 0, %s472
      %s487 = sphi 0, %s473
      %s491 = sphi 0, %s491
      %s493 = sphi 0, %s491
      %s494 = sphi 0, %s493
      %s508 = sphi 0, %s494
      %s512 = sphi 0, %s512
      %s514 = sphi 0, %s512
      %s515 = sphi 0, %s514
      %s529 = sphi 0, %s515
      %s533 = sphi 0, %s533
      %s535 = sphi 0, %s533
      %s536 = sphi 0, %s535
      %s550 = sphi 0, %s536
      %s554 = sphi 0, %s554
      %s556 = sphi 0, %s554
      %s557 = sphi 0, %s556
      %s571 = sphi 0, %s557
      %s577 = sphi 0, %s579
      %s580 = sphi 0, %s577
      %s581 = sphi 0, %s580
      %s597 = sphi 0, %s581
    $region4: #{net_paper_forward.1} parent=1 // loop_header_branch
      %40 = sbr.rel (%p38) target = $region8
    $region5: #{net_paper_forward.1} parent=1 // loop_body
      %s42 = ssub.s32 %s37, 1
      %s43 = ssub.s32 %s37, 2
      %s44 = sadd.s32 %s37, 1
      %s45 = ssub.s32 %s37, %s44
      %p46 = scmp.eq.s32.totalorder %s45, 0
      %s48 = sadd.s32 %s47, 1
      %s49 = scalar_select %p46, %s47, %s48
      %p52 = pneg %p46
      %p53 = scmp.eq.s32.totalorder %s37, 1
      %p54 = por %p52, %p53
      %p55 = scmp.ne.s32.totalorder %s47, %s50
      %p56 = scmp.eq.s32.totalorder %s37, 0
      %p57 = por %p55, %p56
      %p58 = scmp.ne.s32.totalorder %s47, %s50
      %p59 = scmp.eq.s32.totalorder %s42, 1
      %p60 = por %p58, %p59
      %p61 = scmp.ne.s32.totalorder %s50, %s51
      %p62 = scmp.eq.s32.totalorder %s42, 0
      %p63 = por %p61, %p62
      %p64 = scmp.ne.s32.totalorder %s50, %s51
      %p65 = scmp.eq.s32.totalorder %s43, 1
      %p66 = por %p64, %p65
      %p68 = scmp.ne.s32.totalorder %s51, %s67
      %p69 = scmp.eq.s32.totalorder %s43, 0
      %p70 = por %p68, %p69
      %s72 = sadd.s32 %s71, 1
      %p75 = scmp.eq.s32.totalorder %s37, 1
      %p76 = scmp.ne.s32.totalorder %s71, %s73
      %p77 = scmp.eq.s32.totalorder %s37, 0
      %p78 = por %p76, %p77
      %p79 = scmp.ne.s32.totalorder %s71, %s73
      %p80 = scmp.eq.s32.totalorder %s42, 1
      %p81 = por %p79, %p80
      %p82 = scmp.ne.s32.totalorder %s73, %s74
      %p83 = scmp.eq.s32.totalorder %s42, 0
      %p84 = por %p82, %p83
      %p85 = scmp.ne.s32.totalorder %s73, %s74
      %p86 = scmp.eq.s32.totalorder %s43, 1
      %p87 = por %p85, %p86
      %p89 = scmp.ne.s32.totalorder %s74, %s88
      %p90 = scmp.eq.s32.totalorder %s43, 0
      %p91 = por %p89, %p90
      %s93 = sadd.s32 %s92, 1
      %p96 = scmp.eq.s32.totalorder %s37, 1
      %p97 = scmp.ne.s32.totalorder %s92, %s94
      %p98 = scmp.eq.s32.totalorder %s37, 0
      %p99 = por %p97, %p98
      %p100 = scmp.ne.s32.totalorder %s92, %s94
      %p101 = scmp.eq.s32.totalorder %s42, 1
      %p102 = por %p100, %p101
      %p103 = scmp.ne.s32.totalorder %s94, %s95
      %p104 = scmp.eq.s32.totalorder %s42, 0
      %p105 = por %p103, %p104
      %p106 = scmp.ne.s32.totalorder %s94, %s95
      %p107 = scmp.eq.s32.totalorder %s43, 1
      %p108 = por %p106, %p107
      %p110 = scmp.ne.s32.totalorder %s95, %s109
      %p111 = scmp.eq.s32.totalorder %s43, 0
      %p112 = por %p110, %p111
      %s114 = sadd.s32 %s113, 1
      %p117 = scmp.eq.s32.totalorder %s37, 1
      %p118 = scmp.ne.s32.totalorder %s113, %s115
      %p119 = scmp.eq.s32.totalorder %s37, 0
      %p120 = por %p118, %p119
      %p121 = scmp.ne.s32.totalorder %s113, %s115
      %p122 = scmp.eq.s32.totalorder %s42, 1
      %p123 = por %p121, %p122
      %p124 = scmp.ne.s32.totalorder %s115, %s116
      %p125 = scmp.eq.s32.totalorder %s42, 0
      %p126 = por %p124, %p125
      %p127 = scmp.ne.s32.totalorder %s115, %s116
      %p128 = scmp.eq.s32.totalorder %s43, 1
      %p129 = por %p127, %p128
      %p131 = scmp.ne.s32.totalorder %s116, %s130
      %p132 = scmp.eq.s32.totalorder %s43, 0
      %p133 = por %p131, %p132
      %s135 = sadd.s32 %s134, 1
      %p138 = scmp.eq.s32.totalorder %s37, 1
      %p139 = scmp.ne.s32.totalorder %s134, %s136
      %p140 = scmp.eq.s32.totalorder %s37, 0
      %p141 = por %p139, %p140
      %p142 = scmp.ne.s32.totalorder %s134, %s136
      %p143 = scmp.eq.s32.totalorder %s42, 1
      %p144 = por %p142, %p143
      %p145 = scmp.ne.s32.totalorder %s136, %s137
      %p146 = scmp.eq.s32.totalorder %s42, 0
      %p147 = por %p145, %p146
      %p148 = scmp.ne.s32.totalorder %s136, %s137
      %p149 = scmp.eq.s32.totalorder %s43, 1
      %p150 = por %p148, %p149
      %p152 = scmp.ne.s32.totalorder %s137, %s151
      %p153 = scmp.eq.s32.totalorder %s43, 0
      %p154 = por %p152, %p153
      %s156 = sadd.s32 %s155, 1
      %p159 = scmp.eq.s32.totalorder %s37, 1
      %p160 = scmp.ne.s32.totalorder %s155, %s157
      %p161 = scmp.eq.s32.totalorder %s37, 0
      %p162 = por %p160, %p161
      %p163 = scmp.ne.s32.totalorder %s155, %s157
      %p164 = scmp.eq.s32.totalorder %s42, 1
      %p165 = por %p163, %p164
      %p166 = scmp.ne.s32.totalorder %s157, %s158
      %p167 = scmp.eq.s32.totalorder %s42, 0
      %p168 = por %p166, %p167
      %p169 = scmp.ne.s32.totalorder %s157, %s158
      %p170 = scmp.eq.s32.totalorder %s43, 1
      %p171 = por %p169, %p170
      %p173 = scmp.ne.s32.totalorder %s158, %s172
      %p174 = scmp.eq.s32.totalorder %s43, 0
      %p175 = por %p173, %p174
      %s177 = sadd.s32 %s176, 1
      %p180 = scmp.eq.s32.totalorder %s37, 1
      %p181 = scmp.ne.s32.totalorder %s176, %s178
      %p182 = scmp.eq.s32.totalorder %s37, 0
      %p183 = por %p181, %p182
      %p184 = scmp.ne.s32.totalorder %s176, %s178
      %p185 = scmp.eq.s32.totalorder %s42, 1
      %p186 = por %p184, %p185
      %p187 = scmp.ne.s32.totalorder %s178, %s179
      %p188 = scmp.eq.s32.totalorder %s42, 0
      %p189 = por %p187, %p188
      %p190 = scmp.ne.s32.totalorder %s178, %s179
      %p191 = scmp.eq.s32.totalorder %s43, 1
      %p192 = por %p190, %p191
      %p194 = scmp.ne.s32.totalorder %s179, %s193
      %p195 = scmp.eq.s32.totalorder %s43, 0
      %p196 = por %p194, %p195
      %s198 = sadd.s32 %s197, 1
      %p201 = scmp.eq.s32.totalorder %s37, 1
      %p202 = scmp.ne.s32.totalorder %s197, %s199
      %p203 = scmp.eq.s32.totalorder %s37, 0
      %p204 = por %p202, %p203
      %p205 = scmp.ne.s32.totalorder %s197, %s199
      %p206 = scmp.eq.s32.totalorder %s42, 1
      %p207 = por %p205, %p206
      %p208 = scmp.ne.s32.totalorder %s199, %s200
      %p209 = scmp.eq.s32.totalorder %s42, 0
      %p210 = por %p208, %p209
      %p211 = scmp.ne.s32.totalorder %s199, %s200
      %p212 = scmp.eq.s32.totalorder %s43, 1
      %p213 = por %p211, %p212
      %p215 = scmp.ne.s32.totalorder %s200, %s214
      %p216 = scmp.eq.s32.totalorder %s43, 0
      %p217 = por %p215, %p216
      %s219 = sadd.s32 %s218, 1
      %p222 = scmp.eq.s32.totalorder %s37, 1
      %p223 = scmp.ne.s32.totalorder %s218, %s220
      %p224 = scmp.eq.s32.totalorder %s37, 0
      %p225 = por %p223, %p224
      %p226 = scmp.ne.s32.totalorder %s218, %s220
      %p227 = scmp.eq.s32.totalorder %s42, 1
      %p228 = por %p226, %p227
      %p229 = scmp.ne.s32.totalorder %s220, %s221
      %p230 = scmp.eq.s32.totalorder %s42, 0
      %p231 = por %p229, %p230
      %p232 = scmp.ne.s32.totalorder %s220, %s221
      %p233 = scmp.eq.s32.totalorder %s43, 1
      %p234 = por %p232, %p233
      %p236 = scmp.ne.s32.totalorder %s221, %s235
      %p237 = scmp.eq.s32.totalorder %s43, 0
      %p238 = por %p236, %p237
      %s240 = sadd.s32 %s239, 1
      %p243 = scmp.eq.s32.totalorder %s37, 1
      %p244 = scmp.ne.s32.totalorder %s239, %s241
      %p245 = scmp.eq.s32.totalorder %s37, 0
      %p246 = por %p244, %p245
      %p247 = scmp.ne.s32.totalorder %s239, %s241
      %p248 = scmp.eq.s32.totalorder %s42, 1
      %p249 = por %p247, %p248
      %p250 = scmp.ne.s32.totalorder %s241, %s242
      %p251 = scmp.eq.s32.totalorder %s42, 0
      %p252 = por %p250, %p251
      %p253 = scmp.ne.s32.totalorder %s241, %s242
      %p254 = scmp.eq.s32.totalorder %s43, 1
      %p255 = por %p253, %p254
      %p257 = scmp.ne.s32.totalorder %s242, %s256
      %p258 = scmp.eq.s32.totalorder %s43, 0
      %p259 = por %p257, %p258
      %s261 = sadd.s32 %s260, 1
      %p264 = scmp.eq.s32.totalorder %s37, 1
      %p265 = scmp.ne.s32.totalorder %s260, %s262
      %p266 = scmp.eq.s32.totalorder %s37, 0
      %p267 = por %p265, %p266
      %p268 = scmp.ne.s32.totalorder %s260, %s262
      %p269 = scmp.eq.s32.totalorder %s42, 1
      %p270 = por %p268, %p269
      %p271 = scmp.ne.s32.totalorder %s262, %s263
      %p272 = scmp.eq.s32.totalorder %s42, 0
      %p273 = por %p271, %p272
      %p274 = scmp.ne.s32.totalorder %s262, %s263
      %p275 = scmp.eq.s32.totalorder %s43, 1
      %p276 = por %p274, %p275
      %p278 = scmp.ne.s32.totalorder %s263, %s277
      %p279 = scmp.eq.s32.totalorder %s43, 0
      %p280 = por %p278, %p279
      %s282 = sadd.s32 %s281, 1
      %p285 = scmp.eq.s32.totalorder %s37, 1
      %p286 = scmp.ne.s32.totalorder %s281, %s283
      %p287 = scmp.eq.s32.totalorder %s37, 0
      %p288 = por %p286, %p287
      %p289 = scmp.ne.s32.totalorder %s281, %s283
      %p290 = scmp.eq.s32.totalorder %s42, 1
      %p291 = por %p289, %p290
      %p292 = scmp.ne.s32.totalorder %s283, %s284
      %p293 = scmp.eq.s32.totalorder %s42, 0
      %p294 = por %p292, %p293
      %p295 = scmp.ne.s32.totalorder %s283, %s284
      %p296 = scmp.eq.s32.totalorder %s43, 1
      %p297 = por %p295, %p296
      %p299 = scmp.ne.s32.totalorder %s284, %s298
      %p300 = scmp.eq.s32.totalorder %s43, 0
      %p301 = por %p299, %p300
      %s303 = sadd.s32 %s302, 1
      %p306 = scmp.eq.s32.totalorder %s37, 1
      %p307 = scmp.ne.s32.totalorder %s302, %s304
      %p308 = scmp.eq.s32.totalorder %s37, 0
      %p309 = por %p307, %p308
      %p310 = scmp.ne.s32.totalorder %s302, %s304
      %p311 = scmp.eq.s32.totalorder %s42, 1
      %p312 = por %p310, %p311
      %p313 = scmp.ne.s32.totalorder %s304, %s305
      %p314 = scmp.eq.s32.totalorder %s42, 0
      %p315 = por %p313, %p314
      %p316 = scmp.ne.s32.totalorder %s304, %s305
      %p317 = scmp.eq.s32.totalorder %s43, 1
      %p318 = por %p316, %p317
      %p320 = scmp.ne.s32.totalorder %s305, %s319
      %p321 = scmp.eq.s32.totalorder %s43, 0
      %p322 = por %p320, %p321
      %s324 = sadd.s32 %s323, 1
      %p327 = scmp.eq.s32.totalorder %s37, 1
      %p328 = scmp.ne.s32.totalorder %s323, %s325
      %p329 = scmp.eq.s32.totalorder %s37, 0
      %p330 = por %p328, %p329
      %p331 = scmp.ne.s32.totalorder %s323, %s325
      %p332 = scmp.eq.s32.totalorder %s42, 1
      %p333 = por %p331, %p332
      %p334 = scmp.ne.s32.totalorder %s325, %s326
      %p335 = scmp.eq.s32.totalorder %s42, 0
      %p336 = por %p334, %p335
      %p337 = scmp.ne.s32.totalorder %s325, %s326
      %p338 = scmp.eq.s32.totalorder %s43, 1
      %p339 = por %p337, %p338
      %p341 = scmp.ne.s32.totalorder %s326, %s340
      %p342 = scmp.eq.s32.totalorder %s43, 0
      %p343 = por %p341, %p342
      %s345 = sadd.s32 %s344, 1
      %p348 = scmp.eq.s32.totalorder %s37, 1
      %p349 = scmp.ne.s32.totalorder %s344, %s346
      %p350 = scmp.eq.s32.totalorder %s37, 0
      %p351 = por %p349, %p350
      %p352 = scmp.ne.s32.totalorder %s344, %s346
      %p353 = scmp.eq.s32.totalorder %s42, 1
      %p354 = por %p352, %p353
      %p355 = scmp.ne.s32.totalorder %s346, %s347
      %p356 = scmp.eq.s32.totalorder %s42, 0
      %p357 = por %p355, %p356
      %p358 = scmp.ne.s32.totalorder %s346, %s347
      %p359 = scmp.eq.s32.totalorder %s43, 1
      %p360 = por %p358, %p359
      %p362 = scmp.ne.s32.totalorder %s347, %s361
      %p363 = scmp.eq.s32.totalorder %s43, 0
      %p364 = por %p362, %p363
      %s366 = sadd.s32 %s365, 1
      %p369 = scmp.eq.s32.totalorder %s37, 1
      %p370 = scmp.ne.s32.totalorder %s365, %s367
      %p371 = scmp.eq.s32.totalorder %s37, 0
      %p372 = por %p370, %p371
      %p373 = scmp.ne.s32.totalorder %s365, %s367
      %p374 = scmp.eq.s32.totalorder %s42, 1
      %p375 = por %p373, %p374
      %p376 = scmp.ne.s32.totalorder %s367, %s368
      %p377 = scmp.eq.s32.totalorder %s42, 0
      %p378 = por %p376, %p377
      %p379 = scmp.ne.s32.totalorder %s367, %s368
      %p380 = scmp.eq.s32.totalorder %s43, 1
      %p381 = por %p379, %p380
      %p383 = scmp.ne.s32.totalorder %s368, %s382
      %p384 = scmp.eq.s32.totalorder %s43, 0
      %p385 = por %p383, %p384
      %s387 = sadd.s32 %s386, 1
      %p390 = scmp.eq.s32.totalorder %s37, 1
      %p391 = scmp.ne.s32.totalorder %s386, %s388
      %p392 = scmp.eq.s32.totalorder %s37, 0
      %p393 = por %p391, %p392
      %p394 = scmp.ne.s32.totalorder %s386, %s388
      %p395 = scmp.eq.s32.totalorder %s42, 1
      %p396 = por %p394, %p395
      %p397 = scmp.ne.s32.totalorder %s388, %s389
      %p398 = scmp.eq.s32.totalorder %s42, 0
      %p399 = por %p397, %p398
      %p400 = scmp.ne.s32.totalorder %s388, %s389
      %p401 = scmp.eq.s32.totalorder %s43, 1
      %p402 = por %p400, %p401
      %p404 = scmp.ne.s32.totalorder %s389, %s403
      %p405 = scmp.eq.s32.totalorder %s43, 0
      %p406 = por %p404, %p405
      %s408 = sadd.s32 %s407, 1
      %p411 = scmp.eq.s32.totalorder %s37, 1
      %p412 = scmp.ne.s32.totalorder %s407, %s409
      %p413 = scmp.eq.s32.totalorder %s37, 0
      %p414 = por %p412, %p413
      %p415 = scmp.ne.s32.totalorder %s407, %s409
      %p416 = scmp.eq.s32.totalorder %s42, 1
      %p417 = por %p415, %p416
      %p418 = scmp.ne.s32.totalorder %s409, %s410
      %p419 = scmp.eq.s32.totalorder %s42, 0
      %p420 = por %p418, %p419
      %p421 = scmp.ne.s32.totalorder %s409, %s410
      %p422 = scmp.eq.s32.totalorder %s43, 1
      %p423 = por %p421, %p422
      %p425 = scmp.ne.s32.totalorder %s410, %s424
      %p426 = scmp.eq.s32.totalorder %s43, 0
      %p427 = por %p425, %p426
      %s429 = sadd.s32 %s428, 1
      %p432 = scmp.eq.s32.totalorder %s37, 1
      %p433 = scmp.ne.s32.totalorder %s428, %s430
      %p434 = scmp.eq.s32.totalorder %s37, 0
      %p435 = por %p433, %p434
      %p436 = scmp.ne.s32.totalorder %s428, %s430
      %p437 = scmp.eq.s32.totalorder %s42, 1
      %p438 = por %p436, %p437
      %p439 = scmp.ne.s32.totalorder %s430, %s431
      %p440 = scmp.eq.s32.totalorder %s42, 0
      %p441 = por %p439, %p440
      %p442 = scmp.ne.s32.totalorder %s430, %s431
      %p443 = scmp.eq.s32.totalorder %s43, 1
      %p444 = por %p442, %p443
      %p446 = scmp.ne.s32.totalorder %s431, %s445
      %p447 = scmp.eq.s32.totalorder %s43, 0
      %p448 = por %p446, %p447
      %s450 = sadd.s32 %s449, 1
      %p453 = scmp.eq.s32.totalorder %s37, 1
      %p454 = scmp.ne.s32.totalorder %s449, %s451
      %p455 = scmp.eq.s32.totalorder %s37, 0
      %p456 = por %p454, %p455
      %p457 = scmp.ne.s32.totalorder %s449, %s451
      %p458 = scmp.eq.s32.totalorder %s42, 1
      %p459 = por %p457, %p458
      %p460 = scmp.ne.s32.totalorder %s451, %s452
      %p461 = scmp.eq.s32.totalorder %s42, 0
      %p462 = por %p460, %p461
      %p463 = scmp.ne.s32.totalorder %s451, %s452
      %p464 = scmp.eq.s32.totalorder %s43, 1
      %p465 = por %p463, %p464
      %p467 = scmp.ne.s32.totalorder %s452, %s466
      %p468 = scmp.eq.s32.totalorder %s43, 0
      %p469 = por %p467, %p468
      %s471 = sadd.s32 %s470, 1
      %p474 = scmp.eq.s32.totalorder %s37, 1
      %p475 = scmp.ne.s32.totalorder %s470, %s472
      %p476 = scmp.eq.s32.totalorder %s37, 0
      %p477 = por %p475, %p476
      %p478 = scmp.ne.s32.totalorder %s470, %s472
      %p479 = scmp.eq.s32.totalorder %s42, 1
      %p480 = por %p478, %p479
      %p481 = scmp.ne.s32.totalorder %s472, %s473
      %p482 = scmp.eq.s32.totalorder %s42, 0
      %p483 = por %p481, %p482
      %p484 = scmp.ne.s32.totalorder %s472, %s473
      %p485 = scmp.eq.s32.totalorder %s43, 1
      %p486 = por %p484, %p485
      %p488 = scmp.ne.s32.totalorder %s473, %s487
      %p489 = scmp.eq.s32.totalorder %s43, 0
      %p490 = por %p488, %p489
      %s492 = sadd.s32 %s491, 1
      %p495 = scmp.eq.s32.totalorder %s37, 1
      %p496 = scmp.ne.s32.totalorder %s491, %s493
      %p497 = scmp.eq.s32.totalorder %s37, 0
      %p498 = por %p496, %p497
      %p499 = scmp.ne.s32.totalorder %s491, %s493
      %p500 = scmp.eq.s32.totalorder %s42, 1
      %p501 = por %p499, %p500
      %p502 = scmp.ne.s32.totalorder %s493, %s494
      %p503 = scmp.eq.s32.totalorder %s42, 0
      %p504 = por %p502, %p503
      %p505 = scmp.ne.s32.totalorder %s493, %s494
      %p506 = scmp.eq.s32.totalorder %s43, 1
      %p507 = por %p505, %p506
      %p509 = scmp.ne.s32.totalorder %s494, %s508
      %p510 = scmp.eq.s32.totalorder %s43, 0
      %p511 = por %p509, %p510
      %s513 = sadd.s32 %s512, 1
      %p516 = scmp.eq.s32.totalorder %s37, 1
      %p517 = scmp.ne.s32.totalorder %s512, %s514
      %p518 = scmp.eq.s32.totalorder %s37, 0
      %p519 = por %p517, %p518
      %p520 = scmp.ne.s32.totalorder %s512, %s514
      %p521 = scmp.eq.s32.totalorder %s42, 1
      %p522 = por %p520, %p521
      %p523 = scmp.ne.s32.totalorder %s514, %s515
      %p524 = scmp.eq.s32.totalorder %s42, 0
      %p525 = por %p523, %p524
      %p526 = scmp.ne.s32.totalorder %s514, %s515
      %p527 = scmp.eq.s32.totalorder %s43, 1
      %p528 = por %p526, %p527
      %p530 = scmp.ne.s32.totalorder %s515, %s529
      %p531 = scmp.eq.s32.totalorder %s43, 0
      %p532 = por %p530, %p531
      %s534 = sadd.s32 %s533, 1
      %p537 = scmp.eq.s32.totalorder %s37, 1
      %p538 = scmp.ne.s32.totalorder %s533, %s535
      %p539 = scmp.eq.s32.totalorder %s37, 0
      %p540 = por %p538, %p539
      %p541 = scmp.ne.s32.totalorder %s533, %s535
      %p542 = scmp.eq.s32.totalorder %s42, 1
      %p543 = por %p541, %p542
      %p544 = scmp.ne.s32.totalorder %s535, %s536
      %p545 = scmp.eq.s32.totalorder %s42, 0
      %p546 = por %p544, %p545
      %p547 = scmp.ne.s32.totalorder %s535, %s536
      %p548 = scmp.eq.s32.totalorder %s43, 1
      %p549 = por %p547, %p548
      %p551 = scmp.ne.s32.totalorder %s536, %s550
      %p552 = scmp.eq.s32.totalorder %s43, 0
      %p553 = por %p551, %p552
      %s555 = sadd.s32 %s554, 1
      %p558 = scmp.eq.s32.totalorder %s37, 1
      %p559 = scmp.ne.s32.totalorder %s554, %s556
      %p560 = scmp.eq.s32.totalorder %s37, 0
      %p561 = por %p559, %p560
      %p562 = scmp.ne.s32.totalorder %s554, %s556
      %p563 = scmp.eq.s32.totalorder %s42, 1
      %p564 = por %p562, %p563
      %p565 = scmp.ne.s32.totalorder %s556, %s557
      %p566 = scmp.eq.s32.totalorder %s42, 0
      %p567 = por %p565, %p566
      %p568 = scmp.ne.s32.totalorder %s556, %s557
      %p569 = scmp.eq.s32.totalorder %s43, 1
      %p570 = por %p568, %p569
      %p572 = scmp.ne.s32.totalorder %s557, %s571
      %p573 = scmp.eq.s32.totalorder %s43, 0
      %p574 = por %p572, %p573
      %s575 = ssub.s32 %s37, %s44
      %p576 = scmp.eq.s32.totalorder %s575, 0
      %s578 = sadd.s32 %s577, 1
      %s579 = scalar_select %p576, %s577, %s578
      %p582 = pneg %p576
      %p583 = scmp.eq.s32.totalorder %s37, 1
      %p584 = por %p582, %p583
      %p585 = scmp.ne.s32.totalorder %s577, %s580
      %p586 = scmp.eq.s32.totalorder %s37, 0
      %p587 = por %p585, %p586
      %p588 = scmp.ne.s32.totalorder %s577, %s580
      %p589 = scmp.eq.s32.totalorder %s42, 1
      %p590 = por %p588, %p589
      %p591 = scmp.ne.s32.totalorder %s580, %s581
      %p592 = scmp.eq.s32.totalorder %s42, 0
      %p593 = por %p591, %p592
      %p594 = scmp.ne.s32.totalorder %s580, %s581
      %p595 = scmp.eq.s32.totalorder %s43, 1
      %p596 = por %p594, %p595
      %p598 = scmp.ne.s32.totalorder %s581, %s597
      %p599 = scmp.eq.s32.totalorder %s43, 0
      %p600 = por %p598, %p599
      %p601 = scmp.le.s32.totalorder 1, %s37
      %p602 = scmp.lt.s32.totalorder %s37, 3
      %p603 = pnand %p601, %p602
      %p604 = pneg %p603
      // Predicated region
      $region9: #{net_paper_forward.1} parent=5 // pred_check
        _
      $region10: #{net_paper_forward.1} parent=5 // pred_check_branch
        %606 = sbr.rel (%p603) target = $region12
      $region11: #{net_paper_forward.1} parent=5 // pred_region
        %s607 = ssub.s32 %s37, 1
        // Predicated region
        $region13: #{net_paper_forward.1} parent=11 // pred_check
          %p608 = pneg %p84
        $region14: #{net_paper_forward.1} parent=11 // pred_check_branch
          %610 = sbr.rel (%p608) target = $region16
        $region15: #{net_paper_forward.1} parent=11 // pred_region
          _
        $region16: #{net_paper_forward.1} parent=11 // pred_fallthru
          _
        // Predicated region
        $region17: #{net_paper_forward.1} parent=11 // pred_check
          %p611 = pneg %p105
        $region18: #{net_paper_forward.1} parent=11 // pred_check_branch
          %613 = sbr.rel (%p611) target = $region20
        $region19: #{net_paper_forward.1} parent=11 // pred_region
          _
        $region20: #{net_paper_forward.1} parent=11 // pred_fallthru
          _
        // Predicated region
        $region21: #{net_paper_forward.1} parent=11 // pred_check
          %p614 = pneg %p126
        $region22: #{net_paper_forward.1} parent=11 // pred_check_branch
          %616 = sbr.rel (%p614) target = $region24
        $region23: #{net_paper_forward.1} parent=11 // pred_region
          %s618 = ssub.s32 1536, 1536
          %619 = vsyncadd [#allocation4], %s618
          %s620 = sshll.u32 [#allocation3], 4
          %s621 = int_to_ptr.vmem [resolvable:$true] %s620
          %626 = dma.hbm_to_vmem [thread:$0]  %s3, 1536, %s621, [#allocation4], 128, 128, 8
        $region24: #{net_paper_forward.1} parent=11 // pred_fallthru
          _
        // Predicated region
        $region25: #{net_paper_forward.1} parent=11 // pred_check
          %p627 = pneg %p147
        $region26: #{net_paper_forward.1} parent=11 // pred_check_branch
          %629 = sbr.rel (%p627) target = $region28
        $region27: #{net_paper_forward.1} parent=11 // pred_region
          _
        $region28: #{net_paper_forward.1} parent=11 // pred_fallthru
          _
        // Predicated region
        $region29: #{net_paper_forward.1} parent=11 // pred_check
          %p630 = pneg %p168
        $region30: #{net_paper_forward.1} parent=11 // pred_check_branch
          %632 = sbr.rel (%p630) target = $region32
        $region31: #{net_paper_forward.1} parent=11 // pred_region
          _
        $region32: #{net_paper_forward.1} parent=11 // pred_fallthru
          _
        // Predicated region
        $region33: #{net_paper_forward.1} parent=11 // pred_check
          %p633 = pneg %p189
        $region34: #{net_paper_forward.1} parent=11 // pred_check_branch
          %635 = sbr.rel (%p633) target = $region36
        $region35: #{net_paper_forward.1} parent=11 // pred_region
          _
        $region36: #{net_paper_forward.1} parent=11 // pred_fallthru
          _
        // Predicated region
        $region37: #{net_paper_forward.1} parent=11 // pred_check
          %p636 = pneg %p210
        $region38: #{net_paper_forward.1} parent=11 // pred_check_branch
          %638 = sbr.rel (%p636) target = $region40
        $region39: #{net_paper_forward.1} parent=11 // pred_region
          %s640 = ssub.s32 3072, 3072
          %641 = vsyncadd [#allocation7], %s640
          %s642 = sshll.u32 [#allocation6], 4
          %s643 = int_to_ptr.vmem [resolvable:$true] %s642
          %648 = dma.hbm_to_vmem [thread:$0]  %s7, 3072, %s643, [#allocation7], 128, 128, 8
        $region40: #{net_paper_forward.1} parent=11 // pred_fallthru
          _
        // Predicated region
        $region41: #{net_paper_forward.1} parent=11 // pred_check
          %p649 = pneg %p231
        $region42: #{net_paper_forward.1} parent=11 // pred_check_branch
          %651 = sbr.rel (%p649) target = $region44
        $region43: #{net_paper_forward.1} parent=11 // pred_region
          _
        $region44: #{net_paper_forward.1} parent=11 // pred_fallthru
          _
        // Predicated region
        $region45: #{net_paper_forward.1} parent=11 // pred_check
          %p652 = pneg %p252
        $region46: #{net_paper_forward.1} parent=11 // pred_check_branch
          %654 = sbr.rel (%p652) target = $region48
        $region47: #{net_paper_forward.1} parent=11 // pred_region
          %s656 = ssub.s32 3072, 3072
          %657 = vsyncadd [#allocation7], %s656
          %s658 = sshll.u32 [#allocation8], 4
          %s659 = int_to_ptr.vmem [resolvable:$true] %s658
          %664 = dma.hbm_to_vmem [thread:$0]  %s9, 3072, %s659, [#allocation7], 128, 128, 8
        $region48: #{net_paper_forward.1} parent=11 // pred_fallthru
          _
        // Predicated region
        $region49: #{net_paper_forward.1} parent=11 // pred_check
          %p665 = pneg %p273
        $region50: #{net_paper_forward.1} parent=11 // pred_check_branch
          %667 = sbr.rel (%p665) target = $region52
        $region51: #{net_paper_forward.1} parent=11 // pred_region
          _
        $region52: #{net_paper_forward.1} parent=11 // pred_fallthru
          _
        // Predicated region
        $region53: #{net_paper_forward.1} parent=11 // pred_check
          %p668 = pneg %p294
        $region54: #{net_paper_forward.1} parent=11 // pred_check_branch
          %670 = sbr.rel (%p668) target = $region56
        $region55: #{net_paper_forward.1} parent=11 // pred_region
          _
        $region56: #{net_paper_forward.1} parent=11 // pred_fallthru
          _
        // Predicated region
        $region57: #{net_paper_forward.1} parent=11 // pred_check
          %p671 = pneg %p315
        $region58: #{net_paper_forward.1} parent=11 // pred_check_branch
          %673 = sbr.rel (%p671) target = $region60
        $region59: #{net_paper_forward.1} parent=11 // pred_region
          _
        $region60: #{net_paper_forward.1} parent=11 // pred_fallthru
          _
        // Predicated region
        $region61: #{net_paper_forward.1} parent=11 // pred_check
          %p674 = pneg %p336
        $region62: #{net_paper_forward.1} parent=11 // pred_check_branch
          %676 = sbr.rel (%p674) target = $region64
        $region63: #{net_paper_forward.1} parent=11 // pred_region
          _
        $region64: #{net_paper_forward.1} parent=11 // pred_fallthru
          _
        // Predicated region
        $region65: #{net_paper_forward.1} parent=11 // pred_check
          %p677 = pneg %p357
        $region66: #{net_paper_forward.1} parent=11 // pred_check_branch
          %679 = sbr.rel (%p677) target = $region68
        $region67: #{net_paper_forward.1} parent=11 // pred_region
          _
        $region68: #{net_paper_forward.1} parent=11 // pred_fallthru
          _
        // Predicated region
        $region69: #{net_paper_forward.1} parent=11 // pred_check
          %p680 = pneg %p378
        $region70: #{net_paper_forward.1} parent=11 // pred_check_branch
          %682 = sbr.rel (%p680) target = $region72
        $region71: #{net_paper_forward.1} parent=11 // pred_region
          %s684 = ssub.s32 6144, 6144
          %685 = vsyncadd [#allocation10], %s684
          %s686 = sshll.u32 [#allocation9], 4
          %s687 = int_to_ptr.vmem [resolvable:$true] %s686
          %692 = dma.hbm_to_vmem [thread:$0]  %s15, 6144, %s687, [#allocation10], 128, 128, 8
        $region72: #{net_paper_forward.1} parent=11 // pred_fallthru
          _
        // Predicated region
        $region73: #{net_paper_forward.1} parent=11 // pred_check
          %p693 = pneg %p399
        $region74: #{net_paper_forward.1} parent=11 // pred_check_branch
          %695 = sbr.rel (%p693) target = $region76
        $region75: #{net_paper_forward.1} parent=11 // pred_region
          _
        $region76: #{net_paper_forward.1} parent=11 // pred_fallthru
          _
        // Predicated region
        $region77: #{net_paper_forward.1} parent=11 // pred_check
          %p696 = pneg %p420
        $region78: #{net_paper_forward.1} parent=11 // pred_check_branch
          %698 = sbr.rel (%p696) target = $region80
        $region79: #{net_paper_forward.1} parent=11 // pred_region
          _
        $region80: #{net_paper_forward.1} parent=11 // pred_fallthru
          _
        // Predicated region
        $region81: #{net_paper_forward.1} parent=11 // pred_check
          %p699 = pneg %p441
        $region82: #{net_paper_forward.1} parent=11 // pred_check_branch
          %701 = sbr.rel (%p699) target = $region84
        $region83: #{net_paper_forward.1} parent=11 // pred_region
          _
        $region84: #{net_paper_forward.1} parent=11 // pred_fallthru
          _
        // Predicated region
        $region85: #{net_paper_forward.1} parent=11 // pred_check
          %p702 = pneg %p462
        $region86: #{net_paper_forward.1} parent=11 // pred_check_branch
          %704 = sbr.rel (%p702) target = $region88
        $region87: #{net_paper_forward.1} parent=11 // pred_region
          %s706 = ssub.s32 16384, 16384
          %707 = vsyncadd [#allocation10], %s706
          %s708 = sshll.u32 [#allocation11], 4
          %s709 = int_to_ptr.vmem [resolvable:$true] %s708
          %714 = dma.hbm_to_vmem [thread:$0]  %s19, 16384, %s709, [#allocation10], 256, 256, 16
        $region88: #{net_paper_forward.1} parent=11 // pred_fallthru
          _
        // Predicated region
        $region89: #{net_paper_forward.1} parent=11 // pred_check
          %p715 = pneg %p483
        $region90: #{net_paper_forward.1} parent=11 // pred_check_branch
          %717 = sbr.rel (%p715) target = $region92
        $region91: #{net_paper_forward.1} parent=11 // pred_region
          _
        $region92: #{net_paper_forward.1} parent=11 // pred_fallthru
          _
        // Predicated region
        $region93: #{net_paper_forward.1} parent=11 // pred_check
          %p718 = pneg %p504
        $region94: #{net_paper_forward.1} parent=11 // pred_check_branch
          %720 = sbr.rel (%p718) target = $region96
        $region95: #{net_paper_forward.1} parent=11 // pred_region
          _
        $region96: #{net_paper_forward.1} parent=11 // pred_fallthru
          _
        // Predicated region
        $region97: #{net_paper_forward.1} parent=11 // pred_check
          %p721 = pneg %p525
        $region98: #{net_paper_forward.1} parent=11 // pred_check_branch
          %723 = sbr.rel (%p721) target = $region100
        $region99: #{net_paper_forward.1} parent=11 // pred_region
          _
        $region100: #{net_paper_forward.1} parent=11 // pred_fallthru
          _
        // Predicated region
        $region101: #{net_paper_forward.1} parent=11 // pred_check
          %p724 = pneg %p546
        $region102: #{net_paper_forward.1} parent=11 // pred_check_branch
          %726 = sbr.rel (%p724) target = $region104
        $region103: #{net_paper_forward.1} parent=11 // pred_region
          _
        $region104: #{net_paper_forward.1} parent=11 // pred_fallthru
          _
        // Predicated region
        $region105: #{net_paper_forward.1} parent=11 // pred_check
          %p727 = pneg %p567
        $region106: #{net_paper_forward.1} parent=11 // pred_check_branch
          %729 = sbr.rel (%p727) target = $region108
        $region107: #{net_paper_forward.1} parent=11 // pred_region
          _
        $region108: #{net_paper_forward.1} parent=11 // pred_fallthru
          _
      $region12: #{net_paper_forward.1} parent=5 // pred_fallthru
        _
      %p730 = scmp.lt.s32.totalorder %s37, 2
      // Predicated region
      $region109: #{net_paper_forward.1} parent=5 // pred_check
        %p731 = pneg %p730
      $region110: #{net_paper_forward.1} parent=5 // pred_check_branch
        %733 = sbr.rel (%p731) target = $region112
      $region111: #{net_paper_forward.1} parent=5 // pred_region
        // Predicated region
        $region113: #{net_paper_forward.1} parent=111 // pred_check
          %p734 = pneg %p57
        $region114: #{net_paper_forward.1} parent=111 // pred_check_branch
          %736 = sbr.rel (%p734) target = $region116
        $region115: #{net_paper_forward.1} parent=111 // pred_region
          %p737 = scmp.lt.s32.totalorder %s37, 1
          %s738 = scalar_select %p737, %s37, 1
          %s739 = smul.addr %s738, 4
          %s740 = smul.addr %s739, 8
          %s741 = scalar_lea.vmem %s0, %s740
        $region116: #{net_paper_forward.1} parent=111 // pred_fallthru
          _
      $region112: #{net_paper_forward.1} parent=5 // pred_fallthru
        _
      %p742 = scmp.le.s32.totalorder 1, %s37
      %p743 = scmp.lt.s32.totalorder %s37, 3
      %p744 = pnand %p742, %p743
      %p745 = pneg %p744
      // Predicated region
      $region117: #{net_paper_forward.1} parent=5 // pred_check
        _
      $region118: #{net_paper_forward.1} parent=5 // pred_check_branch
        %747 = sbr.rel (%p744) target = $region120
      $region119: #{net_paper_forward.1} parent=5 // pred_region
        %s748 = ssub.s32 %s37, 1
        // Predicated region
        $region121: #{net_paper_forward.1} parent=119 // pred_check
          %p749 = pneg %p126
        $region122: #{net_paper_forward.1} parent=119 // pred_check_branch
          %751 = sbr.rel (%p749) target = $region124
        $region123: #{net_paper_forward.1} parent=119 // pred_region
          %752 = dma.done [#allocation4], 1536
        $region124: #{net_paper_forward.1} parent=119 // pred_fallthru
          _
        // Predicated region
        $region125: #{net_paper_forward.1} parent=119 // pred_check
          %p753 = pneg %p210
        $region126: #{net_paper_forward.1} parent=119 // pred_check_branch
          %755 = sbr.rel (%p753) target = $region128
        $region127: #{net_paper_forward.1} parent=119 // pred_region
          %756 = dma.done [#allocation7], 3072
        $region128: #{net_paper_forward.1} parent=119 // pred_fallthru
          _
        // Predicated region
        $region129: #{net_paper_forward.1} parent=119 // pred_check
          %p757 = pneg %p252
        $region130: #{net_paper_forward.1} parent=119 // pred_check_branch
          %759 = sbr.rel (%p757) target = $region132
        $region131: #{net_paper_forward.1} parent=119 // pred_region
          %760 = dma.done [#allocation7], 3072
        $region132: #{net_paper_forward.1} parent=119 // pred_fallthru
          _
        // Predicated region
        $region133: #{net_paper_forward.1} parent=119 // pred_check
          %p761 = pneg %p378
        $region134: #{net_paper_forward.1} parent=119 // pred_check_branch
          %763 = sbr.rel (%p761) target = $region136
        $region135: #{net_paper_forward.1} parent=119 // pred_region
          %764 = dma.done [#allocation10], 6144
        $region136: #{net_paper_forward.1} parent=119 // pred_fallthru
          _
        // Predicated region
        $region137: #{net_paper_forward.1} parent=119 // pred_check
          %p765 = pneg %p462
        $region138: #{net_paper_forward.1} parent=119 // pred_check_branch
          %767 = sbr.rel (%p765) target = $region140
        $region139: #{net_paper_forward.1} parent=119 // pred_region
          %768 = dma.done [#allocation10], 16384
        $region140: #{net_paper_forward.1} parent=119 // pred_fallthru
          _
        %p769 = scmp.lt.s32.totalorder %s42, 1
        %s770 = scalar_select %p769, %s42, 1
        %s771 = smul.addr %s770, 4
        %s772 = smul.addr %s771, 8
        %s773 = scalar_lea.vmem %s0, %s772
        %p774 = pneg %p63
        %p775 = pneg %p60
        %p776 = pneg %p84
        %p777 = pneg %p81
        %p778 = pneg %p105
        %p779 = pneg %p102
        %p780 = pneg %p126
        %p781 = pneg %p123
        %p782 = pneg %p147
        %p783 = pneg %p144
        %p784 = pneg %p168
        %p785 = pneg %p165
        %p786 = pneg %p189
        %p787 = pneg %p186
        %p788 = pneg %p210
        %p789 = pneg %p207
        %p790 = pneg %p231
        %p791 = pneg %p228
        %p792 = pneg %p252
        %p793 = pneg %p249
        %p794 = pneg %p273
        %p795 = pneg %p270
        %p796 = pneg %p294
        %p797 = pneg %p291
        %p798 = pneg %p315
        %p799 = pneg %p312
        %p800 = pneg %p336
        %p801 = pneg %p333
        %p802 = pneg %p357
        %p803 = pneg %p354
        %p804 = pneg %p378
        %p805 = pneg %p375
        %p806 = pneg %p399
        %p807 = pneg %p396
        %p808 = pneg %p420
        %p809 = pneg %p417
        %p810 = pneg %p441
        %p811 = pneg %p438
        %p812 = pneg %p462
        %p813 = pneg %p459
        %p814 = pneg %p483
        %p815 = pneg %p480
        %p816 = pneg %p504
        %p817 = pneg %p501
        %p818 = pneg %p525
        %p819 = pneg %p522
        %p820 = pneg %p546
        %p821 = pneg %p543
        %p822 = pneg %p567
        %p823 = pneg %p564
        %p824 = pneg %p593
        %p825 = pneg %p590
        %s826 = sand.u32 %s580, 1
        %s827 = scalar_lea.sflag [#allocation5], %s826
        %s828 = sand.u32 %s580, 1
        %s829 = scalar_lea.vmem [#allocation12], %s828
        %p830 = scmp.lt.s32.totalorder %s42, 1
        %s831 = scalar_select %p830, %s42, 1
        %s832 = smul.addr %s831, 4
        %s833 = smul.addr %s832, 8
        %s834 = scalar_lea.vmem %s0, %s833
        %v835 = vld [vmem:[%s834] sm:$0xff]
        %v836 = vld [vmem:[%s834 + $0x8] sm:$0xff]
        %v837 = vld [vmem:[%s834 + $0x10] sm:$0xff]
        %v838 = vld [vmem:[%s834 + $0x18] sm:$0xff]
        %839 = vst [vmem:[#allocation2] sm:$0xff] 0.0
        %840 = vst [vmem:[#allocation2 + $0x8] sm:$0xff] 0.0
        %841 = vst [vmem:[#allocation2 + $0x10] sm:$0xff] 0.0
        %842 = vst [vmem:[#allocation2 + $0x18] sm:$0xff] 0.0
        %843 = vst [vmem:[#allocation2 + $0x20] sm:$0xff] 0.0
        %844 = vst [vmem:[#allocation2 + $0x28] sm:$0xff] 0.0
        %vm845 = vcmask 31744
        %846 = vst.msk [vmem:[#allocation2 + $0x8] sm:$0xff] %vm845, %v835
        %847 = vst.msk [vmem:[#allocation2 + $0x10] sm:$0xff] %vm845, %v836
        %848 = vst.msk [vmem:[#allocation2 + $0x18] sm:$0xff] %vm845, %v837
        %849 = vst.msk [vmem:[#allocation2 + $0x20] sm:$0xff] %vm845, %v838
        %v850 = vld [vmem:[#allocation2 + $0x6] sm:$0xff]
        %v851 = vld [vmem:[#allocation2 + $0xe] sm:$0xff]
        %v852 = vld [vmem:[#allocation2 + $0x16] sm:$0xff]
        %v853 = vld [vmem:[#allocation2 + $0x1e] sm:$0xff]
        %v854 = vld [vmem:[%s1] sm:$0xf]
        %s855 = scalar_lea.vmem %s1, 4
        %v856 = vld [vmem:[%s855] sm:$0xf]
        %v858 = vsel %vm845, %v835, 0
        %v861 = vsel %vm845, %v836, 0
        %v864 = vsel %vm845, %v837, 0
        %v867 = vsel %vm845, %v838, 0
        %vm869 = vcmask 1043456
        %v871 = vsel %vm869, %v856, 0
        %873 = vmatprep.subr.mxu0 0.0
        %874 = vmatpush1.msra.mxu0 %v871
        %875 = vmatprep.subr.mxu0 0.0
        %876 = vmatpush1.msra.mxu0 0.0
        %877 = vmatprep.subr.mxu0 0.0
        %878 = vmatpush1.msra.mxu0 0.0
        %879 = vmatprep.subr.mxu0 0.0
        %880 = vmatpush1.msra.mxu0 0.0
        %881 = vmatprep.subr.mxu0 0.0
        %882 = vmatpush1.msra.mxu0 0.0
        %883 = vmatprep.subr.mxu0 0.0
        %884 = vmatpush1.msra.mxu0 0.0
        %885 = vmatprep.subr.mxu0 0.0
        %886 = vmatpush1.msra.mxu0 0.0
        %887 = vmatprep.subr.mxu0 0.0
        %888 = vmatpush1.msra.mxu0 0.0
        %889 = vmatprep.subr.mxu0 0.0
        %890 = vmatpush1.msra.mxu0 0.0
        %891 = vmatprep.subr.mxu0 0.0
        %892 = vmatpush1.msra.mxu0 0.0
        %893 = vmatprep.subr.mxu0 0.0
        %894 = vmatpush1.msra.mxu0 0.0
        %895 = vmatprep.subr.mxu0 0.0
        %896 = vmatpush1.msra.mxu0 0.0
        %897 = vmatprep.subr.mxu0 0.0
        %898 = vmatpush1.msra.mxu0 0.0
        %899 = vmatprep.subr.mxu0 0.0
        %900 = vmatpush1.msra.mxu0 0.0
        %901 = vmatprep.subr.mxu0 0.0
        %902 = vmatpush1.msra.mxu0 0.0
        %903 = vmatprep.subr.mxu0 0.0
        %904 = vmatpush1.msra.mxu0 0.0
        %905 = vmatprep.subr.mxu0 0.0
        %906 = vmatpush1.msra.mxu0 0.0
        %907 = vmatprep.subr.mxu0 0.0
        %908 = vmatpush1.msra.mxu0 0.0
        %909 = vmatprep.subr.mxu0 0.0
        %910 = vmatpush1.msra.mxu0 0.0
        %911 = vmatprep.subr.mxu0 0.0
        %912 = vmatpush1.msra.mxu0 0.0
        %913 = vmatprep.subr.mxu0 0.0
        %914 = vmatpush1.msra.mxu0 0.0
        %915 = vmatprep.subr.mxu0 0.0
        %916 = vmatpush1.msra.mxu0 0.0
        %917 = vmatprep.subr.mxu0 0.0
        %918 = vmatpush1.msra.mxu0 0.0
        %919 = vmatprep.subr.mxu0 0.0
        %920 = vmatpush1.msra.mxu0 0.0
        %921 = vmatprep.subr.mxu0 0.0
        %922 = vmatpush1.msra.mxu0 0.0
        %923 = vmatprep.subr.mxu0 0.0
        %924 = vmatpush1.msra.mxu0 0.0
        %925 = vmatprep.subr.mxu0 0.0
        %926 = vmatpush1.msra.mxu0 0.0
        %927 = vmatprep.subr.mxu0 0.0
        %928 = vmatpush1.msra.mxu0 0.0
        %929 = vmatprep.subr.mxu0 0.0
        %930 = vmatpush1.msra.mxu0 0.0
        %931 = vmatprep.subr.mxu0 0.0
        %932 = vmatpush1.msra.mxu0 0.0
        %933 = vmatprep.subr.mxu0 0.0
        %934 = vmatpush1.msra.mxu0 0.0
        %935 = vmatprep.subr.mxu0 0.0
        %936 = vmatpush1.msra.mxu0 0.0
        %937 = vmatprep.mubr.f32.mxu0 0.0
        %938 = vmatmul.mubr.f32.gmra.mrb[0].mxu0 %v858
        %v939 = vpop.f32.mrb[0].mxu0
        %v940 = vadd.f32 0.0, %v939
        %v941 = vpop.f32.mrb[0].mxu0
        %942 = vmatprep.mubr.f32.mxu0 0.0
        %943 = vmatmul.mubr.f32.gmra.mrb[0].mxu0 %v861
        %v944 = vpop.f32.mrb[0].mxu0
        %v945 = vadd.f32 0.0, %v944
        %v946 = vpop.f32.mrb[0].mxu0
        %947 = vmatprep.mubr.f32.mxu0 0.0
        %948 = vmatmul.mubr.f32.gmra.mrb[0].mxu0 %v864
        %v949 = vpop.f32.mrb[0].mxu0
        %v950 = vadd.f32 0.0, %v949
        %v951 = vpop.f32.mrb[0].mxu0
        %952 = vmatprep.mubr.f32.mxu0 0.0
        %953 = vmatmul.mubr.f32.gmra.mrb[0].mxu0 %v867
        %v954 = vpop.f32.mrb[0].mxu0
        %v955 = vadd.f32 0.0, %v954
        %v956 = vpop.f32.mrb[0].mxu0
        %957 = vdwg.mxu0
        %v959 = vsel %vm845, %v850, 0
        %v962 = vsel %vm845, %v851, 0
        %v965 = vsel %vm845, %v852, 0
        %v968 = vsel %vm845, %v853, 0
        %v971 = vsel %vm869, %v854, 0
        %973 = vmatprep.subr.mxu0 0.0
        %974 = vmatpush1.msra.mxu0 %v971
        %975 = vmatprep.subr.mxu0 0.0
        %976 = vmatpush1.msra.mxu0 0.0
        %977 = vmatprep.subr.mxu0 0.0
        %978 = vmatpush1.msra.mxu0 0.0
        %979 = vmatprep.subr.mxu0 0.0
        %980 = vmatpush1.msra.mxu0 0.0
        %981 = vmatprep.subr.mxu0 0.0
        %982 = vmatpush1.msra.mxu0 0.0
        %983 = vmatprep.subr.mxu0 0.0
        %984 = vmatpush1.msra.mxu0 0.0
        %985 = vmatprep.subr.mxu0 0.0
        %986 = vmatpush1.msra.mxu0 0.0
        %987 = vmatprep.subr.mxu0 0.0
        %988 = vmatpush1.msra.mxu0 0.0
        %989 = vmatprep.subr.mxu0 0.0
        %990 = vmatpush1.msra.mxu0 0.0
        %991 = vmatprep.subr.mxu0 0.0
        %992 = vmatpush1.msra.mxu0 0.0
        %993 = vmatprep.subr.mxu0 0.0
        %994 = vmatpush1.msra.mxu0 0.0
        %995 = vmatprep.subr.mxu0 0.0
        %996 = vmatpush1.msra.mxu0 0.0
        %997 = vmatprep.subr.mxu0 0.0
        %998 = vmatpush1.msra.mxu0 0.0
        %999 = vmatprep.subr.mxu0 0.0
        %1000 = vmatpush1.msra.mxu0 0.0
        %1001 = vmatprep.subr.mxu0 0.0
        %1002 = vmatpush1.msra.mxu0 0.0
        %1003 = vmatprep.subr.mxu0 0.0
        %1004 = vmatpush1.msra.mxu0 0.0
        %1005 = vmatprep.subr.mxu0 0.0
        %1006 = vmatpush1.msra.mxu0 0.0
        %1007 = vmatprep.subr.mxu0 0.0
        %1008 = vmatpush1.msra.mxu0 0.0
        %1009 = vmatprep.subr.mxu0 0.0
        %1010 = vmatpush1.msra.mxu0 0.0
        %1011 = vmatprep.subr.mxu0 0.0
        %1012 = vmatpush1.msra.mxu0 0.0
        %1013 = vmatprep.subr.mxu0 0.0
        %1014 = vmatpush1.msra.mxu0 0.0
        %1015 = vmatprep.subr.mxu0 0.0
        %1016 = vmatpush1.msra.mxu0 0.0
        %1017 = vmatprep.subr.mxu0 0.0
        %1018 = vmatpush1.msra.mxu0 0.0
        %1019 = vmatprep.subr.mxu0 0.0
        %1020 = vmatpush1.msra.mxu0 0.0
        %1021 = vmatprep.subr.mxu0 0.0
        %1022 = vmatpush1.msra.mxu0 0.0
        %1023 = vmatprep.subr.mxu0 0.0
        %1024 = vmatpush1.msra.mxu0 0.0
        %1025 = vmatprep.subr.mxu0 0.0
        %1026 = vmatpush1.msra.mxu0 0.0
        %1027 = vmatprep.subr.mxu0 0.0
        %1028 = vmatpush1.msra.mxu0 0.0
        %1029 = vmatprep.subr.mxu0 0.0
        %1030 = vmatpush1.msra.mxu0 0.0
        %1031 = vmatprep.subr.mxu0 0.0
        %1032 = vmatpush1.msra.mxu0 0.0
        %1033 = vmatprep.subr.mxu0 0.0
        %1034 = vmatpush1.msra.mxu0 0.0
        %1035 = vmatprep.subr.mxu0 0.0
        %1036 = vmatpush1.msra.mxu0 0.0
        %1037 = vmatprep.mubr.f32.mxu0 0.0
        %1038 = vmatmul.mubr.f32.gmra.mrb[0].mxu0 %v959
        %v1039 = vpop.f32.mrb[0].mxu0
        %v1040 = vadd.f32 %v940, %v1039
        %v1041 = vpop.f32.mrb[0].mxu0
        %1042 = vmatprep.mubr.f32.mxu0 0.0
        %1043 = vmatmul.mubr.f32.gmra.mrb[0].mxu0 %v962
        %v1044 = vpop.f32.mrb[0].mxu0
        %v1045 = vadd.f32 %v945, %v1044
        %v1046 = vpop.f32.mrb[0].mxu0
        %1047 = vmatprep.mubr.f32.mxu0 0.0
        %1048 = vmatmul.mubr.f32.gmra.mrb[0].mxu0 %v965
        %v1049 = vpop.f32.mrb[0].mxu0
        %v1050 = vadd.f32 %v950, %v1049
        %v1051 = vpop.f32.mrb[0].mxu0
        %1052 = vmatprep.mubr.f32.mxu0 0.0
        %1053 = vmatmul.mubr.f32.gmra.mrb[0].mxu0 %v968
        %v1054 = vpop.f32.mrb[0].mxu0
        %v1055 = vadd.f32 %v955, %v1054
        %v1056 = vpop.f32.mrb[0].mxu0
        %1057 = vdwg.mxu0
        %v1058 = vld [vmem:[#allocation2 + $0xa] sm:$0xff]
        %v1059 = vld [vmem:[#allocation2 + $0x12] sm:$0xff]
        %v1060 = vld [vmem:[#allocation2 + $0x1a] sm:$0xff]
        %v1061 = vld [vmem:[#allocation2 + $0x22] sm:$0xff]
        %s1062 = scalar_lea.vmem %s1, 8
        %v1063 = vld [vmem:[%s1062] sm:$0xf]
        %v1065 = vsel %vm845, %v1058, 0
        %v1068 = vsel %vm845, %v1059, 0
        %v1071 = vsel %vm845, %v1060, 0
        %v1074 = vsel %vm845, %v1061, 0
        %v1077 = vsel %vm869, %v1063, 0
        %1079 = vmatprep.subr.mxu0 0.0
        %1080 = vmatpush1.msra.mxu0 %v1077
        %1081 = vmatprep.subr.mxu0 0.0
        %1082 = vmatpush1.msra.mxu0 0.0
        %1083 = vmatprep.subr.mxu0 0.0
        %1084 = vmatpush1.msra.mxu0 0.0
        %1085 = vmatprep.subr.mxu0 0.0
        %1086 = vmatpush1.msra.mxu0 0.0
        %1087 = vmatprep.subr.mxu0 0.0
        %1088 = vmatpush1.msra.mxu0 0.0
        %1089 = vmatprep.subr.mxu0 0.0
        %1090 = vmatpush1.msra.mxu0 0.0
        %1091 = vmatprep.subr.mxu0 0.0
        %1092 = vmatpush1.msra.mxu0 0.0
        %1093 = vmatprep.subr.mxu0 0.0
        %1094 = vmatpush1.msra.mxu0 0.0
        %1095 = vmatprep.subr.mxu0 0.0
        %1096 = vmatpush1.msra.mxu0 0.0
        %1097 = vmatprep.subr.mxu0 0.0
        %1098 = vmatpush1.msra.mxu0 0.0
        %1099 = vmatprep.subr.mxu0 0.0
        %1100 = vmatpush1.msra.mxu0 0.0
        %1101 = vmatprep.subr.mxu0 0.0
        %1102 = vmatpush1.msra.mxu0 0.0
        %1103 = vmatprep.subr.mxu0 0.0
        %1104 = vmatpush1.msra.mxu0 0.0
        %1105 = vmatprep.subr.mxu0 0.0
        %1106 = vmatpush1.msra.mxu0 0.0
        %1107 = vmatprep.subr.mxu0 0.0
        %1108 = vmatpush1.msra.mxu0 0.0
        %1109 = vmatprep.subr.mxu0 0.0
        %1110 = vmatpush1.msra.mxu0 0.0
        %1111 = vmatprep.subr.mxu0 0.0
        %1112 = vmatpush1.msra.mxu0 0.0
        %1113 = vmatprep.subr.mxu0 0.0
        %1114 = vmatpush1.msra.mxu0 0.0
        %1115 = vmatprep.subr.mxu0 0.0
        %1116 = vmatpush1.msra.mxu0 0.0
        %1117 = vmatprep.subr.mxu0 0.0
        %1118 = vmatpush1.msra.mxu0 0.0
        %1119 = vmatprep.subr.mxu0 0.0
        %1120 = vmatpush1.msra.mxu0 0.0
        %1121 = vmatprep.subr.mxu0 0.0
        %1122 = vmatpush1.msra.mxu0 0.0
        %1123 = vmatprep.subr.mxu0 0.0
        %1124 = vmatpush1.msra.mxu0 0.0
        %1125 = vmatprep.subr.mxu0 0.0
        %1126 = vmatpush1.msra.mxu0 0.0
        %1127 = vmatprep.subr.mxu0 0.0
        %1128 = vmatpush1.msra.mxu0 0.0
        %1129 = vmatprep.subr.mxu0 0.0
        %1130 = vmatpush1.msra.mxu0 0.0
        %1131 = vmatprep.subr.mxu0 0.0
        %1132 = vmatpush1.msra.mxu0 0.0
        %1133 = vmatprep.subr.mxu0 0.0
        %1134 = vmatpush1.msra.mxu0 0.0
        %1135 = vmatprep.subr.mxu0 0.0
        %1136 = vmatpush1.msra.mxu0 0.0
        %1137 = vmatprep.subr.mxu0 0.0
        %1138 = vmatpush1.msra.mxu0 0.0
        %1139 = vmatprep.subr.mxu0 0.0
        %1140 = vmatpush1.msra.mxu0 0.0
        %1141 = vmatprep.subr.mxu0 0.0
        %1142 = vmatpush1.msra.mxu0 0.0
        %1143 = vmatprep.mubr.f32.mxu0 0.0
        %1144 = vmatmul.mubr.f32.gmra.mrb[0].mxu0 %v1065
        %v1145 = vpop.f32.mrb[0].mxu0
        %v1146 = vadd.f32 0.0, %v1145
        %v1147 = vpop.f32.mrb[0].mxu0
        %1148 = vmatprep.mubr.f32.mxu0 0.0
        %1149 = vmatmul.mubr.f32.gmra.mrb[0].mxu0 %v1068
        %v1150 = vpop.f32.mrb[0].mxu0
        %v1151 = vadd.f32 0.0, %v1150
        %v1152 = vpop.f32.mrb[0].mxu0
        %1153 = vmatprep.mubr.f32.mxu0 0.0
        %1154 = vmatmul.mubr.f32.gmra.mrb[0].mxu0 %v1071
        %v1155 = vpop.f32.mrb[0].mxu0
        %v1156 = vadd.f32 0.0, %v1155
        %v1157 = vpop.f32.mrb[0].mxu0
        %1158 = vmatprep.mubr.f32.mxu0 0.0
        %1159 = vmatmul.mubr.f32.gmra.mrb[0].mxu0 %v1074
        %v1160 = vpop.f32.mrb[0].mxu0
        %v1161 = vadd.f32 0.0, %v1160
        %v1162 = vpop.f32.mrb[0].mxu0
        %1163 = vdwg.mxu0
        %v1164 = vadd.f32 %v1040, %v1146
        %v1165 = vadd.f32 %v1045, %v1151
        %v1166 = vadd.f32 %v1050, %v1156
        %v1167 = vadd.f32 %v1055, %v1161
        %v1168 = vld [vmem:[%s2] sm:$0x1]
        %v1170 = vlaneseq
        %v1171 = vshrl.u32 %v1170, 7
        %v1172 = vsub.s32 0, %v1171
        %v1173 = vrot.slane %v1168, %v1172
        %v1175 = vadd.f32 %v1164, %v1173
        %v1176 = vadd.f32 %v1165, %v1173
        %v1177 = vadd.f32 %v1166, %v1173
        %v1178 = vadd.f32 %v1167, %v1173
        %v1179 = vmax.f32 %v1175, 0.0
        %v1180 = vmax.f32 %v1176, 0.0
        %v1181 = vmax.f32 %v1177, 0.0
        %v1182 = vmax.f32 %v1178, 0.0
        %1183 = vst [vmem:[#allocation2] sm:$0xff] 0.0
        %1184 = vst [vmem:[#allocation2 + $0x8] sm:$0xff] 0.0
        %1185 = vst [vmem:[#allocation2 + $0x10] sm:$0xff] 0.0
        %1186 = vst [vmem:[#allocation2 + $0x18] sm:$0xff] 0.0
        %1187 = vst [vmem:[#allocation2 + $0x20] sm:$0xff] 0.0
        %1188 = vst [vmem:[#allocation2 + $0x28] sm:$0xff] 0.0
        %vm1189 = vcmask 261120
        %1190 = vst.msk [vmem:[#allocation2 + $0x8] sm:$0xff] %vm1189, %v1179
        %1191 = vst.msk [vmem:[#allocation2 + $0x10] sm:$0xff] %vm1189, %v1180
        %1192 = vst.msk [vmem:[#allocation2 + $0x18] sm:$0xff] %vm1189, %v1181
        %1193 = vst.msk [vmem:[#allocation2 + $0x20] sm:$0xff] %vm1189, %v1182
        %v1194 = vld [vmem:[#allocation2 + $0x6] sm:$0xff]
        %v1195 = vld [vmem:[#allocation2 + $0xe] sm:$0xff]
        %v1196 = vld [vmem:[#allocation2 + $0x16] sm:$0xff]
        %v1197 = vld [vmem:[#allocation2 + $0x1e] sm:$0xff]
        %v1198 = vld [vmem:[#allocation3] sm:$0xff]
        %v1199 = vld [vmem:[#allocation3 + $0x8] sm:$0xff]
        %v1200 = vld [vmem:[#allocation3 + $0x10] sm:$0xff]
        %v1201 = vld [vmem:[#allocation3 + $0x18] sm:$0xff]
        %s1202 = scalar_lea.vmem [#allocation3], 32
        %v1203 = vld [vmem:[%s1202] sm:$0xff]
        %v1204 = vld [vmem:[%s1202 + $0x8] sm:$0xff]
        %v1205 = vld [vmem:[%s1202 + $0x10] sm:$0xff]
        %v1206 = vld [vmem:[%s1202 + $0x18] sm:$0xff]
        %v1208 = vsel %vm1189, %v1179, 0
        %v1211 = vsel %vm1189, %v1180, 0
        %v1214 = vsel %vm1189, %v1181, 0
        %v1217 = vsel %vm1189, %v1182, 0
        %1219 = vmatprep.subr.mxu0 0.0
        %1220 = vmatpush1.msra.mxu0 %v1203
        %1221 = vmatprep.subr.mxu0 0.0
        %1222 = vmatpush1.msra.mxu0 %v1204
        %1223 = vmatprep.subr.mxu0 0.0
        %1224 = vmatpush1.msra.mxu0 %v1205
        %1225 = vmatprep.subr.mxu0 0.0
        %1226 = vmatpush1.msra.mxu0 %v1206
        %1227 = vmatprep.subr.mxu0 0.0
        %1228 = vmatpush1.msra.mxu0 0.0
        %1229 = vmatprep.subr.mxu0 0.0
        %1230 = vmatpush1.msra.mxu0 0.0
        %1231 = vmatprep.subr.mxu0 0.0
        %1232 = vmatpush1.msra.mxu0 0.0
        %1233 = vmatprep.subr.mxu0 0.0
        %1234 = vmatpush1.msra.mxu0 0.0
        %1235 = vmatprep.subr.mxu0 0.0
        %1236 = vmatpush1.msra.mxu0 0.0
        %1237 = vmatprep.subr.mxu0 0.0
        %1238 = vmatpush1.msra.mxu0 0.0
        %1239 = vmatprep.subr.mxu0 0.0
        %1240 = vmatpush1.msra.mxu0 0.0
        %1241 = vmatprep.subr.mxu0 0.0
        %1242 = vmatpush1.msra.mxu0 0.0
        %1243 = vmatprep.subr.mxu0 0.0
        %1244 = vmatpush1.msra.mxu0 0.0
        %1245 = vmatprep.subr.mxu0 0.0
        %1246 = vmatpush1.msra.mxu0 0.0
        %1247 = vmatprep.subr.mxu0 0.0
        %1248 = vmatpush1.msra.mxu0 0.0
        %1249 = vmatprep.subr.mxu0 0.0
        %1250 = vmatpush1.msra.mxu0 0.0
        %1251 = vmatprep.subr.mxu0 0.0
        %1252 = vmatpush1.msra.mxu0 0.0
        %1253 = vmatprep.subr.mxu0 0.0
        %1254 = vmatpush1.msra.mxu0 0.0
        %1255 = vmatprep.subr.mxu0 0.0
        %1256 = vmatpush1.msra.mxu0 0.0
        %1257 = vmatprep.subr.mxu0 0.0
        %1258 = vmatpush1.msra.mxu0 0.0
        %1259 = vmatprep.subr.mxu0 0.0
        %1260 = vmatpush1.msra.mxu0 0.0
        %1261 = vmatprep.subr.mxu0 0.0
        %1262 = vmatpush1.msra.mxu0 0.0
        %1263 = vmatprep.subr.mxu0 0.0
        %1264 = vmatpush1.msra.mxu0 0.0
        %1265 = vmatprep.subr.mxu0 0.0
        %1266 = vmatpush1.msra.mxu0 0.0
        %1267 = vmatprep.subr.mxu0 0.0
        %1268 = vmatpush1.msra.mxu0 0.0
        %1269 = vmatprep.subr.mxu0 0.0
        %1270 = vmatpush1.msra.mxu0 0.0
        %1271 = vmatprep.subr.mxu0 0.0
        %1272 = vmatpush1.msra.mxu0 0.0
        %1273 = vmatprep.subr.mxu0 0.0
        %1274 = vmatpush1.msra.mxu0 0.0
        %1275 = vmatprep.subr.mxu0 0.0
        %1276 = vmatpush1.msra.mxu0 0.0
        %1277 = vmatprep.subr.mxu0 0.0
        %1278 = vmatpush1.msra.mxu0 0.0
        %1279 = vmatprep.subr.mxu0 0.0
        %1280 = vmatpush1.msra.mxu0 0.0
        %1281 = vmatprep.subr.mxu0 0.0
        %1282 = vmatpush1.msra.mxu0 0.0
        %1283 = vmatprep.mubr.f32.mxu0 0.0
        %1284 = vmatmul.mubr.f32.gmra.mrb[0].mxu0 %v1208
        %v1285 = vpop.f32.mrb[0].mxu0
        %v1286 = vadd.f32 0.0, %v1285
        %v1287 = vpop.f32.mrb[0].mxu0
        %1288 = vmatprep.mubr.f32.mxu0 0.0
        %1289 = vmatmul.mubr.f32.gmra.mrb[0].mxu0 %v1211
        %v1290 = vpop.f32.mrb[0].mxu0
        %v1291 = vadd.f32 0.0, %v1290
        %v1292 = vpop.f32.mrb[0].mxu0
        %1293 = vmatprep.mubr.f32.mxu0 0.0
        %1294 = vmatmul.mubr.f32.gmra.mrb[0].mxu0 %v1214
        %v1295 = vpop.f32.mrb[0].mxu0
        %v1296 = vadd.f32 0.0, %v1295
        %v1297 = vpop.f32.mrb[0].mxu0
        %1298 = vmatprep.mubr.f32.mxu0 0.0
        %1299 = vmatmul.mubr.f32.gmra.mrb[0].mxu0 %v1217
        %v1300 = vpop.f32.mrb[0].mxu0
        %v1301 = vadd.f32 0.0, %v1300
        %v1302 = vpop.f32.mrb[0].mxu0
        %1303 = vdwg.mxu0
        %v1305 = vsel %vm1189, %v1194, 0
        %v1308 = vsel %vm1189, %v1195, 0
        %v1311 = vsel %vm1189, %v1196, 0
        %v1314 = vsel %vm1189, %v1197, 0
        %1316 = vmatprep.subr.mxu0 0.0
        %1317 = vmatpush1.msra.mxu0 %v1198
        %1318 = vmatprep.subr.mxu0 0.0
        %1319 = vmatpush1.msra.mxu0 %v1199
        %1320 = vmatprep.subr.mxu0 0.0
        %1321 = vmatpush1.msra.mxu0 %v1200
        %1322 = vmatprep.subr.mxu0 0.0
        %1323 = vmatpush1.msra.mxu0 %v1201
        %1324 = vmatprep.subr.mxu0 0.0
        %1325 = vmatpush1.msra.mxu0 0.0
        %1326 = vmatprep.subr.mxu0 0.0
        %1327 = vmatpush1.msra.mxu0 0.0
        %1328 = vmatprep.subr.mxu0 0.0
        %1329 = vmatpush1.msra.mxu0 0.0
        %1330 = vmatprep.subr.mxu0 0.0
        %1331 = vmatpush1.msra.mxu0 0.0
        %1332 = vmatprep.subr.mxu0 0.0
        %1333 = vmatpush1.msra.mxu0 0.0
        %1334 = vmatprep.subr.mxu0 0.0
        %1335 = vmatpush1.msra.mxu0 0.0
        %1336 = vmatprep.subr.mxu0 0.0
        %1337 = vmatpush1.msra.mxu0 0.0
        %1338 = vmatprep.subr.mxu0 0.0
        %1339 = vmatpush1.msra.mxu0 0.0
        %1340 = vmatprep.subr.mxu0 0.0
        %1341 = vmatpush1.msra.mxu0 0.0
        %1342 = vmatprep.subr.mxu0 0.0
        %1343 = vmatpush1.msra.mxu0 0.0
        %1344 = vmatprep.subr.mxu0 0.0
        %1345 = vmatpush1.msra.mxu0 0.0
        %1346 = vmatprep.subr.mxu0 0.0
        %1347 = vmatpush1.msra.mxu0 0.0
        %1348 = vmatprep.subr.mxu0 0.0
        %1349 = vmatpush1.msra.mxu0 0.0
        %1350 = vmatprep.subr.mxu0 0.0
        %1351 = vmatpush1.msra.mxu0 0.0
        %1352 = vmatprep.subr.mxu0 0.0
        %1353 = vmatpush1.msra.mxu0 0.0
        %1354 = vmatprep.subr.mxu0 0.0
        %1355 = vmatpush1.msra.mxu0 0.0
        %1356 = vmatprep.subr.mxu0 0.0
        %1357 = vmatpush1.msra.mxu0 0.0
        %1358 = vmatprep.subr.mxu0 0.0
        %1359 = vmatpush1.msra.mxu0 0.0
        %1360 = vmatprep.subr.mxu0 0.0
        %1361 = vmatpush1.msra.mxu0 0.0
        %1362 = vmatprep.subr.mxu0 0.0
        %1363 = vmatpush1.msra.mxu0 0.0
        %1364 = vmatprep.subr.mxu0 0.0
        %1365 = vmatpush1.msra.mxu0 0.0
        %1366 = vmatprep.subr.mxu0 0.0
        %1367 = vmatpush1.msra.mxu0 0.0
        %1368 = vmatprep.subr.mxu0 0.0
        %1369 = vmatpush1.msra.mxu0 0.0
        %1370 = vmatprep.subr.mxu0 0.0
        %1371 = vmatpush1.msra.mxu0 0.0
        %1372 = vmatprep.subr.mxu0 0.0
        %1373 = vmatpush1.msra.mxu0 0.0
        %1374 = vmatprep.subr.mxu0 0.0
        %1375 = vmatpush1.msra.mxu0 0.0
        %1376 = vmatprep.subr.mxu0 0.0
        %1377 = vmatpush1.msra.mxu0 0.0
        %1378 = vmatprep.subr.mxu0 0.0
        %1379 = vmatpush1.msra.mxu0 0.0
        %1380 = vmatprep.mubr.f32.mxu0 0.0
        %1381 = vmatmul.mubr.f32.gmra.mrb[0].mxu0 %v1305
        %v1382 = vpop.f32.mrb[0].mxu0
        %v1383 = vadd.f32 %v1286, %v1382
        %v1384 = vpop.f32.mrb[0].mxu0
        %1385 = vmatprep.mubr.f32.mxu0 0.0
        %1386 = vmatmul.mubr.f32.gmra.mrb[0].mxu0 %v1308
        %v1387 = vpop.f32.mrb[0].mxu0
        %v1388 = vadd.f32 %v1291, %v1387
        %v1389 = vpop.f32.mrb[0].mxu0
        %1390 = vmatprep.mubr.f32.mxu0 0.0
        %1391 = vmatmul.mubr.f32.gmra.mrb[0].mxu0 %v1311
        %v1392 = vpop.f32.mrb[0].mxu0
        %v1393 = vadd.f32 %v1296, %v1392
        %v1394 = vpop.f32.mrb[0].mxu0
        %1395 = vmatprep.mubr.f32.mxu0 0.0
        %1396 = vmatmul.mubr.f32.gmra.mrb[0].mxu0 %v1314
        %v1397 = vpop.f32.mrb[0].mxu0
        %v1398 = vadd.f32 %v1301, %v1397
        %v1399 = vpop.f32.mrb[0].mxu0
        %1400 = vdwg.mxu0
        %v1401 = vld [vmem:[#allocation2 + $0xa] sm:$0xff]
        %v1402 = vld [vmem:[#allocation2 + $0x12] sm:$0xff]
        %v1403 = vld [vmem:[#allocation2 + $0x1a] sm:$0xff]
        %v1404 = vld [vmem:[#allocation2 + $0x22] sm:$0xff]
        %s1405 = scalar_lea.vmem [#allocation3], 64
        %v1406 = vld [vmem:[%s1405] sm:$0xff]
        %v1407 = vld [vmem:[%s1405 + $0x8] sm:$0xff]
        %v1408 = vld [vmem:[%s1405 + $0x10] sm:$0xff]
        %v1409 = vld [vmem:[%s1405 + $0x18] sm:$0xff]
        %v1411 = vsel %vm1189, %v1401, 0
        %v1414 = vsel %vm1189, %v1402, 0
        %v1417 = vsel %vm1189, %v1403, 0
        %v1420 = vsel %vm1189, %v1404, 0
        %1422 = vmatprep.subr.mxu0 0.0
        %1423 = vmatpush1.msra.mxu0 %v1406
        %1424 = vmatprep.subr.mxu0 0.0
        %1425 = vmatpush1.msra.mxu0 %v1407
        %1426 = vmatprep.subr.mxu0 0.0
        %1427 = vmatpush1.msra.mxu0 %v1408
        %1428 = vmatprep.subr.mxu0 0.0
        %1429 = vmatpush1.msra.mxu0 %v1409
        %1430 = vmatprep.subr.mxu0 0.0
        %1431 = vmatpush1.msra.mxu0 0.0
        %1432 = vmatprep.subr.mxu0 0.0
        %1433 = vmatpush1.msra.mxu0 0.0
        %1434 = vmatprep.subr.mxu0 0.0
        %1435 = vmatpush1.msra.mxu0 0.0
        %1436 = vmatprep.subr.mxu0 0.0
        %1437 = vmatpush1.msra.mxu0 0.0
        %1438 = vmatprep.subr.mxu0 0.0
        %1439 = vmatpush1.msra.mxu0 0.0
        %1440 = vmatprep.subr.mxu0 0.0
        %1441 = vmatpush1.msra.mxu0 0.0
        %1442 = vmatprep.subr.mxu0 0.0
        %1443 = vmatpush1.msra.mxu0 0.0
        %1444 = vmatprep.subr.mxu0 0.0
        %1445 = vmatpush1.msra.mxu0 0.0
        %1446 = vmatprep.subr.mxu0 0.0
        %1447 = vmatpush1.msra.mxu0 0.0
        %1448 = vmatprep.subr.mxu0 0.0
        %1449 = vmatpush1.msra.mxu0 0.0
        %1450 = vmatprep.subr.mxu0 0.0
        %1451 = vmatpush1.msra.mxu0 0.0
        %1452 = vmatprep.subr.mxu0 0.0
        %1453 = vmatpush1.msra.mxu0 0.0
        %1454 = vmatprep.subr.mxu0 0.0
        %1455 = vmatpush1.msra.mxu0 0.0
        %1456 = vmatprep.subr.mxu0 0.0
        %1457 = vmatpush1.msra.mxu0 0.0
        %1458 = vmatprep.subr.mxu0 0.0
        %1459 = vmatpush1.msra.mxu0 0.0
        %1460 = vmatprep.subr.mxu0 0.0
        %1461 = vmatpush1.msra.mxu0 0.0
        %1462 = vmatprep.subr.mxu0 0.0
        %1463 = vmatpush1.msra.mxu0 0.0
        %1464 = vmatprep.subr.mxu0 0.0
        %1465 = vmatpush1.msra.mxu0 0.0
        %1466 = vmatprep.subr.mxu0 0.0
        %1467 = vmatpush1.msra.mxu0 0.0
        %1468 = vmatprep.subr.mxu0 0.0
        %1469 = vmatpush1.msra.mxu0 0.0
        %1470 = vmatprep.subr.mxu0 0.0
        %1471 = vmatpush1.msra.mxu0 0.0
        %1472 = vmatprep.subr.mxu0 0.0
        %1473 = vmatpush1.msra.mxu0 0.0
        %1474 = vmatprep.subr.mxu0 0.0
        %1475 = vmatpush1.msra.mxu0 0.0
        %1476 = vmatprep.subr.mxu0 0.0
        %1477 = vmatpush1.msra.mxu0 0.0
        %1478 = vmatprep.subr.mxu0 0.0
        %1479 = vmatpush1.msra.mxu0 0.0
        %1480 = vmatprep.subr.mxu0 0.0
        %1481 = vmatpush1.msra.mxu0 0.0
        %1482 = vmatprep.subr.mxu0 0.0
        %1483 = vmatpush1.msra.mxu0 0.0
        %1484 = vmatprep.subr.mxu0 0.0
        %1485 = vmatpush1.msra.mxu0 0.0
        %1486 = vmatprep.mubr.f32.mxu0 0.0
        %1487 = vmatmul.mubr.f32.gmra.mrb[0].mxu0 %v1411
        %v1488 = vpop.f32.mrb[0].mxu0
        %v1489 = vadd.f32 0.0, %v1488
        %v1490 = vpop.f32.mrb[0].mxu0
        %1491 = vmatprep.mubr.f32.mxu0 0.0
        %1492 = vmatmul.mubr.f32.gmra.mrb[0].mxu0 %v1414
        %v1493 = vpop.f32.mrb[0].mxu0
        %v1494 = vadd.f32 0.0, %v1493
        %v1495 = vpop.f32.mrb[0].mxu0
        %1496 = vmatprep.mubr.f32.mxu0 0.0
        %1497 = vmatmul.mubr.f32.gmra.mrb[0].mxu0 %v1417
        %v1498 = vpop.f32.mrb[0].mxu0
        %v1499 = vadd.f32 0.0, %v1498
        %v1500 = vpop.f32.mrb[0].mxu0
        %1501 = vmatprep.mubr.f32.mxu0 0.0
        %1502 = vmatmul.mubr.f32.gmra.mrb[0].mxu0 %v1420
        %v1503 = vpop.f32.mrb[0].mxu0
        %v1504 = vadd.f32 0.0, %v1503
        %v1505 = vpop.f32.mrb[0].mxu0
        %1506 = vdwg.mxu0
        %v1507 = vadd.f32 %v1383, %v1489
        %v1508 = vadd.f32 %v1388, %v1494
        %v1509 = vadd.f32 %v1393, %v1499
        %v1510 = vadd.f32 %v1398, %v1504
        %v1511 = vld [vmem:[%s4] sm:$0x1]
        %v1513 = vlaneseq
        %v1514 = vshrl.u32 %v1513, 7
        %v1515 = vsub.s32 0, %v1514
        %v1516 = vrot.slane %v1511, %v1515
        %v1518 = vadd.f32 %v1507, %v1516
        %v1519 = vadd.f32 %v1508, %v1516
        %v1520 = vadd.f32 %v1509, %v1516
        %v1521 = vadd.f32 %v1510, %v1516
        %v1522 = vld [vmem:[%s6] sm:$0xff]
        %v1523 = vld [vmem:[%s6 + $0x8] sm:$0xff]
        %v1524 = vld [vmem:[%s5] sm:$0x1]
        %v1526 = vlaneseq
        %v1527 = vshrl.u32 %v1526, 7
        %v1528 = vsub.s32 0, %v1527
        %v1529 = vrot.slane %v1524, %v1528
        %v1532 = vsel %vm1189, %v1522, 0
        %v1535 = vsel %vm1189, %v1523, 0
        %1537 = vmatprep.subr.mxu0 0.0
        %1538 = vmatpush1.msra.mxu0 %v1518
        %1539 = vmatprep.subr.mxu0 0.0
        %1540 = vmatpush1.msra.mxu0 %v1519
        %1541 = vmatprep.subr.mxu0 0.0
        %1542 = vmatpush1.msra.mxu0 %v1520
        %1543 = vmatprep.subr.mxu0 0.0
        %1544 = vmatpush1.msra.mxu0 %v1521
        %1545 = vmatprep.subr.mxu0 0.0
        %1546 = vmatpush1.msra.mxu0 0.0
        %1547 = vmatprep.subr.mxu0 0.0
        %1548 = vmatpush1.msra.mxu0 0.0
        %1549 = vmatprep.subr.mxu0 0.0
        %1550 = vmatpush1.msra.mxu0 0.0
        %1551 = vmatprep.subr.mxu0 0.0
        %1552 = vmatpush1.msra.mxu0 0.0
        %1553 = vmatprep.subr.mxu0 0.0
        %1554 = vmatpush1.msra.mxu0 0.0
        %1555 = vmatprep.subr.mxu0 0.0
        %1556 = vmatpush1.msra.mxu0 0.0
        %1557 = vmatprep.subr.mxu0 0.0
        %1558 = vmatpush1.msra.mxu0 0.0
        %1559 = vmatprep.subr.mxu0 0.0
        %1560 = vmatpush1.msra.mxu0 0.0
        %1561 = vmatprep.subr.mxu0 0.0
        %1562 = vmatpush1.msra.mxu0 0.0
        %1563 = vmatprep.subr.mxu0 0.0
        %1564 = vmatpush1.msra.mxu0 0.0
        %1565 = vmatprep.subr.mxu0 0.0
        %1566 = vmatpush1.msra.mxu0 0.0
        %1567 = vmatprep.subr.mxu0 0.0
        %1568 = vmatpush1.msra.mxu0 0.0
        %1569 = vmatprep.subr.mxu0 0.0
        %1570 = vmatpush1.msra.mxu0 0.0
        %1571 = vmatprep.subr.mxu0 0.0
        %1572 = vmatpush1.msra.mxu0 0.0
        %1573 = vmatprep.subr.mxu0 0.0
        %1574 = vmatpush1.msra.mxu0 0.0
        %1575 = vmatprep.subr.mxu0 0.0
        %1576 = vmatpush1.msra.mxu0 0.0
        %1577 = vmatprep.subr.mxu0 0.0
        %1578 = vmatpush1.msra.mxu0 0.0
        %1579 = vmatprep.subr.mxu0 0.0
        %1580 = vmatpush1.msra.mxu0 0.0
        %1581 = vmatprep.subr.mxu0 0.0
        %1582 = vmatpush1.msra.mxu0 0.0
        %1583 = vmatprep.subr.mxu0 0.0
        %1584 = vmatpush1.msra.mxu0 0.0
        %1585 = vmatprep.subr.mxu0 0.0
        %1586 = vmatpush1.msra.mxu0 0.0
        %1587 = vmatprep.subr.mxu0 0.0
        %1588 = vmatpush1.msra.mxu0 0.0
        %1589 = vmatprep.subr.mxu0 0.0
        %1590 = vmatpush1.msra.mxu0 0.0
        %1591 = vmatprep.subr.mxu0 0.0
        %1592 = vmatpush1.msra.mxu0 0.0
        %1593 = vmatprep.subr.mxu0 0.0
        %1594 = vmatpush1.msra.mxu0 0.0
        %1595 = vmatprep.subr.mxu0 0.0
        %1596 = vmatpush1.msra.mxu0 0.0
        %1597 = vmatprep.subr.mxu0 0.0
        %1598 = vmatpush1.msra.mxu0 0.0
        %1599 = vmatprep.subr.mxu0 0.0
        %1600 = vmatpush1.msra.mxu0 0.0
        %1601 = vmatprep.mubr.f32.mxu0 0.0
        %1602 = vmatmul.mubr.f32.gmra.mrb[0].mxu0 %v1532
        %v1603 = vpop.f32.mrb[0].mxu0
        %v1604 = vadd.f32 %v1529, %v1603
        %v1605 = vpop.f32.mrb[0].mxu0
        %1606 = vmatprep.mubr.f32.mxu0 0.0
        %1607 = vmatmul.mubr.f32.gmra.mrb[0].mxu0 %v1535
        %v1608 = vpop.f32.mrb[0].mxu0
        %v1609 = vadd.f32 %v1529, %v1608
        %v1610 = vpop.f32.mrb[0].mxu0
        %1611 = vdwg.mxu0
        %v1612 = vmax.f32 %v1604, 0.0
        %v1613 = vmax.f32 %v1609, 0.0
        %1614 = vst [vmem:[#allocation2] sm:$0xff] 0.0
        %1615 = vst [vmem:[#allocation2 + $0x8] sm:$0xff] 0.0
        %1616 = vst [vmem:[#allocation2 + $0x10] sm:$0xff] 0.0
        %1617 = vst [vmem:[#allocation2 + $0x18] sm:$0xff] 0.0
        %1618 = vst [vmem:[#allocation2 + $0x20] sm:$0xff] 0.0
        %1619 = vst [vmem:[#allocation2 + $0x28] sm:$0xff] 0.0
        %vm1620 = vcmask 523264
        %1621 = vst.msk [vmem:[#allocation2 + $0x8] sm:$0xff] %vm1620, %v1612
        %1622 = vst.msk [vmem:[#allocation2 + $0x10] sm:$0xff] %vm1620, %v1613
        %v1623 = vld [vmem:[#allocation2 + $0x6] sm:$0xff]
        %v1624 = vld [vmem:[#allocation2 + $0xe] sm:$0xff]
        %v1625 = vld [vmem:[#allocation6] sm:$0xff]
        %v1626 = vld [vmem:[#allocation6 + $0x8] sm:$0xff]
        %v1627 = vld [vmem:[#allocation6 + $0x10] sm:$0xff]
        %v1628 = vld [vmem:[#allocation6 + $0x18] sm:$0xff]
        %v1629 = vld [vmem:[#allocation6 + $0x20] sm:$0xff]
        %v1630 = vld [vmem:[#allocation6 + $0x28] sm:$0xff]
        %v1631 = vld [vmem:[#allocation6 + $0x30] sm:$0xff]
        %v1632 = vld [vmem:[#allocation6 + $0x38] sm:$0xff]
        %s1633 = scalar_lea.vmem [#allocation6], 64
        %v1634 = vld [vmem:[%s1633] sm:$0xff]
        %v1635 = vld [vmem:[%s1633 + $0x8] sm:$0xff]
        %v1636 = vld [vmem:[%s1633 + $0x10] sm:$0xff]
        %v1637 = vld [vmem:[%s1633 + $0x18] sm:$0xff]
        %v1638 = vld [vmem:[%s1633 + $0x20] sm:$0xff]
        %v1639 = vld [vmem:[%s1633 + $0x28] sm:$0xff]
        %v1640 = vld [vmem:[%s1633 + $0x30] sm:$0xff]
        %v1641 = vld [vmem:[%s1633 + $0x38] sm:$0xff]
        %v1643 = vsel %vm1620, %v1612, 0
        %v1646 = vsel %vm1620, %v1613, 0
        %1648 = vmatprep.subr.mxu0 0.0
        %1649 = vmatpush1.msra.mxu0 %v1634
        %1650 = vmatprep.subr.mxu0 0.0
        %1651 = vmatpush1.msra.mxu0 %v1635
        %1652 = vmatprep.subr.mxu0 0.0
        %1653 = vmatpush1.msra.mxu0 %v1636
        %1654 = vmatprep.subr.mxu0 0.0
        %1655 = vmatpush1.msra.mxu0 %v1637
        %1656 = vmatprep.subr.mxu0 0.0
        %1657 = vmatpush1.msra.mxu0 %v1638
        %1658 = vmatprep.subr.mxu0 0.0
        %1659 = vmatpush1.msra.mxu0 %v1639
        %1660 = vmatprep.subr.mxu0 0.0
        %1661 = vmatpush1.msra.mxu0 %v1640
        %1662 = vmatprep.subr.mxu0 0.0
        %1663 = vmatpush1.msra.mxu0 %v1641
        %1664 = vmatprep.subr.mxu0 0.0
        %1665 = vmatpush1.msra.mxu0 0.0
        %1666 = vmatprep.subr.mxu0 0.0
        %1667 = vmatpush1.msra.mxu0 0.0
        %1668 = vmatprep.subr.mxu0 0.0
        %1669 = vmatpush1.msra.mxu0 0.0
        %1670 = vmatprep.subr.mxu0 0.0
        %1671 = vmatpush1.msra.mxu0 0.0
        %1672 = vmatprep.subr.mxu0 0.0
        %1673 = vmatpush1.msra.mxu0 0.0
        %1674 = vmatprep.subr.mxu0 0.0
        %1675 = vmatpush1.msra.mxu0 0.0
        %1676 = vmatprep.subr.mxu0 0.0
        %1677 = vmatpush1.msra.mxu0 0.0
        %1678 = vmatprep.subr.mxu0 0.0
        %1679 = vmatpush1.msra.mxu0 0.0
        %1680 = vmatprep.subr.mxu0 0.0
        %1681 = vmatpush1.msra.mxu0 0.0
        %1682 = vmatprep.subr.mxu0 0.0
        %1683 = vmatpush1.msra.mxu0 0.0
        %1684 = vmatprep.subr.mxu0 0.0
        %1685 = vmatpush1.msra.mxu0 0.0
        %1686 = vmatprep.subr.mxu0 0.0
        %1687 = vmatpush1.msra.mxu0 0.0
        %1688 = vmatprep.subr.mxu0 0.0
        %1689 = vmatpush1.msra.mxu0 0.0
        %1690 = vmatprep.subr.mxu0 0.0
        %1691 = vmatpush1.msra.mxu0 0.0
        %1692 = vmatprep.subr.mxu0 0.0
        %1693 = vmatpush1.msra.mxu0 0.0
        %1694 = vmatprep.subr.mxu0 0.0
        %1695 = vmatpush1.msra.mxu0 0.0
        %1696 = vmatprep.subr.mxu0 0.0
        %1697 = vmatpush1.msra.mxu0 0.0
        %1698 = vmatprep.subr.mxu0 0.0
        %1699 = vmatpush1.msra.mxu0 0.0
        %1700 = vmatprep.subr.mxu0 0.0
        %1701 = vmatpush1.msra.mxu0 0.0
        %1702 = vmatprep.subr.mxu0 0.0
        %1703 = vmatpush1.msra.mxu0 0.0
        %1704 = vmatprep.subr.mxu0 0.0
        %1705 = vmatpush1.msra.mxu0 0.0
        %1706 = vmatprep.subr.mxu0 0.0
        %1707 = vmatpush1.msra.mxu0 0.0
        %1708 = vmatprep.subr.mxu0 0.0
        %1709 = vmatpush1.msra.mxu0 0.0
        %1710 = vmatprep.subr.mxu0 0.0
        %1711 = vmatpush1.msra.mxu0 0.0
        %1712 = vmatprep.mubr.f32.mxu0 0.0
        %1713 = vmatmul.mubr.f32.gmra.mrb[0].mxu0 %v1643
        %v1714 = vpop.f32.mrb[0].mxu0
        %v1715 = vadd.f32 0.0, %v1714
        %v1716 = vpop.f32.mrb[0].mxu0
        %1717 = vmatprep.mubr.f32.mxu0 0.0
        %1718 = vmatmul.mubr.f32.gmra.mrb[0].mxu0 %v1646
        %v1719 = vpop.f32.mrb[0].mxu0
        %v1720 = vadd.f32 0.0, %v1719
        %v1721 = vpop.f32.mrb[0].mxu0
        %1722 = vdwg.mxu0
        %v1724 = vsel %vm1620, %v1623, 0
        %v1727 = vsel %vm1620, %v1624, 0
        %1729 = vmatprep.subr.mxu0 0.0
        %1730 = vmatpush1.msra.mxu0 %v1625
        %1731 = vmatprep.subr.mxu0 0.0
        %1732 = vmatpush1.msra.mxu0 %v1626
        %1733 = vmatprep.subr.mxu0 0.0
        %1734 = vmatpush1.msra.mxu0 %v1627
        %1735 = vmatprep.subr.mxu0 0.0
        %1736 = vmatpush1.msra.mxu0 %v1628
        %1737 = vmatprep.subr.mxu0 0.0
        %1738 = vmatpush1.msra.mxu0 %v1629
        %1739 = vmatprep.subr.mxu0 0.0
        %1740 = vmatpush1.msra.mxu0 %v1630
        %1741 = vmatprep.subr.mxu0 0.0
        %1742 = vmatpush1.msra.mxu0 %v1631
        %1743 = vmatprep.subr.mxu0 0.0
        %1744 = vmatpush1.msra.mxu0 %v1632
        %1745 = vmatprep.subr.mxu0 0.0
        %1746 = vmatpush1.msra.mxu0 0.0
        %1747 = vmatprep.subr.mxu0 0.0
        %1748 = vmatpush1.msra.mxu0 0.0
        %1749 = vmatprep.subr.mxu0 0.0
        %1750 = vmatpush1.msra.mxu0 0.0
        %1751 = vmatprep.subr.mxu0 0.0
        %1752 = vmatpush1.msra.mxu0 0.0
        %1753 = vmatprep.subr.mxu0 0.0
        %1754 = vmatpush1.msra.mxu0 0.0
        %1755 = vmatprep.subr.mxu0 0.0
        %1756 = vmatpush1.msra.mxu0 0.0
        %1757 = vmatprep.subr.mxu0 0.0
        %1758 = vmatpush1.msra.mxu0 0.0
        %1759 = vmatprep.subr.mxu0 0.0
        %1760 = vmatpush1.msra.mxu0 0.0
        %1761 = vmatprep.subr.mxu0 0.0
        %1762 = vmatpush1.msra.mxu0 0.0
        %1763 = vmatprep.subr.mxu0 0.0
        %1764 = vmatpush1.msra.mxu0 0.0
        %1765 = vmatprep.subr.mxu0 0.0
        %1766 = vmatpush1.msra.mxu0 0.0
        %1767 = vmatprep.subr.mxu0 0.0
        %1768 = vmatpush1.msra.mxu0 0.0
        %1769 = vmatprep.subr.mxu0 0.0
        %1770 = vmatpush1.msra.mxu0 0.0
        %1771 = vmatprep.subr.mxu0 0.0
        %1772 = vmatpush1.msra.mxu0 0.0
        %1773 = vmatprep.subr.mxu0 0.0
        %1774 = vmatpush1.msra.mxu0 0.0
        %1775 = vmatprep.subr.mxu0 0.0
        %1776 = vmatpush1.msra.mxu0 0.0
        %1777 = vmatprep.subr.mxu0 0.0
        %1778 = vmatpush1.msra.mxu0 0.0
        %1779 = vmatprep.subr.mxu0 0.0
        %1780 = vmatpush1.msra.mxu0 0.0
        %1781 = vmatprep.subr.mxu0 0.0
        %1782 = vmatpush1.msra.mxu0 0.0
        %1783 = vmatprep.subr.mxu0 0.0
        %1784 = vmatpush1.msra.mxu0 0.0
        %1785 = vmatprep.subr.mxu0 0.0
        %1786 = vmatpush1.msra.mxu0 0.0
        %1787 = vmatprep.subr.mxu0 0.0
        %1788 = vmatpush1.msra.mxu0 0.0
        %1789 = vmatprep.subr.mxu0 0.0
        %1790 = vmatpush1.msra.mxu0 0.0
        %1791 = vmatprep.subr.mxu0 0.0
        %1792 = vmatpush1.msra.mxu0 0.0
        %1793 = vmatprep.mubr.f32.mxu0 0.0
        %1794 = vmatmul.mubr.f32.gmra.mrb[0].mxu0 %v1724
        %v1795 = vpop.f32.mrb[0].mxu0
        %v1796 = vadd.f32 %v1715, %v1795
        %v1797 = vpop.f32.mrb[0].mxu0
        %1798 = vmatprep.mubr.f32.mxu0 0.0
        %1799 = vmatmul.mubr.f32.gmra.mrb[0].mxu0 %v1727
        %v1800 = vpop.f32.mrb[0].mxu0
        %v1801 = vadd.f32 %v1720, %v1800
        %v1802 = vpop.f32.mrb[0].mxu0
        %1803 = vdwg.mxu0
        %v1804 = vld [vmem:[#allocation2 + $0xa] sm:$0xff]
        %v1805 = vld [vmem:[#allocation2 + $0x12] sm:$0xff]
        %s1806 = scalar_lea.vmem [#allocation6], 128
        %v1807 = vld [vmem:[%s1806] sm:$0xff]
        %v1808 = vld [vmem:[%s1806 + $0x8] sm:$0xff]
        %v1809 = vld [vmem:[%s1806 + $0x10] sm:$0xff]
        %v1810 = vld [vmem:[%s1806 + $0x18] sm:$0xff]
        %v1811 = vld [vmem:[%s1806 + $0x20] sm:$0xff]
        %v1812 = vld [vmem:[%s1806 + $0x28] sm:$0xff]
        %v1813 = vld [vmem:[%s1806 + $0x30] sm:$0xff]
        %v1814 = vld [vmem:[%s1806 + $0x38] sm:$0xff]
        %v1816 = vsel %vm1620, %v1804, 0
        %v1819 = vsel %vm1620, %v1805, 0
        %1821 = vmatprep.subr.mxu0 0.0
        %1822 = vmatpush1.msra.mxu0 %v1807
        %1823 = vmatprep.subr.mxu0 0.0
        %1824 = vmatpush1.msra.mxu0 %v1808
        %1825 = vmatprep.subr.mxu0 0.0
        %1826 = vmatpush1.msra.mxu0 %v1809
        %1827 = vmatprep.subr.mxu0 0.0
        %1828 = vmatpush1.msra.mxu0 %v1810
        %1829 = vmatprep.subr.mxu0 0.0
        %1830 = vmatpush1.msra.mxu0 %v1811
        %1831 = vmatprep.subr.mxu0 0.0
        %1832 = vmatpush1.msra.mxu0 %v1812
        %1833 = vmatprep.subr.mxu0 0.0
        %1834 = vmatpush1.msra.mxu0 %v1813
        %1835 = vmatprep.subr.mxu0 0.0
        %1836 = vmatpush1.msra.mxu0 %v1814
        %1837 = vmatprep.subr.mxu0 0.0
        %1838 = vmatpush1.msra.mxu0 0.0
        %1839 = vmatprep.subr.mxu0 0.0
        %1840 = vmatpush1.msra.mxu0 0.0
        %1841 = vmatprep.subr.mxu0 0.0
        %1842 = vmatpush1.msra.mxu0 0.0
        %1843 = vmatprep.subr.mxu0 0.0
        %1844 = vmatpush1.msra.mxu0 0.0
        %1845 = vmatprep.subr.mxu0 0.0
        %1846 = vmatpush1.msra.mxu0 0.0
        %1847 = vmatprep.subr.mxu0 0.0
        %1848 = vmatpush1.msra.mxu0 0.0
        %1849 = vmatprep.subr.mxu0 0.0
        %1850 = vmatpush1.msra.mxu0 0.0
        %1851 = vmatprep.subr.mxu0 0.0
        %1852 = vmatpush1.msra.mxu0 0.0
        %1853 = vmatprep.subr.mxu0 0.0
        %1854 = vmatpush1.msra.mxu0 0.0
        %1855 = vmatprep.subr.mxu0 0.0
        %1856 = vmatpush1.msra.mxu0 0.0
        %1857 = vmatprep.subr.mxu0 0.0
        %1858 = vmatpush1.msra.mxu0 0.0
        %1859 = vmatprep.subr.mxu0 0.0
        %1860 = vmatpush1.msra.mxu0 0.0
        %1861 = vmatprep.subr.mxu0 0.0
        %1862 = vmatpush1.msra.mxu0 0.0
        %1863 = vmatprep.subr.mxu0 0.0
        %1864 = vmatpush1.msra.mxu0 0.0
        %1865 = vmatprep.subr.mxu0 0.0
        %1866 = vmatpush1.msra.mxu0 0.0
        %1867 = vmatprep.subr.mxu0 0.0
        %1868 = vmatpush1.msra.mxu0 0.0
        %1869 = vmatprep.subr.mxu0 0.0
        %1870 = vmatpush1.msra.mxu0 0.0
        %1871 = vmatprep.subr.mxu0 0.0
        %1872 = vmatpush1.msra.mxu0 0.0
        %1873 = vmatprep.subr.mxu0 0.0
        %1874 = vmatpush1.msra.mxu0 0.0
        %1875 = vmatprep.subr.mxu0 0.0
        %1876 = vmatpush1.msra.mxu0 0.0
        %1877 = vmatprep.subr.mxu0 0.0
        %1878 = vmatpush1.msra.mxu0 0.0
        %1879 = vmatprep.subr.mxu0 0.0
        %1880 = vmatpush1.msra.mxu0 0.0
        %1881 = vmatprep.subr.mxu0 0.0
        %1882 = vmatpush1.msra.mxu0 0.0
        %1883 = vmatprep.subr.mxu0 0.0
        %1884 = vmatpush1.msra.mxu0 0.0
        %1885 = vmatprep.mubr.f32.mxu0 0.0
        %1886 = vmatmul.mubr.f32.gmra.mrb[0].mxu0 %v1816
        %v1887 = vpop.f32.mrb[0].mxu0
        %v1888 = vadd.f32 0.0, %v1887
        %v1889 = vpop.f32.mrb[0].mxu0
        %1890 = vmatprep.mubr.f32.mxu0 0.0
        %1891 = vmatmul.mubr.f32.gmra.mrb[0].mxu0 %v1819
        %v1892 = vpop.f32.mrb[0].mxu0
        %v1893 = vadd.f32 0.0, %v1892
        %v1894 = vpop.f32.mrb[0].mxu0
        %1895 = vdwg.mxu0
        %v1896 = vadd.f32 %v1796, %v1888
        %v1897 = vadd.f32 %v1801, %v1893
        %v1898 = vld [vmem:[%s8] sm:$0x1]
        %v1900 = vlaneseq
        %v1901 = vshrl.u32 %v1900, 7
        %v1902 = vsub.s32 0, %v1901
        %v1903 = vrot.slane %v1898, %v1902
        %v1905 = vadd.f32 %v1896, %v1903
        %v1906 = vadd.f32 %v1897, %v1903
        %v1907 = vmax.f32 %v1905, 0.0
        %v1908 = vmax.f32 %v1906, 0.0
        %1909 = vst [vmem:[#allocation2] sm:$0xff] 0.0
        %1910 = vst [vmem:[#allocation2 + $0x8] sm:$0xff] 0.0
        %1911 = vst [vmem:[#allocation2 + $0x10] sm:$0xff] 0.0
        %1912 = vst [vmem:[#allocation2 + $0x18] sm:$0xff] 0.0
        %1913 = vst [vmem:[#allocation2 + $0x20] sm:$0xff] 0.0
        %1914 = vst [vmem:[#allocation2 + $0x28] sm:$0xff] 0.0
        %1915 = vst.msk [vmem:[#allocation2 + $0x8] sm:$0xff] %vm1620, %v1907
        %1916 = vst.msk [vmem:[#allocation2 + $0x10] sm:$0xff] %vm1620, %v1908
        %v1917 = vld [vmem:[#allocation2 + $0x6] sm:$0xff]
        %v1918 = vld [vmem:[#allocation2 + $0xe] sm:$0xff]
        %v1919 = vld [vmem:[#allocation8] sm:$0xff]
        %v1920 = vld [vmem:[#allocation8 + $0x8] sm:$0xff]
        %v1921 = vld [vmem:[#allocation8 + $0x10] sm:$0xff]
        %v1922 = vld [vmem:[#allocation8 + $0x18] sm:$0xff]
        %v1923 = vld [vmem:[#allocation8 + $0x20] sm:$0xff]
        %v1924 = vld [vmem:[#allocation8 + $0x28] sm:$0xff]
        %v1925 = vld [vmem:[#allocation8 + $0x30] sm:$0xff]
        %v1926 = vld [vmem:[#allocation8 + $0x38] sm:$0xff]
        %s1927 = scalar_lea.vmem [#allocation8], 64
        %v1928 = vld [vmem:[%s1927] sm:$0xff]
        %v1929 = vld [vmem:[%s1927 + $0x8] sm:$0xff]
        %v1930 = vld [vmem:[%s1927 + $0x10] sm:$0xff]
        %v1931 = vld [vmem:[%s1927 + $0x18] sm:$0xff]
        %v1932 = vld [vmem:[%s1927 + $0x20] sm:$0xff]
        %v1933 = vld [vmem:[%s1927 + $0x28] sm:$0xff]
        %v1934 = vld [vmem:[%s1927 + $0x30] sm:$0xff]
        %v1935 = vld [vmem:[%s1927 + $0x38] sm:$0xff]
        %v1937 = vsel %vm1620, %v1907, 0
        %v1940 = vsel %vm1620, %v1908, 0
        %1942 = vmatprep.subr.mxu0 0.0
        %1943 = vmatpush1.msra.mxu0 %v1928
        %1944 = vmatprep.subr.mxu0 0.0
        %1945 = vmatpush1.msra.mxu0 %v1929
        %1946 = vmatprep.subr.mxu0 0.0
        %1947 = vmatpush1.msra.mxu0 %v1930
        %1948 = vmatprep.subr.mxu0 0.0
        %1949 = vmatpush1.msra.mxu0 %v1931
        %1950 = vmatprep.subr.mxu0 0.0
        %1951 = vmatpush1.msra.mxu0 %v1932
        %1952 = vmatprep.subr.mxu0 0.0
        %1953 = vmatpush1.msra.mxu0 %v1933
        %1954 = vmatprep.subr.mxu0 0.0
        %1955 = vmatpush1.msra.mxu0 %v1934
        %1956 = vmatprep.subr.mxu0 0.0
        %1957 = vmatpush1.msra.mxu0 %v1935
        %1958 = vmatprep.subr.mxu0 0.0
        %1959 = vmatpush1.msra.mxu0 0.0
        %1960 = vmatprep.subr.mxu0 0.0
        %1961 = vmatpush1.msra.mxu0 0.0
        %1962 = vmatprep.subr.mxu0 0.0
        %1963 = vmatpush1.msra.mxu0 0.0
        %1964 = vmatprep.subr.mxu0 0.0
        %1965 = vmatpush1.msra.mxu0 0.0
        %1966 = vmatprep.subr.mxu0 0.0
        %1967 = vmatpush1.msra.mxu0 0.0
        %1968 = vmatprep.subr.mxu0 0.0
        %1969 = vmatpush1.msra.mxu0 0.0
        %1970 = vmatprep.subr.mxu0 0.0
        %1971 = vmatpush1.msra.mxu0 0.0
        %1972 = vmatprep.subr.mxu0 0.0
        %1973 = vmatpush1.msra.mxu0 0.0
        %1974 = vmatprep.subr.mxu0 0.0
        %1975 = vmatpush1.msra.mxu0 0.0
        %1976 = vmatprep.subr.mxu0 0.0
        %1977 = vmatpush1.msra.mxu0 0.0
        %1978 = vmatprep.subr.mxu0 0.0
        %1979 = vmatpush1.msra.mxu0 0.0
        %1980 = vmatprep.subr.mxu0 0.0
        %1981 = vmatpush1.msra.mxu0 0.0
        %1982 = vmatprep.subr.mxu0 0.0
        %1983 = vmatpush1.msra.mxu0 0.0
        %1984 = vmatprep.subr.mxu0 0.0
        %1985 = vmatpush1.msra.mxu0 0.0
        %1986 = vmatprep.subr.mxu0 0.0
        %1987 = vmatpush1.msra.mxu0 0.0
        %1988 = vmatprep.subr.mxu0 0.0
        %1989 = vmatpush1.msra.mxu0 0.0
        %1990 = vmatprep.subr.mxu0 0.0
        %1991 = vmatpush1.msra.mxu0 0.0
        %1992 = vmatprep.subr.mxu0 0.0
        %1993 = vmatpush1.msra.mxu0 0.0
        %1994 = vmatprep.subr.mxu0 0.0
        %1995 = vmatpush1.msra.mxu0 0.0
        %1996 = vmatprep.subr.mxu0 0.0
        %1997 = vmatpush1.msra.mxu0 0.0
        %1998 = vmatprep.subr.mxu0 0.0
        %1999 = vmatpush1.msra.mxu0 0.0
        %2000 = vmatprep.subr.mxu0 0.0
        %2001 = vmatpush1.msra.mxu0 0.0
        %2002 = vmatprep.subr.mxu0 0.0
        %2003 = vmatpush1.msra.mxu0 0.0
        %2004 = vmatprep.subr.mxu0 0.0
        %2005 = vmatpush1.msra.mxu0 0.0
        %2006 = vmatprep.mubr.f32.mxu0 0.0
        %2007 = vmatmul.mubr.f32.gmra.mrb[0].mxu0 %v1937
        %v2008 = vpop.f32.mrb[0].mxu0
        %v2009 = vadd.f32 0.0, %v2008
        %v2010 = vpop.f32.mrb[0].mxu0
        %2011 = vmatprep.mubr.f32.mxu0 0.0
        %2012 = vmatmul.mubr.f32.gmra.mrb[0].mxu0 %v1940
        %v2013 = vpop.f32.mrb[0].mxu0
        %v2014 = vadd.f32 0.0, %v2013
        %v2015 = vpop.f32.mrb[0].mxu0
        %2016 = vdwg.mxu0
        %v2018 = vsel %vm1620, %v1917, 0
        %v2021 = vsel %vm1620, %v1918, 0
        %2023 = vmatprep.subr.mxu0 0.0
        %2024 = vmatpush1.msra.mxu0 %v1919
        %2025 = vmatprep.subr.mxu0 0.0
        %2026 = vmatpush1.msra.mxu0 %v1920
        %2027 = vmatprep.subr.mxu0 0.0
        %2028 = vmatpush1.msra.mxu0 %v1921
        %2029 = vmatprep.subr.mxu0 0.0
        %2030 = vmatpush1.msra.mxu0 %v1922
        %2031 = vmatprep.subr.mxu0 0.0
        %2032 = vmatpush1.msra.mxu0 %v1923
        %2033 = vmatprep.subr.mxu0 0.0
        %2034 = vmatpush1.msra.mxu0 %v1924
        %2035 = vmatprep.subr.mxu0 0.0
        %2036 = vmatpush1.msra.mxu0 %v1925
        %2037 = vmatprep.subr.mxu0 0.0
        %2038 = vmatpush1.msra.mxu0 %v1926
        %2039 = vmatprep.subr.mxu0 0.0
        %2040 = vmatpush1.msra.mxu0 0.0
        %2041 = vmatprep.subr.mxu0 0.0
        %2042 = vmatpush1.msra.mxu0 0.0
        %2043 = vmatprep.subr.mxu0 0.0
        %2044 = vmatpush1.msra.mxu0 0.0
        %2045 = vmatprep.subr.mxu0 0.0
        %2046 = vmatpush1.msra.mxu0 0.0
        %2047 = vmatprep.subr.mxu0 0.0
        %2048 = vmatpush1.msra.mxu0 0.0
        %2049 = vmatprep.subr.mxu0 0.0
        %2050 = vmatpush1.msra.mxu0 0.0
        %2051 = vmatprep.subr.mxu0 0.0
        %2052 = vmatpush1.msra.mxu0 0.0
        %2053 = vmatprep.subr.mxu0 0.0
        %2054 = vmatpush1.msra.mxu0 0.0
        %2055 = vmatprep.subr.mxu0 0.0
        %2056 = vmatpush1.msra.mxu0 0.0
        %2057 = vmatprep.subr.mxu0 0.0
        %2058 = vmatpush1.msra.mxu0 0.0
        %2059 = vmatprep.subr.mxu0 0.0
        %2060 = vmatpush1.msra.mxu0 0.0
        %2061 = vmatprep.subr.mxu0 0.0
        %2062 = vmatpush1.msra.mxu0 0.0
        %2063 = vmatprep.subr.mxu0 0.0
        %2064 = vmatpush1.msra.mxu0 0.0
        %2065 = vmatprep.subr.mxu0 0.0
        %2066 = vmatpush1.msra.mxu0 0.0
        %2067 = vmatprep.subr.mxu0 0.0
        %2068 = vmatpush1.msra.mxu0 0.0
        %2069 = vmatprep.subr.mxu0 0.0
        %2070 = vmatpush1.msra.mxu0 0.0
        %2071 = vmatprep.subr.mxu0 0.0
        %2072 = vmatpush1.msra.mxu0 0.0
        %2073 = vmatprep.subr.mxu0 0.0
        %2074 = vmatpush1.msra.mxu0 0.0
        %2075 = vmatprep.subr.mxu0 0.0
        %2076 = vmatpush1.msra.mxu0 0.0
        %2077 = vmatprep.subr.mxu0 0.0
        %2078 = vmatpush1.msra.mxu0 0.0
        %2079 = vmatprep.subr.mxu0 0.0
        %2080 = vmatpush1.msra.mxu0 0.0
        %2081 = vmatprep.subr.mxu0 0.0
        %2082 = vmatpush1.msra.mxu0 0.0
        %2083 = vmatprep.subr.mxu0 0.0
        %2084 = vmatpush1.msra.mxu0 0.0
        %2085 = vmatprep.subr.mxu0 0.0
        %2086 = vmatpush1.msra.mxu0 0.0
        %2087 = vmatprep.mubr.f32.mxu0 0.0
        %2088 = vmatmul.mubr.f32.gmra.mrb[0].mxu0 %v2018
        %v2089 = vpop.f32.mrb[0].mxu0
        %v2090 = vadd.f32 %v2009, %v2089
        %v2091 = vpop.f32.mrb[0].mxu0
        %2092 = vmatprep.mubr.f32.mxu0 0.0
        %2093 = vmatmul.mubr.f32.gmra.mrb[0].mxu0 %v2021
        %v2094 = vpop.f32.mrb[0].mxu0
        %v2095 = vadd.f32 %v2014, %v2094
        %v2096 = vpop.f32.mrb[0].mxu0
        %2097 = vdwg.mxu0
        %v2098 = vld [vmem:[#allocation2 + $0xa] sm:$0xff]
        %v2099 = vld [vmem:[#allocation2 + $0x12] sm:$0xff]
        %s2100 = scalar_lea.vmem [#allocation8], 128
        %v2101 = vld [vmem:[%s2100] sm:$0xff]
        %v2102 = vld [vmem:[%s2100 + $0x8] sm:$0xff]
        %v2103 = vld [vmem:[%s2100 + $0x10] sm:$0xff]
        %v2104 = vld [vmem:[%s2100 + $0x18] sm:$0xff]
        %v2105 = vld [vmem:[%s2100 + $0x20] sm:$0xff]
        %v2106 = vld [vmem:[%s2100 + $0x28] sm:$0xff]
        %v2107 = vld [vmem:[%s2100 + $0x30] sm:$0xff]
        %v2108 = vld [vmem:[%s2100 + $0x38] sm:$0xff]
        %v2110 = vsel %vm1620, %v2098, 0
        %v2113 = vsel %vm1620, %v2099, 0
        %2115 = vmatprep.subr.mxu0 0.0
        %2116 = vmatpush1.msra.mxu0 %v2101
        %2117 = vmatprep.subr.mxu0 0.0
        %2118 = vmatpush1.msra.mxu0 %v2102
        %2119 = vmatprep.subr.mxu0 0.0
        %2120 = vmatpush1.msra.mxu0 %v2103
        %2121 = vmatprep.subr.mxu0 0.0
        %2122 = vmatpush1.msra.mxu0 %v2104
        %2123 = vmatprep.subr.mxu0 0.0
        %2124 = vmatpush1.msra.mxu0 %v2105
        %2125 = vmatprep.subr.mxu0 0.0
        %2126 = vmatpush1.msra.mxu0 %v2106
        %2127 = vmatprep.subr.mxu0 0.0
        %2128 = vmatpush1.msra.mxu0 %v2107
        %2129 = vmatprep.subr.mxu0 0.0
        %2130 = vmatpush1.msra.mxu0 %v2108
        %2131 = vmatprep.subr.mxu0 0.0
        %2132 = vmatpush1.msra.mxu0 0.0
        %2133 = vmatprep.subr.mxu0 0.0
        %2134 = vmatpush1.msra.mxu0 0.0
        %2135 = vmatprep.subr.mxu0 0.0
        %2136 = vmatpush1.msra.mxu0 0.0
        %2137 = vmatprep.subr.mxu0 0.0
        %2138 = vmatpush1.msra.mxu0 0.0
        %2139 = vmatprep.subr.mxu0 0.0
        %2140 = vmatpush1.msra.mxu0 0.0
        %2141 = vmatprep.subr.mxu0 0.0
        %2142 = vmatpush1.msra.mxu0 0.0
        %2143 = vmatprep.subr.mxu0 0.0
        %2144 = vmatpush1.msra.mxu0 0.0
        %2145 = vmatprep.subr.mxu0 0.0
        %2146 = vmatpush1.msra.mxu0 0.0
        %2147 = vmatprep.subr.mxu0 0.0
        %2148 = vmatpush1.msra.mxu0 0.0
        %2149 = vmatprep.subr.mxu0 0.0
        %2150 = vmatpush1.msra.mxu0 0.0
        %2151 = vmatprep.subr.mxu0 0.0
        %2152 = vmatpush1.msra.mxu0 0.0
        %2153 = vmatprep.subr.mxu0 0.0
        %2154 = vmatpush1.msra.mxu0 0.0
        %2155 = vmatprep.subr.mxu0 0.0
        %2156 = vmatpush1.msra.mxu0 0.0
        %2157 = vmatprep.subr.mxu0 0.0
        %2158 = vmatpush1.msra.mxu0 0.0
        %2159 = vmatprep.subr.mxu0 0.0
        %2160 = vmatpush1.msra.mxu0 0.0
        %2161 = vmatprep.subr.mxu0 0.0
        %2162 = vmatpush1.msra.mxu0 0.0
        %2163 = vmatprep.subr.mxu0 0.0
        %2164 = vmatpush1.msra.mxu0 0.0
        %2165 = vmatprep.subr.mxu0 0.0
        %2166 = vmatpush1.msra.mxu0 0.0
        %2167 = vmatprep.subr.mxu0 0.0
        %2168 = vmatpush1.msra.mxu0 0.0
        %2169 = vmatprep.subr.mxu0 0.0
        %2170 = vmatpush1.msra.mxu0 0.0
        %2171 = vmatprep.subr.mxu0 0.0
        %2172 = vmatpush1.msra.mxu0 0.0
        %2173 = vmatprep.subr.mxu0 0.0
        %2174 = vmatpush1.msra.mxu0 0.0
        %2175 = vmatprep.subr.mxu0 0.0
        %2176 = vmatpush1.msra.mxu0 0.0
        %2177 = vmatprep.subr.mxu0 0.0
        %2178 = vmatpush1.msra.mxu0 0.0
        %2179 = vmatprep.mubr.f32.mxu0 0.0
        %2180 = vmatmul.mubr.f32.gmra.mrb[0].mxu0 %v2110
        %v2181 = vpop.f32.mrb[0].mxu0
        %v2182 = vadd.f32 0.0, %v2181
        %v2183 = vpop.f32.mrb[0].mxu0
        %2184 = vmatprep.mubr.f32.mxu0 0.0
        %2185 = vmatmul.mubr.f32.gmra.mrb[0].mxu0 %v2113
        %v2186 = vpop.f32.mrb[0].mxu0
        %v2187 = vadd.f32 0.0, %v2186
        %v2188 = vpop.f32.mrb[0].mxu0
        %2189 = vdwg.mxu0
        %v2190 = vadd.f32 %v2090, %v2182
        %v2191 = vadd.f32 %v2095, %v2187
        %v2192 = vld [vmem:[%s10] sm:$0x1]
        %v2194 = vlaneseq
        %v2195 = vshrl.u32 %v2194, 7
        %v2196 = vsub.s32 0, %v2195
        %v2197 = vrot.slane %v2192, %v2196
        %v2199 = vadd.f32 %v2190, %v2197
        %v2200 = vadd.f32 %v2191, %v2197
        %v2201 = vld [vmem:[%s12] sm:$0xff]
        %v2202 = vld [vmem:[%s11] sm:$0x1]
        %v2204 = vlaneseq
        %v2205 = vshrl.u32 %v2204, 7
        %v2206 = vsub.s32 0, %v2205
        %v2207 = vrot.slane %v2202, %v2206
        %vm2209 = vcmask 130048
        %v2211 = vsel %vm2209, %v2201, 0
        %2213 = vmatprep.subr.mxu0 0.0
        %2214 = vmatpush1.msra.mxu0 %v2199
        %2215 = vmatprep.subr.mxu0 0.0
        %2216 = vmatpush1.msra.mxu0 %v2200
        %2217 = vmatprep.subr.mxu0 0.0
        %2218 = vmatpush1.msra.mxu0 0.0
        %2219 = vmatprep.subr.mxu0 0.0
        %2220 = vmatpush1.msra.mxu0 0.0
        %2221 = vmatprep.subr.mxu0 0.0
        %2222 = vmatpush1.msra.mxu0 0.0
        %2223 = vmatprep.subr.mxu0 0.0
        %2224 = vmatpush1.msra.mxu0 0.0
        %2225 = vmatprep.subr.mxu0 0.0
        %2226 = vmatpush1.msra.mxu0 0.0
        %2227 = vmatprep.subr.mxu0 0.0
        %2228 = vmatpush1.msra.mxu0 0.0
        %2229 = vmatprep.subr.mxu0 0.0
        %2230 = vmatpush1.msra.mxu0 0.0
        %2231 = vmatprep.subr.mxu0 0.0
        %2232 = vmatpush1.msra.mxu0 0.0
        %2233 = vmatprep.subr.mxu0 0.0
        %2234 = vmatpush1.msra.mxu0 0.0
        %2235 = vmatprep.subr.mxu0 0.0
        %2236 = vmatpush1.msra.mxu0 0.0
        %2237 = vmatprep.subr.mxu0 0.0
        %2238 = vmatpush1.msra.mxu0 0.0
        %2239 = vmatprep.subr.mxu0 0.0
        %2240 = vmatpush1.msra.mxu0 0.0
        %2241 = vmatprep.subr.mxu0 0.0
        %2242 = vmatpush1.msra.mxu0 0.0
        %2243 = vmatprep.subr.mxu0 0.0
        %2244 = vmatpush1.msra.mxu0 0.0
        %2245 = vmatprep.subr.mxu0 0.0
        %2246 = vmatpush1.msra.mxu0 0.0
        %2247 = vmatprep.subr.mxu0 0.0
        %2248 = vmatpush1.msra.mxu0 0.0
        %2249 = vmatprep.subr.mxu0 0.0
        %2250 = vmatpush1.msra.mxu0 0.0
        %2251 = vmatprep.subr.mxu0 0.0
        %2252 = vmatpush1.msra.mxu0 0.0
        %2253 = vmatprep.subr.mxu0 0.0
        %2254 = vmatpush1.msra.mxu0 0.0
        %2255 = vmatprep.subr.mxu0 0.0
        %2256 = vmatpush1.msra.mxu0 0.0
        %2257 = vmatprep.subr.mxu0 0.0
        %2258 = vmatpush1.msra.mxu0 0.0
        %2259 = vmatprep.subr.mxu0 0.0
        %2260 = vmatpush1.msra.mxu0 0.0
        %2261 = vmatprep.subr.mxu0 0.0
        %2262 = vmatpush1.msra.mxu0 0.0
        %2263 = vmatprep.subr.mxu0 0.0
        %2264 = vmatpush1.msra.mxu0 0.0
        %2265 = vmatprep.subr.mxu0 0.0
        %2266 = vmatpush1.msra.mxu0 0.0
        %2267 = vmatprep.subr.mxu0 0.0
        %2268 = vmatpush1.msra.mxu0 0.0
        %2269 = vmatprep.subr.mxu0 0.0
        %2270 = vmatpush1.msra.mxu0 0.0
        %2271 = vmatprep.subr.mxu0 0.0
        %2272 = vmatpush1.msra.mxu0 0.0
        %2273 = vmatprep.subr.mxu0 0.0
        %2274 = vmatpush1.msra.mxu0 0.0
        %2275 = vmatprep.subr.mxu0 0.0
        %2276 = vmatpush1.msra.mxu0 0.0
        %2277 = vmatprep.mubr.f32.mxu0 0.0
        %2278 = vmatmul.mubr.f32.gmra.mrb[0].mxu0 %v2211
        %v2279 = vpop.f32.mrb[0].mxu0
        %v2280 = vadd.f32 %v2207, %v2279
        %v2281 = vpop.f32.mrb[0].mxu0
        %2282 = vdwg.mxu0
        %v2283 = vmax.f32 %v2280, 0.0
        %2284 = vst [vmem:[#allocation2] sm:$0xff] 0.0
        %2285 = vst [vmem:[#allocation2 + $0x8] sm:$0xff] 0.0
        %2286 = vst [vmem:[#allocation2 + $0x10] sm:$0xff] 0.0
        %2287 = vst [vmem:[#allocation2 + $0x18] sm:$0xff] 0.0
        %2288 = vst [vmem:[#allocation2 + $0x20] sm:$0xff] 0.0
        %2289 = vst [vmem:[#allocation2 + $0x28] sm:$0xff] 0.0
        %2290 = vst [vmem:[#allocation2 + $0x8] sm:$0xff] %v2283
        %v2291 = vld [vmem:[#allocation2 + $0x4] sm:$0xff]
        %v2292 = vld [vmem:[%s13] sm:$0xff]
        %v2293 = vld [vmem:[%s13 + $0x8] sm:$0xff]
        %v2294 = vld [vmem:[%s13 + $0x10] sm:$0xff]
        %v2295 = vld [vmem:[%s13 + $0x18] sm:$0xff]
        %v2296 = vld [vmem:[%s13 + $0x20] sm:$0xff]
        %v2297 = vld [vmem:[%s13 + $0x28] sm:$0xff]
        %v2298 = vld [vmem:[%s13 + $0x30] sm:$0xff]
        %v2299 = vld [vmem:[%s13 + $0x38] sm:$0xff]
        %v2300 = vld [vmem:[%s13 + $0x40] sm:$0xff]
        %v2301 = vld [vmem:[%s13 + $0x48] sm:$0xff]
        %v2302 = vld [vmem:[%s13 + $0x50] sm:$0xff]
        %v2303 = vld [vmem:[%s13 + $0x58] sm:$0xff]
        %v2304 = vld [vmem:[%s13 + $0x60] sm:$0xff]
        %v2305 = vld [vmem:[%s13 + $0x68] sm:$0xff]
        %v2306 = vld [vmem:[%s13 + $0x70] sm:$0xff]
        %v2307 = vld [vmem:[%s13 + $0x78] sm:$0xff]
        %s2308 = scalar_lea.vmem %s13, 128
        %v2309 = vld [vmem:[%s2308] sm:$0xff]
        %v2310 = vld [vmem:[%s2308 + $0x8] sm:$0xff]
        %v2311 = vld [vmem:[%s2308 + $0x10] sm:$0xff]
        %v2312 = vld [vmem:[%s2308 + $0x18] sm:$0xff]
        %v2313 = vld [vmem:[%s2308 + $0x20] sm:$0xff]
        %v2314 = vld [vmem:[%s2308 + $0x28] sm:$0xff]
        %v2315 = vld [vmem:[%s2308 + $0x30] sm:$0xff]
        %v2316 = vld [vmem:[%s2308 + $0x38] sm:$0xff]
        %v2317 = vld [vmem:[%s2308 + $0x40] sm:$0xff]
        %v2318 = vld [vmem:[%s2308 + $0x48] sm:$0xff]
        %v2319 = vld [vmem:[%s2308 + $0x50] sm:$0xff]
        %v2320 = vld [vmem:[%s2308 + $0x58] sm:$0xff]
        %v2321 = vld [vmem:[%s2308 + $0x60] sm:$0xff]
        %v2322 = vld [vmem:[%s2308 + $0x68] sm:$0xff]
        %v2323 = vld [vmem:[%s2308 + $0x70] sm:$0xff]
        %v2324 = vld [vmem:[%s2308 + $0x78] sm:$0xff]
        %2325 = vmatprep.subr.mxu0 0.0
        %2326 = vmatpush1.msra.mxu0 %v2309
        %2327 = vmatprep.subr.mxu0 0.0
        %2328 = vmatpush1.msra.mxu0 %v2310
        %2329 = vmatprep.subr.mxu0 0.0
        %2330 = vmatpush1.msra.mxu0 %v2311
        %2331 = vmatprep.subr.mxu0 0.0
        %2332 = vmatpush1.msra.mxu0 %v2312
        %2333 = vmatprep.subr.mxu0 0.0
        %2334 = vmatpush1.msra.mxu0 %v2313
        %2335 = vmatprep.subr.mxu0 0.0
        %2336 = vmatpush1.msra.mxu0 %v2314
        %2337 = vmatprep.subr.mxu0 0.0
        %2338 = vmatpush1.msra.mxu0 %v2315
        %2339 = vmatprep.subr.mxu0 0.0
        %2340 = vmatpush1.msra.mxu0 %v2316
        %2341 = vmatprep.subr.mxu0 0.0
        %2342 = vmatpush1.msra.mxu0 %v2317
        %2343 = vmatprep.subr.mxu0 0.0
        %2344 = vmatpush1.msra.mxu0 %v2318
        %2345 = vmatprep.subr.mxu0 0.0
        %2346 = vmatpush1.msra.mxu0 %v2319
        %2347 = vmatprep.subr.mxu0 0.0
        %2348 = vmatpush1.msra.mxu0 %v2320
        %2349 = vmatprep.subr.mxu0 0.0
        %2350 = vmatpush1.msra.mxu0 %v2321
        %2351 = vmatprep.subr.mxu0 0.0
        %2352 = vmatpush1.msra.mxu0 %v2322
        %2353 = vmatprep.subr.mxu0 0.0
        %2354 = vmatpush1.msra.mxu0 %v2323
        %2355 = vmatprep.subr.mxu0 0.0
        %2356 = vmatpush1.msra.mxu0 %v2324
        %2357 = vmatprep.subr.mxu0 0.0
        %2358 = vmatpush1.msra.mxu0 0.0
        %2359 = vmatprep.subr.mxu0 0.0
        %2360 = vmatpush1.msra.mxu0 0.0
        %2361 = vmatprep.subr.mxu0 0.0
        %2362 = vmatpush1.msra.mxu0 0.0
        %2363 = vmatprep.subr.mxu0 0.0
        %2364 = vmatpush1.msra.mxu0 0.0
        %2365 = vmatprep.subr.mxu0 0.0
        %2366 = vmatpush1.msra.mxu0 0.0
        %2367 = vmatprep.subr.mxu0 0.0
        %2368 = vmatpush1.msra.mxu0 0.0
        %2369 = vmatprep.subr.mxu0 0.0
        %2370 = vmatpush1.msra.mxu0 0.0
        %2371 = vmatprep.subr.mxu0 0.0
        %2372 = vmatpush1.msra.mxu0 0.0
        %2373 = vmatprep.subr.mxu0 0.0
        %2374 = vmatpush1.msra.mxu0 0.0
        %2375 = vmatprep.subr.mxu0 0.0
        %2376 = vmatpush1.msra.mxu0 0.0
        %2377 = vmatprep.subr.mxu0 0.0
        %2378 = vmatpush1.msra.mxu0 0.0
        %2379 = vmatprep.subr.mxu0 0.0
        %2380 = vmatpush1.msra.mxu0 0.0
        %2381 = vmatprep.subr.mxu0 0.0
        %2382 = vmatpush1.msra.mxu0 0.0
        %2383 = vmatprep.subr.mxu0 0.0
        %2384 = vmatpush1.msra.mxu0 0.0
        %2385 = vmatprep.subr.mxu0 0.0
        %2386 = vmatpush1.msra.mxu0 0.0
        %2387 = vmatprep.subr.mxu0 0.0
        %2388 = vmatpush1.msra.mxu0 0.0
        %2389 = vmatprep.mubr.f32.mxu0 0.0
        %2390 = vmatmul.mubr.f32.gmra.mrb[0].mxu0 %v2283
        %v2391 = vpop.f32.mrb[0].mxu0
        %v2392 = vadd.f32 0.0, %v2391
        %v2393 = vpop.f32.mrb[0].mxu0
        %2394 = vdwg.mxu0
        %2395 = vmatprep.subr.mxu0 0.0
        %2396 = vmatpush1.msra.mxu0 %v2292
        %2397 = vmatprep.subr.mxu0 0.0
        %2398 = vmatpush1.msra.mxu0 %v2293
        %2399 = vmatprep.subr.mxu0 0.0
        %2400 = vmatpush1.msra.mxu0 %v2294
        %2401 = vmatprep.subr.mxu0 0.0
        %2402 = vmatpush1.msra.mxu0 %v2295
        %2403 = vmatprep.subr.mxu0 0.0
        %2404 = vmatpush1.msra.mxu0 %v2296
        %2405 = vmatprep.subr.mxu0 0.0
        %2406 = vmatpush1.msra.mxu0 %v2297
        %2407 = vmatprep.subr.mxu0 0.0
        %2408 = vmatpush1.msra.mxu0 %v2298
        %2409 = vmatprep.subr.mxu0 0.0
        %2410 = vmatpush1.msra.mxu0 %v2299
        %2411 = vmatprep.subr.mxu0 0.0
        %2412 = vmatpush1.msra.mxu0 %v2300
        %2413 = vmatprep.subr.mxu0 0.0
        %2414 = vmatpush1.msra.mxu0 %v2301
        %2415 = vmatprep.subr.mxu0 0.0
        %2416 = vmatpush1.msra.mxu0 %v2302
        %2417 = vmatprep.subr.mxu0 0.0
        %2418 = vmatpush1.msra.mxu0 %v2303
        %2419 = vmatprep.subr.mxu0 0.0
        %2420 = vmatpush1.msra.mxu0 %v2304
        %2421 = vmatprep.subr.mxu0 0.0
        %2422 = vmatpush1.msra.mxu0 %v2305
        %2423 = vmatprep.subr.mxu0 0.0
        %2424 = vmatpush1.msra.mxu0 %v2306
        %2425 = vmatprep.subr.mxu0 0.0
        %2426 = vmatpush1.msra.mxu0 %v2307
        %2427 = vmatprep.subr.mxu0 0.0
        %2428 = vmatpush1.msra.mxu0 0.0
        %2429 = vmatprep.subr.mxu0 0.0
        %2430 = vmatpush1.msra.mxu0 0.0
        %2431 = vmatprep.subr.mxu0 0.0
        %2432 = vmatpush1.msra.mxu0 0.0
        %2433 = vmatprep.subr.mxu0 0.0
        %2434 = vmatpush1.msra.mxu0 0.0
        %2435 = vmatprep.subr.mxu0 0.0
        %2436 = vmatpush1.msra.mxu0 0.0
        %2437 = vmatprep.subr.mxu0 0.0
        %2438 = vmatpush1.msra.mxu0 0.0
        %2439 = vmatprep.subr.mxu0 0.0
        %2440 = vmatpush1.msra.mxu0 0.0
        %2441 = vmatprep.subr.mxu0 0.0
        %2442 = vmatpush1.msra.mxu0 0.0
        %2443 = vmatprep.subr.mxu0 0.0
        %2444 = vmatpush1.msra.mxu0 0.0
        %2445 = vmatprep.subr.mxu0 0.0
        %2446 = vmatpush1.msra.mxu0 0.0
        %2447 = vmatprep.subr.mxu0 0.0
        %2448 = vmatpush1.msra.mxu0 0.0
        %2449 = vmatprep.subr.mxu0 0.0
        %2450 = vmatpush1.msra.mxu0 0.0
        %2451 = vmatprep.subr.mxu0 0.0
        %2452 = vmatpush1.msra.mxu0 0.0
        %2453 = vmatprep.subr.mxu0 0.0
        %2454 = vmatpush1.msra.mxu0 0.0
        %2455 = vmatprep.subr.mxu0 0.0
        %2456 = vmatpush1.msra.mxu0 0.0
        %2457 = vmatprep.subr.mxu0 0.0
        %2458 = vmatpush1.msra.mxu0 0.0
        %2459 = vmatprep.mubr.f32.mxu0 0.0
        %2460 = vmatmul.mubr.f32.gmra.mrb[0].mxu0 %v2291
        %v2461 = vpop.f32.mrb[0].mxu0
        %v2462 = vadd.f32 %v2392, %v2461
        %v2463 = vpop.f32.mrb[0].mxu0
        %2464 = vdwg.mxu0
        %v2465 = vld [vmem:[#allocation2 + $0xc] sm:$0xff]
        %s2466 = scalar_lea.vmem %s13, 256
        %v2467 = vld [vmem:[%s2466] sm:$0xff]
        %v2468 = vld [vmem:[%s2466 + $0x8] sm:$0xff]
        %v2469 = vld [vmem:[%s2466 + $0x10] sm:$0xff]
        %v2470 = vld [vmem:[%s2466 + $0x18] sm:$0xff]
        %v2471 = vld [vmem:[%s2466 + $0x20] sm:$0xff]
        %v2472 = vld [vmem:[%s2466 + $0x28] sm:$0xff]
        %v2473 = vld [vmem:[%s2466 + $0x30] sm:$0xff]
        %v2474 = vld [vmem:[%s2466 + $0x38] sm:$0xff]
        %v2475 = vld [vmem:[%s2466 + $0x40] sm:$0xff]
        %v2476 = vld [vmem:[%s2466 + $0x48] sm:$0xff]
        %v2477 = vld [vmem:[%s2466 + $0x50] sm:$0xff]
        %v2478 = vld [vmem:[%s2466 + $0x58] sm:$0xff]
        %v2479 = vld [vmem:[%s2466 + $0x60] sm:$0xff]
        %v2480 = vld [vmem:[%s2466 + $0x68] sm:$0xff]
        %v2481 = vld [vmem:[%s2466 + $0x70] sm:$0xff]
        %v2482 = vld [vmem:[%s2466 + $0x78] sm:$0xff]
        %2483 = vmatprep.subr.mxu0 0.0
        %2484 = vmatpush1.msra.mxu0 %v2467
        %2485 = vmatprep.subr.mxu0 0.0
        %2486 = vmatpush1.msra.mxu0 %v2468
        %2487 = vmatprep.subr.mxu0 0.0
        %2488 = vmatpush1.msra.mxu0 %v2469
        %2489 = vmatprep.subr.mxu0 0.0
        %2490 = vmatpush1.msra.mxu0 %v2470
        %2491 = vmatprep.subr.mxu0 0.0
        %2492 = vmatpush1.msra.mxu0 %v2471
        %2493 = vmatprep.subr.mxu0 0.0
        %2494 = vmatpush1.msra.mxu0 %v2472
        %2495 = vmatprep.subr.mxu0 0.0
        %2496 = vmatpush1.msra.mxu0 %v2473
        %2497 = vmatprep.subr.mxu0 0.0
        %2498 = vmatpush1.msra.mxu0 %v2474
        %2499 = vmatprep.subr.mxu0 0.0
        %2500 = vmatpush1.msra.mxu0 %v2475
        %2501 = vmatprep.subr.mxu0 0.0
        %2502 = vmatpush1.msra.mxu0 %v2476
        %2503 = vmatprep.subr.mxu0 0.0
        %2504 = vmatpush1.msra.mxu0 %v2477
        %2505 = vmatprep.subr.mxu0 0.0
        %2506 = vmatpush1.msra.mxu0 %v2478
        %2507 = vmatprep.subr.mxu0 0.0
        %2508 = vmatpush1.msra.mxu0 %v2479
        %2509 = vmatprep.subr.mxu0 0.0
        %2510 = vmatpush1.msra.mxu0 %v2480
        %2511 = vmatprep.subr.mxu0 0.0
        %2512 = vmatpush1.msra.mxu0 %v2481
        %2513 = vmatprep.subr.mxu0 0.0
        %2514 = vmatpush1.msra.mxu0 %v2482
        %2515 = vmatprep.subr.mxu0 0.0
        %2516 = vmatpush1.msra.mxu0 0.0
        %2517 = vmatprep.subr.mxu0 0.0
        %2518 = vmatpush1.msra.mxu0 0.0
        %2519 = vmatprep.subr.mxu0 0.0
        %2520 = vmatpush1.msra.mxu0 0.0
        %2521 = vmatprep.subr.mxu0 0.0
        %2522 = vmatpush1.msra.mxu0 0.0
        %2523 = vmatprep.subr.mxu0 0.0
        %2524 = vmatpush1.msra.mxu0 0.0
        %2525 = vmatprep.subr.mxu0 0.0
        %2526 = vmatpush1.msra.mxu0 0.0
        %2527 = vmatprep.subr.mxu0 0.0
        %2528 = vmatpush1.msra.mxu0 0.0
        %2529 = vmatprep.subr.mxu0 0.0
        %2530 = vmatpush1.msra.mxu0 0.0
        %2531 = vmatprep.subr.mxu0 0.0
        %2532 = vmatpush1.msra.mxu0 0.0
        %2533 = vmatprep.subr.mxu0 0.0
        %2534 = vmatpush1.msra.mxu0 0.0
        %2535 = vmatprep.subr.mxu0 0.0
        %2536 = vmatpush1.msra.mxu0 0.0
        %2537 = vmatprep.subr.mxu0 0.0
        %2538 = vmatpush1.msra.mxu0 0.0
        %2539 = vmatprep.subr.mxu0 0.0
        %2540 = vmatpush1.msra.mxu0 0.0
        %2541 = vmatprep.subr.mxu0 0.0
        %2542 = vmatpush1.msra.mxu0 0.0
        %2543 = vmatprep.subr.mxu0 0.0
        %2544 = vmatpush1.msra.mxu0 0.0
        %2545 = vmatprep.subr.mxu0 0.0
        %2546 = vmatpush1.msra.mxu0 0.0
        %2547 = vmatprep.mubr.f32.mxu0 0.0
        %2548 = vmatmul.mubr.f32.gmra.mrb[0].mxu0 %v2465
        %v2549 = vpop.f32.mrb[0].mxu0
        %v2550 = vadd.f32 0.0, %v2549
        %v2551 = vpop.f32.mrb[0].mxu0
        %2552 = vdwg.mxu0
        %v2553 = vadd.f32 %v2462, %v2550
        %v2554 = vld [vmem:[%s14] sm:$0x1]
        %v2556 = vlaneseq
        %v2557 = vshrl.u32 %v2556, 7
        %v2558 = vsub.s32 0, %v2557
        %v2559 = vrot.slane %v2554, %v2558
        %v2561 = vadd.f32 %v2553, %v2559
        %v2562 = vmax.f32 %v2561, 0.0
        %2563 = vst [vmem:[#allocation2] sm:$0xff] 0.0
        %2564 = vst [vmem:[#allocation2 + $0x8] sm:$0xff] 0.0
        %2565 = vst [vmem:[#allocation2 + $0x10] sm:$0xff] 0.0
        %2566 = vst [vmem:[#allocation2 + $0x18] sm:$0xff] 0.0
        %2567 = vst [vmem:[#allocation2 + $0x20] sm:$0xff] 0.0
        %2568 = vst [vmem:[#allocation2 + $0x28] sm:$0xff] 0.0
        %2569 = vst [vmem:[#allocation2 + $0x8] sm:$0xff] %v2562
        %v2570 = vld [vmem:[#allocation2 + $0x4] sm:$0xff]
        %v2571 = vld [vmem:[#allocation9] sm:$0xff]
        %v2572 = vld [vmem:[#allocation9 + $0x8] sm:$0xff]
        %v2573 = vld [vmem:[#allocation9 + $0x10] sm:$0xff]
        %v2574 = vld [vmem:[#allocation9 + $0x18] sm:$0xff]
        %v2575 = vld [vmem:[#allocation9 + $0x20] sm:$0xff]
        %v2576 = vld [vmem:[#allocation9 + $0x28] sm:$0xff]
        %v2577 = vld [vmem:[#allocation9 + $0x30] sm:$0xff]
        %v2578 = vld [vmem:[#allocation9 + $0x38] sm:$0xff]
        %v2579 = vld [vmem:[#allocation9 + $0x40] sm:$0xff]
        %v2580 = vld [vmem:[#allocation9 + $0x48] sm:$0xff]
        %v2581 = vld [vmem:[#allocation9 + $0x50] sm:$0xff]
        %v2582 = vld [vmem:[#allocation9 + $0x58] sm:$0xff]
        %v2583 = vld [vmem:[#allocation9 + $0x60] sm:$0xff]
        %v2584 = vld [vmem:[#allocation9 + $0x68] sm:$0xff]
        %v2585 = vld [vmem:[#allocation9 + $0x70] sm:$0xff]
        %v2586 = vld [vmem:[#allocation9 + $0x78] sm:$0xff]
        %s2587 = scalar_lea.vmem [#allocation9], 128
        %v2588 = vld [vmem:[%s2587] sm:$0xff]
        %v2589 = vld [vmem:[%s2587 + $0x8] sm:$0xff]
        %v2590 = vld [vmem:[%s2587 + $0x10] sm:$0xff]
        %v2591 = vld [vmem:[%s2587 + $0x18] sm:$0xff]
        %v2592 = vld [vmem:[%s2587 + $0x20] sm:$0xff]
        %v2593 = vld [vmem:[%s2587 + $0x28] sm:$0xff]
        %v2594 = vld [vmem:[%s2587 + $0x30] sm:$0xff]
        %v2595 = vld [vmem:[%s2587 + $0x38] sm:$0xff]
        %v2596 = vld [vmem:[%s2587 + $0x40] sm:$0xff]
        %v2597 = vld [vmem:[%s2587 + $0x48] sm:$0xff]
        %v2598 = vld [vmem:[%s2587 + $0x50] sm:$0xff]
        %v2599 = vld [vmem:[%s2587 + $0x58] sm:$0xff]
        %v2600 = vld [vmem:[%s2587 + $0x60] sm:$0xff]
        %v2601 = vld [vmem:[%s2587 + $0x68] sm:$0xff]
        %v2602 = vld [vmem:[%s2587 + $0x70] sm:$0xff]
        %v2603 = vld [vmem:[%s2587 + $0x78] sm:$0xff]
        %2604 = vmatprep.subr.mxu0 0.0
        %2605 = vmatpush1.msra.mxu0 %v2588
        %2606 = vmatprep.subr.mxu0 0.0
        %2607 = vmatpush1.msra.mxu0 %v2589
        %2608 = vmatprep.subr.mxu0 0.0
        %2609 = vmatpush1.msra.mxu0 %v2590
        %2610 = vmatprep.subr.mxu0 0.0
        %2611 = vmatpush1.msra.mxu0 %v2591
        %2612 = vmatprep.subr.mxu0 0.0
        %2613 = vmatpush1.msra.mxu0 %v2592
        %2614 = vmatprep.subr.mxu0 0.0
        %2615 = vmatpush1.msra.mxu0 %v2593
        %2616 = vmatprep.subr.mxu0 0.0
        %2617 = vmatpush1.msra.mxu0 %v2594
        %2618 = vmatprep.subr.mxu0 0.0
        %2619 = vmatpush1.msra.mxu0 %v2595
        %2620 = vmatprep.subr.mxu0 0.0
        %2621 = vmatpush1.msra.mxu0 %v2596
        %2622 = vmatprep.subr.mxu0 0.0
        %2623 = vmatpush1.msra.mxu0 %v2597
        %2624 = vmatprep.subr.mxu0 0.0
        %2625 = vmatpush1.msra.mxu0 %v2598
        %2626 = vmatprep.subr.mxu0 0.0
        %2627 = vmatpush1.msra.mxu0 %v2599
        %2628 = vmatprep.subr.mxu0 0.0
        %2629 = vmatpush1.msra.mxu0 %v2600
        %2630 = vmatprep.subr.mxu0 0.0
        %2631 = vmatpush1.msra.mxu0 %v2601
        %2632 = vmatprep.subr.mxu0 0.0
        %2633 = vmatpush1.msra.mxu0 %v2602
        %2634 = vmatprep.subr.mxu0 0.0
        %2635 = vmatpush1.msra.mxu0 %v2603
        %2636 = vmatprep.subr.mxu0 0.0
        %2637 = vmatpush1.msra.mxu0 0.0
        %2638 = vmatprep.subr.mxu0 0.0
        %2639 = vmatpush1.msra.mxu0 0.0
        %2640 = vmatprep.subr.mxu0 0.0
        %2641 = vmatpush1.msra.mxu0 0.0
        %2642 = vmatprep.subr.mxu0 0.0
        %2643 = vmatpush1.msra.mxu0 0.0
        %2644 = vmatprep.subr.mxu0 0.0
        %2645 = vmatpush1.msra.mxu0 0.0
        %2646 = vmatprep.subr.mxu0 0.0
        %2647 = vmatpush1.msra.mxu0 0.0
        %2648 = vmatprep.subr.mxu0 0.0
        %2649 = vmatpush1.msra.mxu0 0.0
        %2650 = vmatprep.subr.mxu0 0.0
        %2651 = vmatpush1.msra.mxu0 0.0
        %2652 = vmatprep.subr.mxu0 0.0
        %2653 = vmatpush1.msra.mxu0 0.0
        %2654 = vmatprep.subr.mxu0 0.0
        %2655 = vmatpush1.msra.mxu0 0.0
        %2656 = vmatprep.subr.mxu0 0.0
        %2657 = vmatpush1.msra.mxu0 0.0
        %2658 = vmatprep.subr.mxu0 0.0
        %2659 = vmatpush1.msra.mxu0 0.0
        %2660 = vmatprep.subr.mxu0 0.0
        %2661 = vmatpush1.msra.mxu0 0.0
        %2662 = vmatprep.subr.mxu0 0.0
        %2663 = vmatpush1.msra.mxu0 0.0
        %2664 = vmatprep.subr.mxu0 0.0
        %2665 = vmatpush1.msra.mxu0 0.0
        %2666 = vmatprep.subr.mxu0 0.0
        %2667 = vmatpush1.msra.mxu0 0.0
        %2668 = vmatprep.mubr.f32.mxu0 0.0
        %2669 = vmatmul.mubr.f32.gmra.mrb[0].mxu0 %v2562
        %v2670 = vpop.f32.mrb[0].mxu0
        %v2671 = vadd.f32 0.0, %v2670
        %v2672 = vpop.f32.mrb[0].mxu0
        %2673 = vdwg.mxu0
        %2674 = vmatprep.subr.mxu0 0.0
        %2675 = vmatpush1.msra.mxu0 %v2571
        %2676 = vmatprep.subr.mxu0 0.0
        %2677 = vmatpush1.msra.mxu0 %v2572
        %2678 = vmatprep.subr.mxu0 0.0
        %2679 = vmatpush1.msra.mxu0 %v2573
        %2680 = vmatprep.subr.mxu0 0.0
        %2681 = vmatpush1.msra.mxu0 %v2574
        %2682 = vmatprep.subr.mxu0 0.0
        %2683 = vmatpush1.msra.mxu0 %v2575
        %2684 = vmatprep.subr.mxu0 0.0
        %2685 = vmatpush1.msra.mxu0 %v2576
        %2686 = vmatprep.subr.mxu0 0.0
        %2687 = vmatpush1.msra.mxu0 %v2577
        %2688 = vmatprep.subr.mxu0 0.0
        %2689 = vmatpush1.msra.mxu0 %v2578
        %2690 = vmatprep.subr.mxu0 0.0
        %2691 = vmatpush1.msra.mxu0 %v2579
        %2692 = vmatprep.subr.mxu0 0.0
        %2693 = vmatpush1.msra.mxu0 %v2580
        %2694 = vmatprep.subr.mxu0 0.0
        %2695 = vmatpush1.msra.mxu0 %v2581
        %2696 = vmatprep.subr.mxu0 0.0
        %2697 = vmatpush1.msra.mxu0 %v2582
        %2698 = vmatprep.subr.mxu0 0.0
        %2699 = vmatpush1.msra.mxu0 %v2583
        %2700 = vmatprep.subr.mxu0 0.0
        %2701 = vmatpush1.msra.mxu0 %v2584
        %2702 = vmatprep.subr.mxu0 0.0
        %2703 = vmatpush1.msra.mxu0 %v2585
        %2704 = vmatprep.subr.mxu0 0.0
        %2705 = vmatpush1.msra.mxu0 %v2586
        %2706 = vmatprep.subr.mxu0 0.0
        %2707 = vmatpush1.msra.mxu0 0.0
        %2708 = vmatprep.subr.mxu0 0.0
        %2709 = vmatpush1.msra.mxu0 0.0
        %2710 = vmatprep.subr.mxu0 0.0
        %2711 = vmatpush1.msra.mxu0 0.0
        %2712 = vmatprep.subr.mxu0 0.0
        %2713 = vmatpush1.msra.mxu0 0.0
        %2714 = vmatprep.subr.mxu0 0.0
        %2715 = vmatpush1.msra.mxu0 0.0
        %2716 = vmatprep.subr.mxu0 0.0
        %2717 = vmatpush1.msra.mxu0 0.0
        %2718 = vmatprep.subr.mxu0 0.0
        %2719 = vmatpush1.msra.mxu0 0.0
        %2720 = vmatprep.subr.mxu0 0.0
        %2721 = vmatpush1.msra.mxu0 0.0
        %2722 = vmatprep.subr.mxu0 0.0
        %2723 = vmatpush1.msra.mxu0 0.0
        %2724 = vmatprep.subr.mxu0 0.0
        %2725 = vmatpush1.msra.mxu0 0.0
        %2726 = vmatprep.subr.mxu0 0.0
        %2727 = vmatpush1.msra.mxu0 0.0
        %2728 = vmatprep.subr.mxu0 0.0
        %2729 = vmatpush1.msra.mxu0 0.0
        %2730 = vmatprep.subr.mxu0 0.0
        %2731 = vmatpush1.msra.mxu0 0.0
        %2732 = vmatprep.subr.mxu0 0.0
        %2733 = vmatpush1.msra.mxu0 0.0
        %2734 = vmatprep.subr.mxu0 0.0
        %2735 = vmatpush1.msra.mxu0 0.0
        %2736 = vmatprep.subr.mxu0 0.0
        %2737 = vmatpush1.msra.mxu0 0.0
        %2738 = vmatprep.mubr.f32.mxu0 0.0
        %2739 = vmatmul.mubr.f32.gmra.mrb[0].mxu0 %v2570
        %v2740 = vpop.f32.mrb[0].mxu0
        %v2741 = vadd.f32 %v2671, %v2740
        %v2742 = vpop.f32.mrb[0].mxu0
        %2743 = vdwg.mxu0
        %v2744 = vld [vmem:[#allocation2 + $0xc] sm:$0xff]
        %s2745 = scalar_lea.vmem [#allocation9], 256
        %v2746 = vld [vmem:[%s2745] sm:$0xff]
        %v2747 = vld [vmem:[%s2745 + $0x8] sm:$0xff]
        %v2748 = vld [vmem:[%s2745 + $0x10] sm:$0xff]
        %v2749 = vld [vmem:[%s2745 + $0x18] sm:$0xff]
        %v2750 = vld [vmem:[%s2745 + $0x20] sm:$0xff]
        %v2751 = vld [vmem:[%s2745 + $0x28] sm:$0xff]
        %v2752 = vld [vmem:[%s2745 + $0x30] sm:$0xff]
        %v2753 = vld [vmem:[%s2745 + $0x38] sm:$0xff]
        %v2754 = vld [vmem:[%s2745 + $0x40] sm:$0xff]
        %v2755 = vld [vmem:[%s2745 + $0x48] sm:$0xff]
        %v2756 = vld [vmem:[%s2745 + $0x50] sm:$0xff]
        %v2757 = vld [vmem:[%s2745 + $0x58] sm:$0xff]
        %v2758 = vld [vmem:[%s2745 + $0x60] sm:$0xff]
        %v2759 = vld [vmem:[%s2745 + $0x68] sm:$0xff]
        %v2760 = vld [vmem:[%s2745 + $0x70] sm:$0xff]
        %v2761 = vld [vmem:[%s2745 + $0x78] sm:$0xff]
        %2762 = vmatprep.subr.mxu0 0.0
        %2763 = vmatpush1.msra.mxu0 %v2746
        %2764 = vmatprep.subr.mxu0 0.0
        %2765 = vmatpush1.msra.mxu0 %v2747
        %2766 = vmatprep.subr.mxu0 0.0
        %2767 = vmatpush1.msra.mxu0 %v2748
        %2768 = vmatprep.subr.mxu0 0.0
        %2769 = vmatpush1.msra.mxu0 %v2749
        %2770 = vmatprep.subr.mxu0 0.0
        %2771 = vmatpush1.msra.mxu0 %v2750
        %2772 = vmatprep.subr.mxu0 0.0
        %2773 = vmatpush1.msra.mxu0 %v2751
        %2774 = vmatprep.subr.mxu0 0.0
        %2775 = vmatpush1.msra.mxu0 %v2752
        %2776 = vmatprep.subr.mxu0 0.0
        %2777 = vmatpush1.msra.mxu0 %v2753
        %2778 = vmatprep.subr.mxu0 0.0
        %2779 = vmatpush1.msra.mxu0 %v2754
        %2780 = vmatprep.subr.mxu0 0.0
        %2781 = vmatpush1.msra.mxu0 %v2755
        %2782 = vmatprep.subr.mxu0 0.0
        %2783 = vmatpush1.msra.mxu0 %v2756
        %2784 = vmatprep.subr.mxu0 0.0
        %2785 = vmatpush1.msra.mxu0 %v2757
        %2786 = vmatprep.subr.mxu0 0.0
        %2787 = vmatpush1.msra.mxu0 %v2758
        %2788 = vmatprep.subr.mxu0 0.0
        %2789 = vmatpush1.msra.mxu0 %v2759
        %2790 = vmatprep.subr.mxu0 0.0
        %2791 = vmatpush1.msra.mxu0 %v2760
        %2792 = vmatprep.subr.mxu0 0.0
        %2793 = vmatpush1.msra.mxu0 %v2761
        %2794 = vmatprep.subr.mxu0 0.0
        %2795 = vmatpush1.msra.mxu0 0.0
        %2796 = vmatprep.subr.mxu0 0.0
        %2797 = vmatpush1.msra.mxu0 0.0
        %2798 = vmatprep.subr.mxu0 0.0
        %2799 = vmatpush1.msra.mxu0 0.0
        %2800 = vmatprep.subr.mxu0 0.0
        %2801 = vmatpush1.msra.mxu0 0.0
        %2802 = vmatprep.subr.mxu0 0.0
        %2803 = vmatpush1.msra.mxu0 0.0
        %2804 = vmatprep.subr.mxu0 0.0
        %2805 = vmatpush1.msra.mxu0 0.0
        %2806 = vmatprep.subr.mxu0 0.0
        %2807 = vmatpush1.msra.mxu0 0.0
        %2808 = vmatprep.subr.mxu0 0.0
        %2809 = vmatpush1.msra.mxu0 0.0
        %2810 = vmatprep.subr.mxu0 0.0
        %2811 = vmatpush1.msra.mxu0 0.0
        %2812 = vmatprep.subr.mxu0 0.0
        %2813 = vmatpush1.msra.mxu0 0.0
        %2814 = vmatprep.subr.mxu0 0.0
        %2815 = vmatpush1.msra.mxu0 0.0
        %2816 = vmatprep.subr.mxu0 0.0
        %2817 = vmatpush1.msra.mxu0 0.0
        %2818 = vmatprep.subr.mxu0 0.0
        %2819 = vmatpush1.msra.mxu0 0.0
        %2820 = vmatprep.subr.mxu0 0.0
        %2821 = vmatpush1.msra.mxu0 0.0
        %2822 = vmatprep.subr.mxu0 0.0
        %2823 = vmatpush1.msra.mxu0 0.0
        %2824 = vmatprep.subr.mxu0 0.0
        %2825 = vmatpush1.msra.mxu0 0.0
        %2826 = vmatprep.mubr.f32.mxu0 0.0
        %2827 = vmatmul.mubr.f32.gmra.mrb[0].mxu0 %v2744
        %v2828 = vpop.f32.mrb[0].mxu0
        %v2829 = vadd.f32 0.0, %v2828
        %v2830 = vpop.f32.mrb[0].mxu0
        %2831 = vdwg.mxu0
        %v2832 = vadd.f32 %v2741, %v2829
        %v2833 = vld [vmem:[%s16] sm:$0x1]
        %v2835 = vlaneseq
        %v2836 = vshrl.u32 %v2835, 7
        %v2837 = vsub.s32 0, %v2836
        %v2838 = vrot.slane %v2833, %v2837
        %v2840 = vadd.f32 %v2832, %v2838
        %v2841 = vld [vmem:[%s18] sm:$0xf]
        %v2842 = vld [vmem:[%s17] sm:$0x1]
        %v2844 = vlaneseq
        %v2845 = vshrl.u32 %v2844, 7
        %v2846 = vsub.s32 0, %v2845
        %v2847 = vrot.slane %v2842, %v2846
        %vm2849 = vcmask 64512
        %v2851 = vsel %vm2849, %v2841, 0
        %2853 = vmatprep.subr.mxu0 0.0
        %2854 = vmatpush1.msra.mxu0 %v2840
        %2855 = vmatprep.subr.mxu0 0.0
        %2856 = vmatpush1.msra.mxu0 0.0
        %2857 = vmatprep.subr.mxu0 0.0
        %2858 = vmatpush1.msra.mxu0 0.0
        %2859 = vmatprep.subr.mxu0 0.0
        %2860 = vmatpush1.msra.mxu0 0.0
        %2861 = vmatprep.subr.mxu0 0.0
        %2862 = vmatpush1.msra.mxu0 0.0
        %2863 = vmatprep.subr.mxu0 0.0
        %2864 = vmatpush1.msra.mxu0 0.0
        %2865 = vmatprep.subr.mxu0 0.0
        %2866 = vmatpush1.msra.mxu0 0.0
        %2867 = vmatprep.subr.mxu0 0.0
        %2868 = vmatpush1.msra.mxu0 0.0
        %2869 = vmatprep.subr.mxu0 0.0
        %2870 = vmatpush1.msra.mxu0 0.0
        %2871 = vmatprep.subr.mxu0 0.0
        %2872 = vmatpush1.msra.mxu0 0.0
        %2873 = vmatprep.subr.mxu0 0.0
        %2874 = vmatpush1.msra.mxu0 0.0
        %2875 = vmatprep.subr.mxu0 0.0
        %2876 = vmatpush1.msra.mxu0 0.0
        %2877 = vmatprep.subr.mxu0 0.0
        %2878 = vmatpush1.msra.mxu0 0.0
        %2879 = vmatprep.subr.mxu0 0.0
        %2880 = vmatpush1.msra.mxu0 0.0
        %2881 = vmatprep.subr.mxu0 0.0
        %2882 = vmatpush1.msra.mxu0 0.0
        %2883 = vmatprep.subr.mxu0 0.0
        %2884 = vmatpush1.msra.mxu0 0.0
        %2885 = vmatprep.subr.mxu0 0.0
        %2886 = vmatpush1.msra.mxu0 0.0
        %2887 = vmatprep.subr.mxu0 0.0
        %2888 = vmatpush1.msra.mxu0 0.0
        %2889 = vmatprep.subr.mxu0 0.0
        %2890 = vmatpush1.msra.mxu0 0.0
        %2891 = vmatprep.subr.mxu0 0.0
        %2892 = vmatpush1.msra.mxu0 0.0
        %2893 = vmatprep.subr.mxu0 0.0
        %2894 = vmatpush1.msra.mxu0 0.0
        %2895 = vmatprep.subr.mxu0 0.0
        %2896 = vmatpush1.msra.mxu0 0.0
        %2897 = vmatprep.subr.mxu0 0.0
        %2898 = vmatpush1.msra.mxu0 0.0
        %2899 = vmatprep.subr.mxu0 0.0
        %2900 = vmatpush1.msra.mxu0 0.0
        %2901 = vmatprep.subr.mxu0 0.0
        %2902 = vmatpush1.msra.mxu0 0.0
        %2903 = vmatprep.subr.mxu0 0.0
        %2904 = vmatpush1.msra.mxu0 0.0
        %2905 = vmatprep.subr.mxu0 0.0
        %2906 = vmatpush1.msra.mxu0 0.0
        %2907 = vmatprep.subr.mxu0 0.0
        %2908 = vmatpush1.msra.mxu0 0.0
        %2909 = vmatprep.subr.mxu0 0.0
        %2910 = vmatpush1.msra.mxu0 0.0
        %2911 = vmatprep.subr.mxu0 0.0
        %2912 = vmatpush1.msra.mxu0 0.0
        %2913 = vmatprep.subr.mxu0 0.0
        %2914 = vmatpush1.msra.mxu0 0.0
        %2915 = vmatprep.subr.mxu0 0.0
        %2916 = vmatpush1.msra.mxu0 0.0
        %2917 = vmatprep.mubr.f32.mxu0 0.0
        %2918 = vmatmul.mubr.f32.gmra.mrb[0].mxu0 %v2851
        %v2919 = vpop.f32.mrb[0].mxu0
        %v2920 = vadd.f32 %v2847, %v2919
        %v2921 = vpop.f32.mrb[0].mxu0
        %2922 = vdwg.mxu0
        %v2923 = vmax.f32 %v2920, 0.0
        %v2924 = vld [vmem:[#allocation11] sm:$0xff]
        %v2925 = vld [vmem:[#allocation11 + $0x8] sm:$0xff]
        %v2926 = vld [vmem:[#allocation11 + $0x10] sm:$0xff]
        %v2927 = vld [vmem:[#allocation11 + $0x18] sm:$0xff]
        %v2928 = vld [vmem:[#allocation11 + $0x20] sm:$0xff]
        %v2929 = vld [vmem:[#allocation11 + $0x28] sm:$0xff]
        %v2930 = vld [vmem:[#allocation11 + $0x30] sm:$0xff]
        %v2931 = vld [vmem:[#allocation11 + $0x38] sm:$0xff]
        %v2932 = vld [vmem:[#allocation11 + $0x40] sm:$0xff]
        %v2933 = vld [vmem:[#allocation11 + $0x48] sm:$0xff]
        %v2934 = vld [vmem:[#allocation11 + $0x50] sm:$0xff]
        %v2935 = vld [vmem:[#allocation11 + $0x58] sm:$0xff]
        %v2936 = vld [vmem:[#allocation11 + $0x60] sm:$0xff]
        %v2937 = vld [vmem:[#allocation11 + $0x68] sm:$0xff]
        %v2938 = vld [vmem:[#allocation11 + $0x70] sm:$0xff]
        %v2939 = vld [vmem:[#allocation11 + $0x78] sm:$0xff]
        %v2940 = vld [vmem:[#allocation11 + $0x80] sm:$0xff]
        %v2941 = vld [vmem:[#allocation11 + $0x88] sm:$0xff]
        %v2942 = vld [vmem:[#allocation11 + $0x90] sm:$0xff]
        %v2943 = vld [vmem:[#allocation11 + $0x98] sm:$0xff]
        %v2944 = vld [vmem:[#allocation11 + $0xa0] sm:$0xff]
        %v2945 = vld [vmem:[#allocation11 + $0xa8] sm:$0xff]
        %v2946 = vld [vmem:[#allocation11 + $0xb0] sm:$0xff]
        %v2947 = vld [vmem:[#allocation11 + $0xb8] sm:$0xff]
        %v2948 = vld [vmem:[#allocation11 + $0xc0] sm:$0xff]
        %v2949 = vld [vmem:[#allocation11 + $0xc8] sm:$0xff]
        %v2950 = vld [vmem:[#allocation11 + $0xd0] sm:$0xff]
        %v2951 = vld [vmem:[#allocation11 + $0xd8] sm:$0xff]
        %v2952 = vld [vmem:[#allocation11 + $0xe0] sm:$0xff]
        %v2953 = vld [vmem:[#allocation11 + $0xe8] sm:$0xff]
        %v2954 = vld [vmem:[#allocation11 + $0xf0] sm:$0xff]
        %v2955 = vld [vmem:[#allocation11 + $0xf8] sm:$0xff]
        %s2956 = scalar_lea.vmem [#allocation11], 256
        %v2957 = vld [vmem:[%s2956] sm:$0xff]
        %v2958 = vld [vmem:[%s2956 + $0x8] sm:$0xff]
        %v2959 = vld [vmem:[%s2956 + $0x10] sm:$0xff]
        %v2960 = vld [vmem:[%s2956 + $0x18] sm:$0xff]
        %v2961 = vld [vmem:[%s2956 + $0x20] sm:$0xff]
        %v2962 = vld [vmem:[%s2956 + $0x28] sm:$0xff]
        %v2963 = vld [vmem:[%s2956 + $0x30] sm:$0xff]
        %v2964 = vld [vmem:[%s2956 + $0x38] sm:$0xff]
        %v2965 = vld [vmem:[%s2956 + $0x40] sm:$0xff]
        %v2966 = vld [vmem:[%s2956 + $0x48] sm:$0xff]
        %v2967 = vld [vmem:[%s2956 + $0x50] sm:$0xff]
        %v2968 = vld [vmem:[%s2956 + $0x58] sm:$0xff]
        %v2969 = vld [vmem:[%s2956 + $0x60] sm:$0xff]
        %v2970 = vld [vmem:[%s2956 + $0x68] sm:$0xff]
        %v2971 = vld [vmem:[%s2956 + $0x70] sm:$0xff]
        %v2972 = vld [vmem:[%s2956 + $0x78] sm:$0xff]
        %v2973 = vld [vmem:[%s2956 + $0x80] sm:$0xff]
        %v2974 = vld [vmem:[%s2956 + $0x88] sm:$0xff]
        %v2975 = vld [vmem:[%s2956 + $0x90] sm:$0xff]
        %v2976 = vld [vmem:[%s2956 + $0x98] sm:$0xff]
        %v2977 = vld [vmem:[%s2956 + $0xa0] sm:$0xff]
        %v2978 = vld [vmem:[%s2956 + $0xa8] sm:$0xff]
        %v2979 = vld [vmem:[%s2956 + $0xb0] sm:$0xff]
        %v2980 = vld [vmem:[%s2956 + $0xb8] sm:$0xff]
        %v2981 = vld [vmem:[%s2956 + $0xc0] sm:$0xff]
        %v2982 = vld [vmem:[%s2956 + $0xc8] sm:$0xff]
        %v2983 = vld [vmem:[%s2956 + $0xd0] sm:$0xff]
        %v2984 = vld [vmem:[%s2956 + $0xd8] sm:$0xff]
        %v2985 = vld [vmem:[%s2956 + $0xe0] sm:$0xff]
        %v2986 = vld [vmem:[%s2956 + $0xe8] sm:$0xff]
        %v2987 = vld [vmem:[%s2956 + $0xf0] sm:$0xff]
        %v2988 = vld [vmem:[%s2956 + $0xf8] sm:$0xff]
        %v2990 = vrot.slane %v2923, 1
        %2992 = vmatprep.subr.mxu0 %v2958
        %2993 = vmatpush1.msra.mxu0 %v2957
        %2994 = vmatprep.subr.mxu0 %v2960
        %2995 = vmatpush1.msra.mxu0 %v2959
        %2996 = vmatprep.subr.mxu0 %v2962
        %2997 = vmatpush1.msra.mxu0 %v2961
        %2998 = vmatprep.subr.mxu0 %v2964
        %2999 = vmatpush1.msra.mxu0 %v2963
        %3000 = vmatprep.subr.mxu0 %v2966
        %3001 = vmatpush1.msra.mxu0 %v2965
        %3002 = vmatprep.subr.mxu0 %v2968
        %3003 = vmatpush1.msra.mxu0 %v2967
        %3004 = vmatprep.subr.mxu0 %v2970
        %3005 = vmatpush1.msra.mxu0 %v2969
        %3006 = vmatprep.subr.mxu0 %v2972
        %3007 = vmatpush1.msra.mxu0 %v2971
        %3008 = vmatprep.subr.mxu0 %v2974
        %3009 = vmatpush1.msra.mxu0 %v2973
        %3010 = vmatprep.subr.mxu0 %v2976
        %3011 = vmatpush1.msra.mxu0 %v2975
        %3012 = vmatprep.subr.mxu0 %v2978
        %3013 = vmatpush1.msra.mxu0 %v2977
        %3014 = vmatprep.subr.mxu0 %v2980
        %3015 = vmatpush1.msra.mxu0 %v2979
        %3016 = vmatprep.subr.mxu0 %v2982
        %3017 = vmatpush1.msra.mxu0 %v2981
        %3018 = vmatprep.subr.mxu0 %v2984
        %3019 = vmatpush1.msra.mxu0 %v2983
        %3020 = vmatprep.subr.mxu0 %v2986
        %3021 = vmatpush1.msra.mxu0 %v2985
        %3022 = vmatprep.subr.mxu0 %v2988
        %3023 = vmatpush1.msra.mxu0 %v2987
        %3024 = vmatprep.subr.mxu0 0.0
        %3025 = vmatpush1.msra.mxu0 0.0
        %3026 = vmatprep.subr.mxu0 0.0
        %3027 = vmatpush1.msra.mxu0 0.0
        %3028 = vmatprep.subr.mxu0 0.0
        %3029 = vmatpush1.msra.mxu0 0.0
        %3030 = vmatprep.subr.mxu0 0.0
        %3031 = vmatpush1.msra.mxu0 0.0
        %3032 = vmatprep.subr.mxu0 0.0
        %3033 = vmatpush1.msra.mxu0 0.0
        %3034 = vmatprep.subr.mxu0 0.0
        %3035 = vmatpush1.msra.mxu0 0.0
        %3036 = vmatprep.subr.mxu0 0.0
        %3037 = vmatpush1.msra.mxu0 0.0
        %3038 = vmatprep.subr.mxu0 0.0
        %3039 = vmatpush1.msra.mxu0 0.0
        %3040 = vmatprep.subr.mxu0 0.0
        %3041 = vmatpush1.msra.mxu0 0.0
        %3042 = vmatprep.subr.mxu0 0.0
        %3043 = vmatpush1.msra.mxu0 0.0
        %3044 = vmatprep.subr.mxu0 0.0
        %3045 = vmatpush1.msra.mxu0 0.0
        %3046 = vmatprep.subr.mxu0 0.0
        %3047 = vmatpush1.msra.mxu0 0.0
        %3048 = vmatprep.subr.mxu0 0.0
        %3049 = vmatpush1.msra.mxu0 0.0
        %3050 = vmatprep.subr.mxu0 0.0
        %3051 = vmatpush1.msra.mxu0 0.0
        %3052 = vmatprep.subr.mxu0 0.0
        %3053 = vmatpush1.msra.mxu0 0.0
        %3054 = vmatprep.subr.mxu0 0.0
        %3055 = vmatpush1.msra.mxu0 0.0
        %3056 = vmatprep.mubr.f32.mxu0 0.0
        %3057 = vmatmul.mubr.f32.gmra.mrb[0].mxu0 %v2990
        %v3058 = vpop.f32.mrb[0].mxu0
        %v3059 = vadd.f32 0.0, %v3058
        %v3060 = vpop.f32.mrb[0].mxu0
        %v3061 = vadd.f32 0.0, %v3060
        %3062 = vdwg.mxu0
        %3063 = vmatprep.subr.mxu0 %v2925
        %3064 = vmatpush1.msra.mxu0 %v2924
        %3065 = vmatprep.subr.mxu0 %v2927
        %3066 = vmatpush1.msra.mxu0 %v2926
        %3067 = vmatprep.subr.mxu0 %v2929
        %3068 = vmatpush1.msra.mxu0 %v2928
        %3069 = vmatprep.subr.mxu0 %v2931
        %3070 = vmatpush1.msra.mxu0 %v2930
        %3071 = vmatprep.subr.mxu0 %v2933
        %3072 = vmatpush1.msra.mxu0 %v2932
        %3073 = vmatprep.subr.mxu0 %v2935
        %3074 = vmatpush1.msra.mxu0 %v2934
        %3075 = vmatprep.subr.mxu0 %v2937
        %3076 = vmatpush1.msra.mxu0 %v2936
        %3077 = vmatprep.subr.mxu0 %v2939
        %3078 = vmatpush1.msra.mxu0 %v2938
        %3079 = vmatprep.subr.mxu0 %v2941
        %3080 = vmatpush1.msra.mxu0 %v2940
        %3081 = vmatprep.subr.mxu0 %v2943
        %3082 = vmatpush1.msra.mxu0 %v2942
        %3083 = vmatprep.subr.mxu0 %v2945
        %3084 = vmatpush1.msra.mxu0 %v2944
        %3085 = vmatprep.subr.mxu0 %v2947
        %3086 = vmatpush1.msra.mxu0 %v2946
        %3087 = vmatprep.subr.mxu0 %v2949
        %3088 = vmatpush1.msra.mxu0 %v2948
        %3089 = vmatprep.subr.mxu0 %v2951
        %3090 = vmatpush1.msra.mxu0 %v2950
        %3091 = vmatprep.subr.mxu0 %v2953
        %3092 = vmatpush1.msra.mxu0 %v2952
        %3093 = vmatprep.subr.mxu0 %v2955
        %3094 = vmatpush1.msra.mxu0 %v2954
        %3095 = vmatprep.subr.mxu0 0.0
        %3096 = vmatpush1.msra.mxu0 0.0
        %3097 = vmatprep.subr.mxu0 0.0
        %3098 = vmatpush1.msra.mxu0 0.0
        %3099 = vmatprep.subr.mxu0 0.0
        %3100 = vmatpush1.msra.mxu0 0.0
        %3101 = vmatprep.subr.mxu0 0.0
        %3102 = vmatpush1.msra.mxu0 0.0
        %3103 = vmatprep.subr.mxu0 0.0
        %3104 = vmatpush1.msra.mxu0 0.0
        %3105 = vmatprep.subr.mxu0 0.0
        %3106 = vmatpush1.msra.mxu0 0.0
        %3107 = vmatprep.subr.mxu0 0.0
        %3108 = vmatpush1.msra.mxu0 0.0
        %3109 = vmatprep.subr.mxu0 0.0
        %3110 = vmatpush1.msra.mxu0 0.0
        %3111 = vmatprep.subr.mxu0 0.0
        %3112 = vmatpush1.msra.mxu0 0.0
        %3113 = vmatprep.subr.mxu0 0.0
        %3114 = vmatpush1.msra.mxu0 0.0
        %3115 = vmatprep.subr.mxu0 0.0
        %3116 = vmatpush1.msra.mxu0 0.0
        %3117 = vmatprep.subr.mxu0 0.0
        %3118 = vmatpush1.msra.mxu0 0.0
        %3119 = vmatprep.subr.mxu0 0.0
        %3120 = vmatpush1.msra.mxu0 0.0
        %3121 = vmatprep.subr.mxu0 0.0
        %3122 = vmatpush1.msra.mxu0 0.0
        %3123 = vmatprep.subr.mxu0 0.0
        %3124 = vmatpush1.msra.mxu0 0.0
        %3125 = vmatprep.subr.mxu0 0.0
        %3126 = vmatpush1.msra.mxu0 0.0
        %3127 = vmatprep.mubr.f32.mxu0 0.0
        %3128 = vmatmul.mubr.f32.gmra.mrb[0].mxu0 %v2923
        %v3129 = vpop.f32.mrb[0].mxu0
        %v3130 = vadd.f32 %v3059, %v3129
        %v3131 = vpop.f32.mrb[0].mxu0
        %v3132 = vadd.f32 %v3061, %v3131
        %3133 = vdwg.mxu0
        %s3134 = scalar_lea.vmem [#allocation11], 512
        %v3135 = vld [vmem:[%s3134] sm:$0xff]
        %v3136 = vld [vmem:[%s3134 + $0x8] sm:$0xff]
        %v3137 = vld [vmem:[%s3134 + $0x10] sm:$0xff]
        %v3138 = vld [vmem:[%s3134 + $0x18] sm:$0xff]
        %v3139 = vld [vmem:[%s3134 + $0x20] sm:$0xff]
        %v3140 = vld [vmem:[%s3134 + $0x28] sm:$0xff]
        %v3141 = vld [vmem:[%s3134 + $0x30] sm:$0xff]
        %v3142 = vld [vmem:[%s3134 + $0x38] sm:$0xff]
        %v3143 = vld [vmem:[%s3134 + $0x40] sm:$0xff]
        %v3144 = vld [vmem:[%s3134 + $0x48] sm:$0xff]
        %v3145 = vld [vmem:[%s3134 + $0x50] sm:$0xff]
        %v3146 = vld [vmem:[%s3134 + $0x58] sm:$0xff]
        %v3147 = vld [vmem:[%s3134 + $0x60] sm:$0xff]
        %v3148 = vld [vmem:[%s3134 + $0x68] sm:$0xff]
        %v3149 = vld [vmem:[%s3134 + $0x70] sm:$0xff]
        %v3150 = vld [vmem:[%s3134 + $0x78] sm:$0xff]
        %v3151 = vld [vmem:[%s3134 + $0x80] sm:$0xff]
        %v3152 = vld [vmem:[%s3134 + $0x88] sm:$0xff]
        %v3153 = vld [vmem:[%s3134 + $0x90] sm:$0xff]
        %v3154 = vld [vmem:[%s3134 + $0x98] sm:$0xff]
        %v3155 = vld [vmem:[%s3134 + $0xa0] sm:$0xff]
        %v3156 = vld [vmem:[%s3134 + $0xa8] sm:$0xff]
        %v3157 = vld [vmem:[%s3134 + $0xb0] sm:$0xff]
        %v3158 = vld [vmem:[%s3134 + $0xb8] sm:$0xff]
        %v3159 = vld [vmem:[%s3134 + $0xc0] sm:$0xff]
        %v3160 = vld [vmem:[%s3134 + $0xc8] sm:$0xff]
        %v3161 = vld [vmem:[%s3134 + $0xd0] sm:$0xff]
        %v3162 = vld [vmem:[%s3134 + $0xd8] sm:$0xff]
        %v3163 = vld [vmem:[%s3134 + $0xe0] sm:$0xff]
        %v3164 = vld [vmem:[%s3134 + $0xe8] sm:$0xff]
        %v3165 = vld [vmem:[%s3134 + $0xf0] sm:$0xff]
        %v3166 = vld [vmem:[%s3134 + $0xf8] sm:$0xff]
        %v3167 = vrot.slane %v2923, 2
        %3169 = vmatprep.subr.mxu0 %v3136
        %3170 = vmatpush1.msra.mxu0 %v3135
        %3171 = vmatprep.subr.mxu0 %v3138
        %3172 = vmatpush1.msra.mxu0 %v3137
        %3173 = vmatprep.subr.mxu0 %v3140
        %3174 = vmatpush1.msra.mxu0 %v3139
        %3175 = vmatprep.subr.mxu0 %v3142
        %3176 = vmatpush1.msra.mxu0 %v3141
        %3177 = vmatprep.subr.mxu0 %v3144
        %3178 = vmatpush1.msra.mxu0 %v3143
        %3179 = vmatprep.subr.mxu0 %v3146
        %3180 = vmatpush1.msra.mxu0 %v3145
        %3181 = vmatprep.subr.mxu0 %v3148
        %3182 = vmatpush1.msra.mxu0 %v3147
        %3183 = vmatprep.subr.mxu0 %v3150
        %3184 = vmatpush1.msra.mxu0 %v3149
        %3185 = vmatprep.subr.mxu0 %v3152
        %3186 = vmatpush1.msra.mxu0 %v3151
        %3187 = vmatprep.subr.mxu0 %v3154
        %3188 = vmatpush1.msra.mxu0 %v3153
        %3189 = vmatprep.subr.mxu0 %v3156
        %3190 = vmatpush1.msra.mxu0 %v3155
        %3191 = vmatprep.subr.mxu0 %v3158
        %3192 = vmatpush1.msra.mxu0 %v3157
        %3193 = vmatprep.subr.mxu0 %v3160
        %3194 = vmatpush1.msra.mxu0 %v3159
        %3195 = vmatprep.subr.mxu0 %v3162
        %3196 = vmatpush1.msra.mxu0 %v3161
        %3197 = vmatprep.subr.mxu0 %v3164
        %3198 = vmatpush1.msra.mxu0 %v3163
        %3199 = vmatprep.subr.mxu0 %v3166
        %3200 = vmatpush1.msra.mxu0 %v3165
        %3201 = vmatprep.subr.mxu0 0.0
        %3202 = vmatpush1.msra.mxu0 0.0
        %3203 = vmatprep.subr.mxu0 0.0
        %3204 = vmatpush1.msra.mxu0 0.0
        %3205 = vmatprep.subr.mxu0 0.0
        %3206 = vmatpush1.msra.mxu0 0.0
        %3207 = vmatprep.subr.mxu0 0.0
        %3208 = vmatpush1.msra.mxu0 0.0
        %3209 = vmatprep.subr.mxu0 0.0
        %3210 = vmatpush1.msra.mxu0 0.0
        %3211 = vmatprep.subr.mxu0 0.0
        %3212 = vmatpush1.msra.mxu0 0.0
        %3213 = vmatprep.subr.mxu0 0.0
        %3214 = vmatpush1.msra.mxu0 0.0
        %3215 = vmatprep.subr.mxu0 0.0
        %3216 = vmatpush1.msra.mxu0 0.0
        %3217 = vmatprep.subr.mxu0 0.0
        %3218 = vmatpush1.msra.mxu0 0.0
        %3219 = vmatprep.subr.mxu0 0.0
        %3220 = vmatpush1.msra.mxu0 0.0
        %3221 = vmatprep.subr.mxu0 0.0
        %3222 = vmatpush1.msra.mxu0 0.0
        %3223 = vmatprep.subr.mxu0 0.0
        %3224 = vmatpush1.msra.mxu0 0.0
        %3225 = vmatprep.subr.mxu0 0.0
        %3226 = vmatpush1.msra.mxu0 0.0
        %3227 = vmatprep.subr.mxu0 0.0
        %3228 = vmatpush1.msra.mxu0 0.0
        %3229 = vmatprep.subr.mxu0 0.0
        %3230 = vmatpush1.msra.mxu0 0.0
        %3231 = vmatprep.subr.mxu0 0.0
        %3232 = vmatpush1.msra.mxu0 0.0
        %3233 = vmatprep.mubr.f32.mxu0 0.0
        %3234 = vmatmul.mubr.f32.gmra.mrb[0].mxu0 %v3167
        %v3235 = vpop.f32.mrb[0].mxu0
        %v3236 = vadd.f32 0.0, %v3235
        %v3237 = vpop.f32.mrb[0].mxu0
        %v3238 = vadd.f32 0.0, %v3237
        %3239 = vdwg.mxu0
        %v3240 = vadd.f32 %v3130, %v3236
        %v3241 = vadd.f32 %v3132, %v3238
        %s3242 = scalar_lea.vmem [#allocation11], 768
        %v3243 = vld [vmem:[%s3242] sm:$0xff]
        %v3244 = vld [vmem:[%s3242 + $0x8] sm:$0xff]
        %v3245 = vld [vmem:[%s3242 + $0x10] sm:$0xff]
        %v3246 = vld [vmem:[%s3242 + $0x18] sm:$0xff]
        %v3247 = vld [vmem:[%s3242 + $0x20] sm:$0xff]
        %v3248 = vld [vmem:[%s3242 + $0x28] sm:$0xff]
        %v3249 = vld [vmem:[%s3242 + $0x30] sm:$0xff]
        %v3250 = vld [vmem:[%s3242 + $0x38] sm:$0xff]
        %v3251 = vld [vmem:[%s3242 + $0x40] sm:$0xff]
        %v3252 = vld [vmem:[%s3242 + $0x48] sm:$0xff]
        %v3253 = vld [vmem:[%s3242 + $0x50] sm:$0xff]
        %v3254 = vld [vmem:[%s3242 + $0x58] sm:$0xff]
        %v3255 = vld [vmem:[%s3242 + $0x60] sm:$0xff]
        %v3256 = vld [vmem:[%s3242 + $0x68] sm:$0xff]
        %v3257 = vld [vmem:[%s3242 + $0x70] sm:$0xff]
        %v3258 = vld [vmem:[%s3242 + $0x78] sm:$0xff]
        %v3259 = vld [vmem:[%s3242 + $0x80] sm:$0xff]
        %v3260 = vld [vmem:[%s3242 + $0x88] sm:$0xff]
        %v3261 = vld [vmem:[%s3242 + $0x90] sm:$0xff]
        %v3262 = vld [vmem:[%s3242 + $0x98] sm:$0xff]
        %v3263 = vld [vmem:[%s3242 + $0xa0] sm:$0xff]
        %v3264 = vld [vmem:[%s3242 + $0xa8] sm:$0xff]
        %v3265 = vld [vmem:[%s3242 + $0xb0] sm:$0xff]
        %v3266 = vld [vmem:[%s3242 + $0xb8] sm:$0xff]
        %v3267 = vld [vmem:[%s3242 + $0xc0] sm:$0xff]
        %v3268 = vld [vmem:[%s3242 + $0xc8] sm:$0xff]
        %v3269 = vld [vmem:[%s3242 + $0xd0] sm:$0xff]
        %v3270 = vld [vmem:[%s3242 + $0xd8] sm:$0xff]
        %v3271 = vld [vmem:[%s3242 + $0xe0] sm:$0xff]
        %v3272 = vld [vmem:[%s3242 + $0xe8] sm:$0xff]
        %v3273 = vld [vmem:[%s3242 + $0xf0] sm:$0xff]
        %v3274 = vld [vmem:[%s3242 + $0xf8] sm:$0xff]
        %v3275 = vrot.slane %v2923, 3
        %3277 = vmatprep.subr.mxu0 %v3244
        %3278 = vmatpush1.msra.mxu0 %v3243
        %3279 = vmatprep.subr.mxu0 %v3246
        %3280 = vmatpush1.msra.mxu0 %v3245
        %3281 = vmatprep.subr.mxu0 %v3248
        %3282 = vmatpush1.msra.mxu0 %v3247
        %3283 = vmatprep.subr.mxu0 %v3250
        %3284 = vmatpush1.msra.mxu0 %v3249
        %3285 = vmatprep.subr.mxu0 %v3252
        %3286 = vmatpush1.msra.mxu0 %v3251
        %3287 = vmatprep.subr.mxu0 %v3254
        %3288 = vmatpush1.msra.mxu0 %v3253
        %3289 = vmatprep.subr.mxu0 %v3256
        %3290 = vmatpush1.msra.mxu0 %v3255
        %3291 = vmatprep.subr.mxu0 %v3258
        %3292 = vmatpush1.msra.mxu0 %v3257
        %3293 = vmatprep.subr.mxu0 %v3260
        %3294 = vmatpush1.msra.mxu0 %v3259
        %3295 = vmatprep.subr.mxu0 %v3262
        %3296 = vmatpush1.msra.mxu0 %v3261
        %3297 = vmatprep.subr.mxu0 %v3264
        %3298 = vmatpush1.msra.mxu0 %v3263
        %3299 = vmatprep.subr.mxu0 %v3266
        %3300 = vmatpush1.msra.mxu0 %v3265
        %3301 = vmatprep.subr.mxu0 %v3268
        %3302 = vmatpush1.msra.mxu0 %v3267
        %3303 = vmatprep.subr.mxu0 %v3270
        %3304 = vmatpush1.msra.mxu0 %v3269
        %3305 = vmatprep.subr.mxu0 %v3272
        %3306 = vmatpush1.msra.mxu0 %v3271
        %3307 = vmatprep.subr.mxu0 %v3274
        %3308 = vmatpush1.msra.mxu0 %v3273
        %3309 = vmatprep.subr.mxu0 0.0
        %3310 = vmatpush1.msra.mxu0 0.0
        %3311 = vmatprep.subr.mxu0 0.0
        %3312 = vmatpush1.msra.mxu0 0.0
        %3313 = vmatprep.subr.mxu0 0.0
        %3314 = vmatpush1.msra.mxu0 0.0
        %3315 = vmatprep.subr.mxu0 0.0
        %3316 = vmatpush1.msra.mxu0 0.0
        %3317 = vmatprep.subr.mxu0 0.0
        %3318 = vmatpush1.msra.mxu0 0.0
        %3319 = vmatprep.subr.mxu0 0.0
        %3320 = vmatpush1.msra.mxu0 0.0
        %3321 = vmatprep.subr.mxu0 0.0
        %3322 = vmatpush1.msra.mxu0 0.0
        %3323 = vmatprep.subr.mxu0 0.0
        %3324 = vmatpush1.msra.mxu0 0.0
        %3325 = vmatprep.subr.mxu0 0.0
        %3326 = vmatpush1.msra.mxu0 0.0
        %3327 = vmatprep.subr.mxu0 0.0
        %3328 = vmatpush1.msra.mxu0 0.0
        %3329 = vmatprep.subr.mxu0 0.0
        %3330 = vmatpush1.msra.mxu0 0.0
        %3331 = vmatprep.subr.mxu0 0.0
        %3332 = vmatpush1.msra.mxu0 0.0
        %3333 = vmatprep.subr.mxu0 0.0
        %3334 = vmatpush1.msra.mxu0 0.0
        %3335 = vmatprep.subr.mxu0 0.0
        %3336 = vmatpush1.msra.mxu0 0.0
        %3337 = vmatprep.subr.mxu0 0.0
        %3338 = vmatpush1.msra.mxu0 0.0
        %3339 = vmatprep.subr.mxu0 0.0
        %3340 = vmatpush1.msra.mxu0 0.0
        %3341 = vmatprep.mubr.f32.mxu0 0.0
        %3342 = vmatmul.mubr.f32.gmra.mrb[0].mxu0 %v3275
        %v3343 = vpop.f32.mrb[0].mxu0
        %v3344 = vadd.f32 0.0, %v3343
        %v3345 = vpop.f32.mrb[0].mxu0
        %v3346 = vadd.f32 0.0, %v3345
        %3347 = vdwg.mxu0
        %v3348 = vadd.f32 %v3240, %v3344
        %v3349 = vadd.f32 %v3241, %v3346
        %v3350 = vld [vmem:[%s20] sm:$0x3]
        %v3352 = vlaneseq
        %v3353 = vshrl.u32 %v3352, 7
        %v3354 = vsub.s32 0, %v3353
        %v3355 = vrot.slane %v3350, %v3354
        %v3356 = vlaneseq
        %v3357 = vshrl.u32 %v3356, 7
        %v3358 = vsub.s32 1, %v3357
        %v3359 = vrot.slane %v3350, %v3358
        %v3362 = vadd.f32 %v3348, %v3355
        %v3363 = vadd.f32 %v3349, %v3359
        %v3364 = vmax.f32 %v3362, 0.0
        %v3365 = vmax.f32 %v3363, 0.0
        %v3366 = vld [vmem:[%s21] sm:$0xff]
        %v3367 = vld [vmem:[%s21 + $0x8] sm:$0xff]
        %v3368 = vld [vmem:[%s21 + $0x10] sm:$0xff]
        %v3369 = vld [vmem:[%s21 + $0x18] sm:$0xff]
        %v3370 = vld [vmem:[%s21 + $0x20] sm:$0xff]
        %v3371 = vld [vmem:[%s21 + $0x28] sm:$0xff]
        %v3372 = vld [vmem:[%s21 + $0x30] sm:$0xff]
        %v3373 = vld [vmem:[%s21 + $0x38] sm:$0xff]
        %v3374 = vld [vmem:[%s21 + $0x40] sm:$0xff]
        %v3375 = vld [vmem:[%s21 + $0x48] sm:$0xff]
        %v3376 = vld [vmem:[%s21 + $0x50] sm:$0xff]
        %v3377 = vld [vmem:[%s21 + $0x58] sm:$0xff]
        %v3378 = vld [vmem:[%s21 + $0x60] sm:$0xff]
        %v3379 = vld [vmem:[%s21 + $0x68] sm:$0xff]
        %v3380 = vld [vmem:[%s21 + $0x70] sm:$0xff]
        %v3381 = vld [vmem:[%s21 + $0x78] sm:$0xff]
        %v3382 = vld [vmem:[%s21 + $0x80] sm:$0xff]
        %v3383 = vld [vmem:[%s21 + $0x88] sm:$0xff]
        %v3384 = vld [vmem:[%s21 + $0x90] sm:$0xff]
        %v3385 = vld [vmem:[%s21 + $0x98] sm:$0xff]
        %v3386 = vld [vmem:[%s21 + $0xa0] sm:$0xff]
        %v3387 = vld [vmem:[%s21 + $0xa8] sm:$0xff]
        %v3388 = vld [vmem:[%s21 + $0xb0] sm:$0xff]
        %v3389 = vld [vmem:[%s21 + $0xb8] sm:$0xff]
        %v3390 = vld [vmem:[%s21 + $0xc0] sm:$0xff]
        %v3391 = vld [vmem:[%s21 + $0xc8] sm:$0xff]
        %v3392 = vld [vmem:[%s21 + $0xd0] sm:$0xff]
        %v3393 = vld [vmem:[%s21 + $0xd8] sm:$0xff]
        %v3394 = vld [vmem:[%s21 + $0xe0] sm:$0xff]
        %v3395 = vld [vmem:[%s21 + $0xe8] sm:$0xff]
        %v3396 = vld [vmem:[%s21 + $0xf0] sm:$0xff]
        %v3397 = vld [vmem:[%s21 + $0xf8] sm:$0xff]
        %v3398 = vld [vmem:[%s22] sm:$0x1]
        %3399 = vmatprep.subr.mxu0 0.0
        %3400 = vmatpush1.msra.mxu0 %v3366
        %3401 = vmatprep.subr.mxu0 0.0
        %3402 = vmatpush1.msra.mxu0 %v3367
        %3403 = vmatprep.subr.mxu0 0.0
        %3404 = vmatpush1.msra.mxu0 %v3368
        %3405 = vmatprep.subr.mxu0 0.0
        %3406 = vmatpush1.msra.mxu0 %v3369
        %3407 = vmatprep.subr.mxu0 0.0
        %3408 = vmatpush1.msra.mxu0 %v3370
        %3409 = vmatprep.subr.mxu0 0.0
        %3410 = vmatpush1.msra.mxu0 %v3371
        %3411 = vmatprep.subr.mxu0 0.0
        %3412 = vmatpush1.msra.mxu0 %v3372
        %3413 = vmatprep.subr.mxu0 0.0
        %3414 = vmatpush1.msra.mxu0 %v3373
        %3415 = vmatprep.subr.mxu0 0.0
        %3416 = vmatpush1.msra.mxu0 %v3374
        %3417 = vmatprep.subr.mxu0 0.0
        %3418 = vmatpush1.msra.mxu0 %v3375
        %3419 = vmatprep.subr.mxu0 0.0
        %3420 = vmatpush1.msra.mxu0 %v3376
        %3421 = vmatprep.subr.mxu0 0.0
        %3422 = vmatpush1.msra.mxu0 %v3377
        %3423 = vmatprep.subr.mxu0 0.0
        %3424 = vmatpush1.msra.mxu0 %v3378
        %3425 = vmatprep.subr.mxu0 0.0
        %3426 = vmatpush1.msra.mxu0 %v3379
        %3427 = vmatprep.subr.mxu0 0.0
        %3428 = vmatpush1.msra.mxu0 %v3380
        %3429 = vmatprep.subr.mxu0 0.0
        %3430 = vmatpush1.msra.mxu0 %v3381
        %3431 = vmatprep.subr.mxu0 0.0
        %3432 = vmatpush1.msra.mxu0 %v3382
        %3433 = vmatprep.subr.mxu0 0.0
        %3434 = vmatpush1.msra.mxu0 %v3383
        %3435 = vmatprep.subr.mxu0 0.0
        %3436 = vmatpush1.msra.mxu0 %v3384
        %3437 = vmatprep.subr.mxu0 0.0
        %3438 = vmatpush1.msra.mxu0 %v3385
        %3439 = vmatprep.subr.mxu0 0.0
        %3440 = vmatpush1.msra.mxu0 %v3386
        %3441 = vmatprep.subr.mxu0 0.0
        %3442 = vmatpush1.msra.mxu0 %v3387
        %3443 = vmatprep.subr.mxu0 0.0
        %3444 = vmatpush1.msra.mxu0 %v3388
        %3445 = vmatprep.subr.mxu0 0.0
        %3446 = vmatpush1.msra.mxu0 %v3389
        %3447 = vmatprep.subr.mxu0 0.0
        %3448 = vmatpush1.msra.mxu0 %v3390
        %3449 = vmatprep.subr.mxu0 0.0
        %3450 = vmatpush1.msra.mxu0 %v3391
        %3451 = vmatprep.subr.mxu0 0.0
        %3452 = vmatpush1.msra.mxu0 %v3392
        %3453 = vmatprep.subr.mxu0 0.0
        %3454 = vmatpush1.msra.mxu0 %v3393
        %3455 = vmatprep.subr.mxu0 0.0
        %3456 = vmatpush1.msra.mxu0 %v3394
        %3457 = vmatprep.subr.mxu0 0.0
        %3458 = vmatpush1.msra.mxu0 %v3395
        %3459 = vmatprep.subr.mxu0 0.0
        %3460 = vmatpush1.msra.mxu0 %v3396
        %3461 = vmatprep.subr.mxu0 0.0
        %3462 = vmatpush1.msra.mxu0 %v3397
        %3463 = vmatprep.mubr.f32.mxu0 %v3365
        %3464 = vmatmul.mubr.f32.gmra.mrb[0].mxu0 %v3364
        %v3465 = vpop.f32.mrb[0].mxu0
        %v3466 = vadd.f32 %v3398, %v3465
        %v3467 = vpop.f32.mrb[0].mxu0
        %3468 = vdwg.mxu0
        %v3469 = vmax.f32 %v3466, 0.0
        %v3470 = vld [vmem:[%s23] sm:$0xff]
        %v3471 = vld [vmem:[%s23 + $0x8] sm:$0xff]
        %v3472 = vld [vmem:[%s23 + $0x10] sm:$0xff]
        %v3473 = vld [vmem:[%s23 + $0x18] sm:$0xff]
        %v3474 = vld [vmem:[%s23 + $0x20] sm:$0xff]
        %v3475 = vld [vmem:[%s23 + $0x28] sm:$0xff]
        %v3476 = vld [vmem:[%s23 + $0x30] sm:$0xff]
        %v3477 = vld [vmem:[%s23 + $0x38] sm:$0xff]
        %v3478 = vld [vmem:[%s24] sm:$0x1]
        %v3480 = vsel %vm1620, %v3469, 0
        %3482 = vmatprep.subr.mxu0 0.0
        %3483 = vmatpush1.msra.mxu0 %v3470
        %3484 = vmatprep.subr.mxu0 0.0
        %3485 = vmatpush1.msra.mxu0 %v3471
        %3486 = vmatprep.subr.mxu0 0.0
        %3487 = vmatpush1.msra.mxu0 %v3472
        %3488 = vmatprep.subr.mxu0 0.0
        %3489 = vmatpush1.msra.mxu0 %v3473
        %3490 = vmatprep.subr.mxu0 0.0
        %3491 = vmatpush1.msra.mxu0 %v3474
        %3492 = vmatprep.subr.mxu0 0.0
        %3493 = vmatpush1.msra.mxu0 %v3475
        %3494 = vmatprep.subr.mxu0 0.0
        %3495 = vmatpush1.msra.mxu0 %v3476
        %3496 = vmatprep.subr.mxu0 0.0
        %3497 = vmatpush1.msra.mxu0 %v3477
        %3498 = vmatprep.subr.mxu0 0.0
        %3499 = vmatpush1.msra.mxu0 0.0
        %3500 = vmatprep.subr.mxu0 0.0
        %3501 = vmatpush1.msra.mxu0 0.0
        %3502 = vmatprep.subr.mxu0 0.0
        %3503 = vmatpush1.msra.mxu0 0.0
        %3504 = vmatprep.subr.mxu0 0.0
        %3505 = vmatpush1.msra.mxu0 0.0
        %3506 = vmatprep.subr.mxu0 0.0
        %3507 = vmatpush1.msra.mxu0 0.0
        %3508 = vmatprep.subr.mxu0 0.0
        %3509 = vmatpush1.msra.mxu0 0.0
        %3510 = vmatprep.subr.mxu0 0.0
        %3511 = vmatpush1.msra.mxu0 0.0
        %3512 = vmatprep.subr.mxu0 0.0
        %3513 = vmatpush1.msra.mxu0 0.0
        %3514 = vmatprep.subr.mxu0 0.0
        %3515 = vmatpush1.msra.mxu0 0.0
        %3516 = vmatprep.subr.mxu0 0.0
        %3517 = vmatpush1.msra.mxu0 0.0
        %3518 = vmatprep.subr.mxu0 0.0
        %3519 = vmatpush1.msra.mxu0 0.0
        %3520 = vmatprep.subr.mxu0 0.0
        %3521 = vmatpush1.msra.mxu0 0.0
        %3522 = vmatprep.subr.mxu0 0.0
        %3523 = vmatpush1.msra.mxu0 0.0
        %3524 = vmatprep.subr.mxu0 0.0
        %3525 = vmatpush1.msra.mxu0 0.0
        %3526 = vmatprep.subr.mxu0 0.0
        %3527 = vmatpush1.msra.mxu0 0.0
        %3528 = vmatprep.subr.mxu0 0.0
        %3529 = vmatpush1.msra.mxu0 0.0
        %3530 = vmatprep.subr.mxu0 0.0
        %3531 = vmatpush1.msra.mxu0 0.0
        %3532 = vmatprep.subr.mxu0 0.0
        %3533 = vmatpush1.msra.mxu0 0.0
        %3534 = vmatprep.subr.mxu0 0.0
        %3535 = vmatpush1.msra.mxu0 0.0
        %3536 = vmatprep.subr.mxu0 0.0
        %3537 = vmatpush1.msra.mxu0 0.0
        %3538 = vmatprep.subr.mxu0 0.0
        %3539 = vmatpush1.msra.mxu0 0.0
        %3540 = vmatprep.subr.mxu0 0.0
        %3541 = vmatpush1.msra.mxu0 0.0
        %3542 = vmatprep.subr.mxu0 0.0
        %3543 = vmatpush1.msra.mxu0 0.0
        %3544 = vmatprep.subr.mxu0 0.0
        %3545 = vmatpush1.msra.mxu0 0.0
        %3546 = vmatprep.mubr.f32.mxu0 0.0
        %3547 = vmatmul.mubr.f32.gmra.mrb[0].mxu0 %v3480
        %v3548 = vpop.f32.mrb[0].mxu0
        %v3549 = vadd.f32 %v3478, %v3548
        %v3550 = vpop.f32.mrb[0].mxu0
        %3551 = vdwg.mxu0
        %vm3552 = vcmask 8192
        %3553 = vst.msk [vmem:[%s829] sm:$0x1] %vm3552, %v3549
        %s3554 = sand.u32 %s580, 1
        %s3555 = scalar_lea.sflag [#allocation5], %s3554
        %s3556 = sand.u32 %s580, 1
        %s3557 = scalar_lea.vmem [#allocation12], %s3556
        // Predicated region
        $region141: #{net_paper_forward.1} parent=119 // pred_check
          %p3558 = pneg %p590
        $region142: #{net_paper_forward.1} parent=119 // pred_check_branch
          %3560 = sbr.rel (%p3558) target = $region144
        $region143: #{net_paper_forward.1} parent=119 // pred_region
          %s3562 = ssub.s32 16, 16
          %3563 = vsyncadd %s3555, %s3562
          %s3564 = smul.addr %s42, 16
          %s3565 = scalar_lea.hbm %s25, %s3564
          %s3567 = sshll.u32 %s3557, 4
          %s3568 = int_to_ptr.vmem [resolvable:$true] %s3567
          %3570 = dma.vmem_to_hbm [thread:$0]  %s3568, 16, %s3565, %s3555
        $region144: #{net_paper_forward.1} parent=119 // pred_fallthru
          _
      $region120: #{net_paper_forward.1} parent=5 // pred_fallthru
        _
      %p3571 = scmp.le.s32.totalorder 2, %s37
      // Predicated region
      $region145: #{net_paper_forward.1} parent=5 // pred_check
        %p3572 = pneg %p3571
      $region146: #{net_paper_forward.1} parent=5 // pred_check_branch
        %3574 = sbr.rel (%p3572) target = $region148
      $region147: #{net_paper_forward.1} parent=5 // pred_region
        %s3575 = ssub.s32 %s37, 2
        // Predicated region
        $region149: #{net_paper_forward.1} parent=147 // pred_check
          %p3576 = pneg %p596
        $region150: #{net_paper_forward.1} parent=147 // pred_check_branch
          %3578 = sbr.rel (%p3576) target = $region152
        $region151: #{net_paper_forward.1} parent=147 // pred_region
          %s3579 = sand.u32 %s581, 1
          %s3580 = scalar_lea.sflag [#allocation5], %s3579
          %s3581 = sand.u32 %s581, 1
          %s3582 = scalar_lea.vmem [#allocation12], %s3581
          %3583 = dma.done %s3580, 16
        $region152: #{net_paper_forward.1} parent=147 // pred_fallthru
          _
      $region148: #{net_paper_forward.1} parent=5 // pred_fallthru
        _
    $region6: #{net_paper_forward.1} parent=1 // loop_footer
      %s41 = sadd.s32 1, %s37
    $region7: #{net_paper_forward.1} parent=1 // loop_footer_branch
      %36 = sbr.rel target = $region3
    $region8: #{net_paper_forward.1} parent=1 // loop_exit
      _
    %3584 = vsyncpa [#allocation4], 1
    %s3585 = scalar_lea.sflag [#allocation4], 1
    %3586 = vsyncpa %s3585, 1
    %3587 = vsyncpa [#allocation7], 1
    %3588 = vsyncpa [#allocation10], 1
    %3589 = vsyncpa [#allocation5], 1
    %s3590 = scalar_lea.sflag [#allocation5], 1
    %3591 = vsyncpa %s3590, 1

</llo_original>
